<compile_context>
chip_gen: v5e
topology: v5e:2x2
jax: 0.10.0
libtpu: 0.0.40
codegen_flags: <defaults>
</compile_context>

<pallas_src>
import functools

import jax
import jax.numpy as jnp
from jax.experimental import pallas as pl
from jax.experimental.pallas import tpu as pltpu

BF16 = jnp.bfloat16
LANE = 128  # lane width: pad the final output to this for unmasked stores


# ----------------------------------------------------------------------------
# in-kernel helpers
# ----------------------------------------------------------------------------
def _mm_t(x, w):
    """x: (M, K), w: (N, K) -> x @ w.T with bf16 MXU operands, f32 accumulate."""
    return jax.lax.dot_general(
        x.astype(BF16), w.astype(BF16), (((1,), (1,)), ((), ())),
        preferred_element_type=jnp.float32)


def _layernorm(x, w, b, eps=1e-5):
    # x: (..., E), w/b: (1, E)  -- PyTorch LayerNorm (biased var) over last dim
    mu = jnp.mean(x, axis=-1, keepdims=True)
    var = jnp.mean(jnp.square(x - mu), axis=-1, keepdims=True)
    return (x - mu) * jax.lax.rsqrt(var + eps) * w + b


def _erf(z):
    # Numerical-Recipes erfc rational approximation (f32-exact), matches
    # torch.nn.GELU()'s exact-erf GELU.  lax.erf is not guaranteed to lower.
    a = jnp.abs(z)
    t = 1.0 / (1.0 + 0.5 * a)
    ans = t * jnp.exp(
        -a * a
        - 1.26551223
        + t * (1.00002368
        + t * (0.37409196
        + t * (0.09678418
        + t * (-0.18628806
        + t * (0.27886807
        + t * (-1.13520398
        + t * (1.48851587
        + t * (-0.82215223
        + t * 0.17087277))))))))
    )
    erf_abs = 1.0 - ans
    return jnp.where(z >= 0, erf_abs, -erf_abs)


def _gelu(x):
    return 0.5 * x * (1.0 + _erf(x * 0.7071067811865475))


# ----------------------------------------------------------------------------
# fused transformer kernel: enLinear -> [pre-norm layer]*num_layers -> deLinear
# one batch element per grid step; all weights resident in VMEM.
# ----------------------------------------------------------------------------
def transformer_kernel(x_ref, enw_ref, enb_ref,
                       ln1w_ref, ln1b_ref,
                       qw_ref, qb_ref, kw_ref, kb_ref, vw_ref, vb_ref,
                       ow_ref, ob_ref,
                       ln2w_ref, ln2b_ref,
                       f1w_ref, f1b_ref, f2w_ref, f2b_ref,
                       dew_ref, deb_ref, o_ref,
                       *, num_heads, num_layers):
    x = x_ref[0]                                            # (L, Din) f32
    L = x.shape[0]

    # ---- encoder linear ----------------------------------------------------
    h = _mm_t(x, enw_ref[...]) + enb_ref[...]               # (L, E) f32
    E = h.shape[-1]
    hd = E // num_heads
    scale = float(hd) ** -0.5

    for i in range(num_layers):                             # static unroll
        # ===== pre-norm multi-head self-attention (head-batched) ===========
        xn = _layernorm(h, ln1w_ref[i], ln1b_ref[i])        # (L, E) f32
        xb = jnp.broadcast_to(xn, (num_heads, L, E)).astype(BF16)   # (H, L, E)

        q = jnp.einsum('hle,hde->hld', xb, qw_ref[i],
                       preferred_element_type=jnp.float32) + qb_ref[i]
        k = jnp.einsum('hle,hde->hld', xb, kw_ref[i],
                       preferred_element_type=jnp.float32) + kb_ref[i]
        v = jnp.einsum('hle,hde->hld', xb, vw_ref[i],
                       preferred_element_type=jnp.float32) + vb_ref[i]

        s = jnp.einsum('hld,hmd->hlm', q.astype(BF16), k.astype(BF16),
                       preferred_element_type=jnp.float32) * scale   # (H, L, L)
        s = s - jnp.max(s, axis=-1, keepdims=True)
        p = jnp.exp(s)
        p = p * pl.reciprocal(jnp.sum(p, axis=-1, keepdims=True), approx=True)

        ctx = jnp.einsum('hlm,hmd->hld', p.astype(BF16), v.astype(BF16),
                         preferred_element_type=jnp.float32)          # (H, L, hd)
        proj = jnp.einsum('hld,hed->hle', ctx.astype(BF16), ow_ref[i],
                          preferred_element_type=jnp.float32)          # (H, L, E)
        h = h + jnp.sum(proj, axis=0) + ob_ref[i]           # residual

        # ===== pre-norm feed forward =======================================
        xn2 = _layernorm(h, ln2w_ref[i], ln2b_ref[i])
        ff = _gelu(_mm_t(xn2, f1w_ref[i]) + f1b_ref[i])     # (L, F)
        h = h + _mm_t(ff, f2w_ref[i]) + f2b_ref[i]          # residual

    # ---- decoder linear (lane-padded to 128 for unmasked full-lane store) --
    o_ref[0] = _mm_t(h, dew_ref[...]) + deb_ref[...]


# ----------------------------------------------------------------------------
# pallas_call wrapper
# ----------------------------------------------------------------------------
def transformer_forward(x_lnd, packed, *, heads, out_features):
    # x_lnd: (L, N, in_dim), seq-first like the PyTorch module
    L, N, in_dim = x_lnd.shape
    pad_out = packed['de_w'].shape[0]                       # lane-padded width
    num_layers = packed['qw'].shape[0]

    x_nld = jnp.transpose(x_lnd, (1, 0, 2))                 # (N, L, Din)

    order = ('en_w', 'en_b', 'ln1_w', 'ln1_b',
             'qw', 'qb', 'kw', 'kb', 'vw', 'vb', 'ow', 'ob',
             'ln2_w', 'ln2_b', 'f1_w', 'f1_b', 'f2_w', 'f2_b',
             'de_w', 'de_b')
    weights = [packed[k] for k in order]

    def full_spec(a):
        # whole array as one block, same block for every grid step
        if a.ndim == 2:
            return pl.BlockSpec(a.shape, lambda n: (0, 0))
        if a.ndim == 3:
            return pl.BlockSpec(a.shape, lambda n: (0, 0, 0))
        return pl.BlockSpec(a.shape, lambda n: (0, 0, 0, 0))

    kern = functools.partial(transformer_kernel,
                             num_heads=heads, num_layers=num_layers)
    out = pl.pallas_call(
        kern,
        out_shape=jax.ShapeDtypeStruct((N, L, pad_out), jnp.float32),
        grid=(N,),
        in_specs=[pl.BlockSpec((1, L, in_dim), lambda n: (n, 0, 0))]
                 + [full_spec(w) for w in weights],
        out_specs=pl.BlockSpec((1, L, pad_out), lambda n: (n, 0, 0)),
        compiler_params=pltpu.CompilerParams(
            dimension_semantics=("parallel",),
            vmem_limit_bytes=48 * 1024 * 1024),
    )(x_nld, *weights)
    out = out[:, :, :out_features]                          # drop lane padding
    return jnp.transpose(out, (1, 0, 2))                    # back to (L, N, out)


# ----------------------------------------------------------------------------
# parameter init (PyTorch layout) + host-side packing for the kernel
# ----------------------------------------------------------------------------
def init_params(key, in_dim, embed, ff_dim, out_dim, layer_num):
    def lin(k, dout, din, scale=0.05):
        kw, kb = jax.random.split(k)
        w = jax.random.normal(kw, (dout, din), jnp.float32) * scale
        b = jax.random.normal(kb, (1, dout), jnp.float32) * scale
        return w, b

    keys = jax.random.split(key, 2 + layer_num)
    en_w, en_b = lin(keys[0], embed, in_dim)
    de_w, de_b = lin(keys[1], out_dim, embed)
    layers = []
    for i in range(layer_num):
        k1, k2, k3, k4 = jax.random.split(keys[2 + i], 4)
        in_w, in_b = lin(k1, 3 * embed, embed)
        out_w, out_b = lin(k2, embed, embed)
        f1_w, f1_b = lin(k3, ff_dim, embed)
        f2_w, f2_b = lin(k4, embed, ff_dim)
        layers.append(dict(
            ln1_w=jnp.ones((1, embed), jnp.float32),
            ln1_b=jnp.zeros((1, embed), jnp.float32),
            in_w=in_w, in_b=in_b, out_w=out_w, out_b=out_b,
            ln2_w=jnp.ones((1, embed), jnp.float32),
            ln2_b=jnp.zeros((1, embed), jnp.float32),
            f1_w=f1_w, f1_b=f1_b, f2_w=f2_w, f2_b=f2_b,
        ))
    return dict(en_w=en_w, en_b=en_b, de_w=de_w, de_b=de_b, layers=layers)


def pack_params(params, *, heads):
    """Stack per-layer weights, split attention weights per head, cast matmul
    weights to bf16, and zero-pad the decoder linear to a 128-lane output
    width -- all on the host, so the kernel does no reshapes/slices."""
    E = params['en_w'].shape[0]
    hd = E // heads
    layers = params['layers']
    Lyr = len(layers)

    def stack(key_):
        return jnp.stack([lp[key_] for lp in layers])

    in_w = stack('in_w')                                   # (Lyr, 3E, E)
    in_b = stack('in_b')                                   # (Lyr, 1, 3E)

    def head_w(w):                                         # (Lyr,E,E)->(Lyr,H,hd,E)
        return w.reshape(Lyr, heads, hd, w.shape[-1]).astype(BF16)

    def head_b(b):                                         # (Lyr,1,E)->(Lyr,H,1,hd)
        return b.reshape(Lyr, heads, hd)[:, :, None, :]

    out_w = stack('out_w')                                 # (Lyr, E, E)
    # ow[l,h,e,d] = out_w[l, e, h*hd+d]   -> out_proj as head-batched matmul
    ow = out_w.reshape(Lyr, E, heads, hd).transpose(0, 2, 1, 3).astype(BF16)

    # lane-pad decoder linear so the kernel's final store is unmasked
    out_dim = params['de_w'].shape[0]
    pad_out = max(LANE, ((out_dim + LANE - 1) // LANE) * LANE)
    de_w = jnp.zeros((pad_out, E), jnp.float32).at[:out_dim].set(params['de_w'])
    de_b = jnp.zeros((1, pad_out), jnp.float32).at[:, :out_dim].set(params['de_b'])

    return dict(
        en_w=params['en_w'].astype(BF16), en_b=params['en_b'],
        de_w=de_w.astype(BF16), de_b=de_b,
        ln1_w=stack('ln1_w'), ln1_b=stack('ln1_b'),
        ln2_w=stack('ln2_w'), ln2_b=stack('ln2_b'),
        qw=head_w(in_w[:, :E, :]),        qb=head_b(in_b[:, :, :E]),
        kw=head_w(in_w[:, E:2 * E, :]),   kb=head_b(in_b[:, :, E:2 * E]),
        vw=head_w(in_w[:, 2 * E:, :]),    vb=head_b(in_b[:, :, 2 * E:]),
        ow=ow, ob=stack('out_b'),
        f1_w=stack('f1_w').astype(BF16), f1_b=stack('f1_b'),
        f2_w=stack('f2_w').astype(BF16), f2_b=stack('f2_b'),
    )


# ----------------------------------------------------------------------------
# pure-JAX f32 reference (mirrors the PyTorch module) for a self-check
# ----------------------------------------------------------------------------
def reference_forward(x, params, *, heads):
    def layer(h, p):
        L, N, E = h.shape
        hd = E // heads
        res = h
        xn = _layernorm(h, p['ln1_w'], p['ln1_b'])
        qkv = xn @ p['in_w'].T + p['in_b']                  # (L, N, 3E)
        q, k, v = qkv[..., :E], qkv[..., E:2 * E], qkv[..., 2 * E:]

        def split(t):                                       # -> (N, H, L, hd)
            return t.reshape(L, N, heads, hd).transpose(1, 2, 0, 3)

        q, k, v = split(q), split(k), split(v)
        s = jnp.einsum('nhld,nhmd->nhlm', q, k) * (hd ** -0.5)
        a = jax.nn.softmax(s, axis=-1)
        ctx = jnp.einsum('nhlm,nhmd->nhld', a, v)           # (N, H, L, hd)
        ctx = ctx.transpose(2, 0, 1, 3).reshape(L, N, E)
        h = res + ctx @ p['out_w'].T + p['out_b']

        res = h
        xn2 = _layernorm(h, p['ln2_w'], p['ln2_b'])
        ff = jax.nn.gelu(xn2 @ p['f1_w'].T + p['f1_b'], approximate=False)
        return res + ff @ p['f2_w'].T + p['f2_b']

    h = x @ params['en_w'].T + params['en_b']
    for lp in params['layers']:
        h = layer(h, lp)
    return h @ params['de_w'].T + params['de_b']


if __name__ == "__main__":
    L, N = 8, 2
    in_dim, embed, heads, ff_dim, out_dim, layer_num = 16, 32, 4, 64, 8, 2

    key = jax.random.PRNGKey(0)
    kx, kp = jax.random.split(key)
    x = jax.random.normal(kx, (L, N, in_dim), jnp.float32)   # (seq, batch, in)
    params = init_params(kp, in_dim, embed, ff_dim, out_dim, layer_num)
    packed = pack_params(params, heads=heads)

    fwd = jax.jit(functools.partial(transformer_forward,
                                    heads=heads, out_features=out_dim))
    y = fwd(x, packed)
    jax.block_until_ready(y)

    assert y.shape == (L, N, out_dim) and y.dtype == jnp.float32
    y_ref = reference_forward(x, params, heads=heads)
    assert float(jnp.max(jnp.abs(y - y_ref))) < 5e-2, "mismatch vs JAX reference"
    print("KERNEL_OK")
</pallas_src>

<mosaic_0001>
module attributes {stable_mosaic.version = 11 : i64} {
  func.func @transformer_kernel(%arg0: i32, %arg1: memref<1x8x16xf32, #tpu.memory_space<vmem>>, %arg2: memref<32x16xbf16, #tpu.memory_space<vmem>>, %arg3: memref<1x32xf32, #tpu.memory_space<vmem>>, %arg4: memref<2x1x32xf32, #tpu.memory_space<vmem>>, %arg5: memref<2x1x32xf32, #tpu.memory_space<vmem>>, %arg6: memref<2x4x8x32xbf16, #tpu.memory_space<vmem>>, %arg7: memref<2x4x1x8xf32, #tpu.memory_space<vmem>>, %arg8: memref<2x4x8x32xbf16, #tpu.memory_space<vmem>>, %arg9: memref<2x4x1x8xf32, #tpu.memory_space<vmem>>, %arg10: memref<2x4x8x32xbf16, #tpu.memory_space<vmem>>, %arg11: memref<2x4x1x8xf32, #tpu.memory_space<vmem>>, %arg12: memref<2x4x32x8xbf16, #tpu.memory_space<vmem>>, %arg13: memref<2x1x32xf32, #tpu.memory_space<vmem>>, %arg14: memref<2x1x32xf32, #tpu.memory_space<vmem>>, %arg15: memref<2x1x32xf32, #tpu.memory_space<vmem>>, %arg16: memref<2x64x32xbf16, #tpu.memory_space<vmem>>, %arg17: memref<2x1x64xf32, #tpu.memory_space<vmem>>, %arg18: memref<2x32x64xbf16, #tpu.memory_space<vmem>>, %arg19: memref<2x1x32xf32, #tpu.memory_space<vmem>>, %arg20: memref<128x32xbf16, #tpu.memory_space<vmem>>, %arg21: memref<1x128xf32, #tpu.memory_space<vmem>>, %arg22: memref<1x8x128xf32, #tpu.memory_space<vmem>>) attributes {dimension_semantics = [#tpu.dimension_semantics<parallel>], iteration_bounds = array<i64: 2>, scalar_prefetch = 0 : i64, scratch_operands = 0 : i64, tpu.core_type = #tpu.core_type<tc>, window_params = [{transform_indices = @transform_0, window_bounds = array<i64: 1, 8, 16>}, {pipeline_mode = #tpu.pipeline_mode<synchronous>, transform_indices = @transform_1, window_bounds = array<i64: 32, 16>}, {pipeline_mode = #tpu.pipeline_mode<synchronous>, transform_indices = @transform_2, window_bounds = array<i64: 1, 32>}, {pipeline_mode = #tpu.pipeline_mode<synchronous>, transform_indices = @transform_3, window_bounds = array<i64: 2, 1, 32>}, {pipeline_mode = #tpu.pipeline_mode<synchronous>, transform_indices = @transform_4, window_bounds = array<i64: 2, 1, 32>}, {pipeline_mode = #tpu.pipeline_mode<synchronous>, transform_indices = @transform_5, window_bounds = array<i64: 2, 4, 8, 32>}, {pipeline_mode = #tpu.pipeline_mode<synchronous>, transform_indices = @transform_6, window_bounds = array<i64: 2, 4, 1, 8>}, {pipeline_mode = #tpu.pipeline_mode<synchronous>, transform_indices = @transform_7, window_bounds = array<i64: 2, 4, 8, 32>}, {pipeline_mode = #tpu.pipeline_mode<synchronous>, transform_indices = @transform_8, window_bounds = array<i64: 2, 4, 1, 8>}, {pipeline_mode = #tpu.pipeline_mode<synchronous>, transform_indices = @transform_9, window_bounds = array<i64: 2, 4, 8, 32>}, {pipeline_mode = #tpu.pipeline_mode<synchronous>, transform_indices = @transform_10, window_bounds = array<i64: 2, 4, 1, 8>}, {pipeline_mode = #tpu.pipeline_mode<synchronous>, transform_indices = @transform_11, window_bounds = array<i64: 2, 4, 32, 8>}, {pipeline_mode = #tpu.pipeline_mode<synchronous>, transform_indices = @transform_12, window_bounds = array<i64: 2, 1, 32>}, {pipeline_mode = #tpu.pipeline_mode<synchronous>, transform_indices = @transform_13, window_bounds = array<i64: 2, 1, 32>}, {pipeline_mode = #tpu.pipeline_mode<synchronous>, transform_indices = @transform_14, window_bounds = array<i64: 2, 1, 32>}, {pipeline_mode = #tpu.pipeline_mode<synchronous>, transform_indices = @transform_15, window_bounds = array<i64: 2, 64, 32>}, {pipeline_mode = #tpu.pipeline_mode<synchronous>, transform_indices = @transform_16, window_bounds = array<i64: 2, 1, 64>}, {pipeline_mode = #tpu.pipeline_mode<synchronous>, transform_indices = @transform_17, window_bounds = array<i64: 2, 32, 64>}, {pipeline_mode = #tpu.pipeline_mode<synchronous>, transform_indices = @transform_18, window_bounds = array<i64: 2, 1, 32>}, {pipeline_mode = #tpu.pipeline_mode<synchronous>, transform_indices = @transform_19, window_bounds = array<i64: 128, 32>}, {pipeline_mode = #tpu.pipeline_mode<synchronous>, transform_indices = @transform_20, window_bounds = array<i64: 1, 128>}, {transform_indices = @transform_21, window_bounds = array<i64: 1, 8, 128>}]} {
    %c0 = arith.constant 0 : index
    %c0_0 = arith.constant 0 : index
    %c0_1 = arith.constant 0 : index
    %0 = vector.load %arg1[%c0, %c0_0, %c0_1] : memref<1x8x16xf32, #tpu.memory_space<vmem>>, vector<1x8x16xf32>
    %1 = vector.shape_cast %0 : vector<1x8x16xf32> to vector<8x16xf32>
    %c0_2 = arith.constant 0 : index
    %c0_3 = arith.constant 0 : index
    %2 = vector.load %arg2[%c0_2, %c0_3] : memref<32x16xbf16, #tpu.memory_space<vmem>>, vector<32x16xbf16>
    %3 = arith.truncf %1 : vector<8x16xf32> to vector<8x16xbf16>
    %cst = arith.constant dense<0.000000e+00> : vector<8x32xf32>
    %4 = tpu.matmul %3, %2, %cst {dimension_numbers = #tpu.dot_dimension_numbers<[1], [1], [0], [0], [0, 0, 1, 0], [], []>} : vector<8x16xbf16>, vector<32x16xbf16>, vector<8x32xf32> -> vector<8x32xf32>
    %c0_4 = arith.constant 0 : index
    %c0_5 = arith.constant 0 : index
    %5 = vector.load %arg3[%c0_4, %c0_5] : memref<1x32xf32, #tpu.memory_space<vmem>>, vector<1x32xf32>
    %6 = vector.broadcast %5 : vector<1x32xf32> to vector<8x32xf32>
    %7 = arith.addf %4, %6 : vector<8x32xf32>
    %c0_6 = arith.constant 0 : index
    %c0_7 = arith.constant 0 : index
    %c0_8 = arith.constant 0 : index
    %8 = vector.load %arg4[%c0_6, %c0_7, %c0_8] : memref<2x1x32xf32, #tpu.memory_space<vmem>>, vector<1x1x32xf32>
    %9 = vector.shape_cast %8 : vector<1x1x32xf32> to vector<1x32xf32>
    %c0_9 = arith.constant 0 : index
    %c0_10 = arith.constant 0 : index
    %c0_11 = arith.constant 0 : index
    %10 = vector.load %arg5[%c0_9, %c0_10, %c0_11] : memref<2x1x32xf32, #tpu.memory_space<vmem>>, vector<1x1x32xf32>
    %11 = vector.shape_cast %10 : vector<1x1x32xf32> to vector<1x32xf32>
    %cst_12 = arith.constant dense<0.000000e+00> : vector<8xf32>
    %12 = vector.multi_reduction <add>, %7, %cst_12 [1] : vector<8x32xf32> to vector<8xf32>
    %13 = vector.shape_cast %12 : vector<8xf32> to vector<8x1xf32>
    %cst_13 = arith.constant 3.200000e+01 : f32
    %14 = vector.broadcast %cst_13 : f32 to vector<8x1xf32>
    %15 = arith.divf %13, %14 : vector<8x1xf32>
    %16 = vector.broadcast %15 : vector<8x1xf32> to vector<8x32xf32>
    %17 = arith.subf %7, %16 : vector<8x32xf32>
    %18 = arith.mulf %17, %17 : vector<8x32xf32>
    %cst_14 = arith.constant dense<0.000000e+00> : vector<8xf32>
    %19 = vector.multi_reduction <add>, %18, %cst_14 [1] : vector<8x32xf32> to vector<8xf32>
    %20 = vector.shape_cast %19 : vector<8xf32> to vector<8x1xf32>
    %cst_15 = arith.constant 3.200000e+01 : f32
    %21 = vector.broadcast %cst_15 : f32 to vector<8x1xf32>
    %22 = arith.divf %20, %21 : vector<8x1xf32>
    %23 = vector.broadcast %15 : vector<8x1xf32> to vector<8x32xf32>
    %24 = arith.subf %7, %23 : vector<8x32xf32>
    %cst_16 = arith.constant 9.99999974E-6 : f32
    %25 = vector.broadcast %cst_16 : f32 to vector<8x1xf32>
    %26 = arith.addf %22, %25 : vector<8x1xf32>
    %27 = math.rsqrt %26 : vector<8x1xf32>
    %28 = vector.broadcast %27 : vector<8x1xf32> to vector<8x32xf32>
    %29 = arith.mulf %24, %28 : vector<8x32xf32>
    %30 = vector.broadcast %9 : vector<1x32xf32> to vector<8x32xf32>
    %31 = arith.mulf %29, %30 : vector<8x32xf32>
    %32 = vector.broadcast %11 : vector<1x32xf32> to vector<8x32xf32>
    %33 = arith.addf %31, %32 : vector<8x32xf32>
    %34 = vector.shape_cast %33 : vector<8x32xf32> to vector<1x8x32xf32>
    %35 = vector.broadcast %34 : vector<1x8x32xf32> to vector<4x8x32xf32>
    %36 = arith.truncf %35 : vector<4x8x32xf32> to vector<4x8x32xbf16>
    %c0_17 = arith.constant 0 : index
    %c0_18 = arith.constant 0 : index
    %c0_19 = arith.constant 0 : index
    %c0_20 = arith.constant 0 : index
    %37 = vector.load %arg6[%c0_17, %c0_18, %c0_19, %c0_20] : memref<2x4x8x32xbf16, #tpu.memory_space<vmem>>, vector<1x4x8x32xbf16>
    %38 = vector.shape_cast %37 : vector<1x4x8x32xbf16> to vector<4x8x32xbf16>
    "tpu.trace_start"() <{level = 10 : i32, message = "hle,hde->hld"}> : () -> ()
    %cst_21 = arith.constant dense<0.000000e+00> : vector<4x8x8xf32>
    %39 = tpu.matmul %36, %38, %cst_21 {dimension_numbers = #tpu.dot_dimension_numbers<[2], [2], [1], [1], [0, 0, 0, 1, 1, 1], [0], [0]>} : vector<4x8x32xbf16>, vector<4x8x32xbf16>, vector<4x8x8xf32> -> vector<4x8x8xf32>
    "tpu.trace_stop"() : () -> ()
    %c0_22 = arith.constant 0 : index
    %c0_23 = arith.constant 0 : index
    %c0_24 = arith.constant 0 : index
    %c0_25 = arith.constant 0 : index
    %40 = vector.load %arg7[%c0_22, %c0_23, %c0_24, %c0_25] : memref<2x4x1x8xf32, #tpu.memory_space<vmem>>, vector<1x4x1x8xf32>
    %41 = vector.shape_cast %40 : vector<1x4x1x8xf32> to vector<4x1x8xf32>
    %42 = vector.broadcast %41 : vector<4x1x8xf32> to vector<4x8x8xf32>
    %43 = arith.addf %39, %42 : vector<4x8x8xf32>
    %c0_26 = arith.constant 0 : index
    %c0_27 = arith.constant 0 : index
    %c0_28 = arith.constant 0 : index
    %c0_29 = arith.constant 0 : index
    %44 = vector.load %arg8[%c0_26, %c0_27, %c0_28, %c0_29] : memref<2x4x8x32xbf16, #tpu.memory_space<vmem>>, vector<1x4x8x32xbf16>
    %45 = vector.shape_cast %44 : vector<1x4x8x32xbf16> to vector<4x8x32xbf16>
    "tpu.trace_start"() <{level = 10 : i32, message = "hle,hde->hld"}> : () -> ()
    %cst_30 = arith.constant dense<0.000000e+00> : vector<4x8x8xf32>
    %46 = tpu.matmul %36, %45, %cst_30 {dimension_numbers = #tpu.dot_dimension_numbers<[2], [2], [1], [1], [0, 0, 0, 1, 1, 1], [0], [0]>} : vector<4x8x32xbf16>, vector<4x8x32xbf16>, vector<4x8x8xf32> -> vector<4x8x8xf32>
    "tpu.trace_stop"() : () -> ()
    %c0_31 = arith.constant 0 : index
    %c0_32 = arith.constant 0 : index
    %c0_33 = arith.constant 0 : index
    %c0_34 = arith.constant 0 : index
    %47 = vector.load %arg9[%c0_31, %c0_32, %c0_33, %c0_34] : memref<2x4x1x8xf32, #tpu.memory_space<vmem>>, vector<1x4x1x8xf32>
    %48 = vector.shape_cast %47 : vector<1x4x1x8xf32> to vector<4x1x8xf32>
    %49 = vector.broadcast %48 : vector<4x1x8xf32> to vector<4x8x8xf32>
    %50 = arith.addf %46, %49 : vector<4x8x8xf32>
    %c0_35 = arith.constant 0 : index
    %c0_36 = arith.constant 0 : index
    %c0_37 = arith.constant 0 : index
    %c0_38 = arith.constant 0 : index
    %51 = vector.load %arg10[%c0_35, %c0_36, %c0_37, %c0_38] : memref<2x4x8x32xbf16, #tpu.memory_space<vmem>>, vector<1x4x8x32xbf16>
    %52 = vector.shape_cast %51 : vector<1x4x8x32xbf16> to vector<4x8x32xbf16>
    "tpu.trace_start"() <{level = 10 : i32, message = "hle,hde->hld"}> : () -> ()
    %cst_39 = arith.constant dense<0.000000e+00> : vector<4x8x8xf32>
    %53 = tpu.matmul %36, %52, %cst_39 {dimension_numbers = #tpu.dot_dimension_numbers<[2], [2], [1], [1], [0, 0, 0, 1, 1, 1], [0], [0]>} : vector<4x8x32xbf16>, vector<4x8x32xbf16>, vector<4x8x8xf32> -> vector<4x8x8xf32>
    "tpu.trace_stop"() : () -> ()
    %c0_40 = arith.constant 0 : index
    %c0_41 = arith.constant 0 : index
    %c0_42 = arith.constant 0 : index
    %c0_43 = arith.constant 0 : index
    %54 = vector.load %arg11[%c0_40, %c0_41, %c0_42, %c0_43] : memref<2x4x1x8xf32, #tpu.memory_space<vmem>>, vector<1x4x1x8xf32>
    %55 = vector.shape_cast %54 : vector<1x4x1x8xf32> to vector<4x1x8xf32>
    %56 = vector.broadcast %55 : vector<4x1x8xf32> to vector<4x8x8xf32>
    %57 = arith.addf %53, %56 : vector<4x8x8xf32>
    %58 = arith.truncf %43 : vector<4x8x8xf32> to vector<4x8x8xbf16>
    %59 = arith.truncf %50 : vector<4x8x8xf32> to vector<4x8x8xbf16>
    "tpu.trace_start"() <{level = 10 : i32, message = "hld,hmd->hlm"}> : () -> ()
    %cst_44 = arith.constant dense<0.000000e+00> : vector<4x8x8xf32>
    %60 = tpu.matmul %58, %59, %cst_44 {dimension_numbers = #tpu.dot_dimension_numbers<[2], [2], [1], [1], [0, 0, 0, 1, 1, 1], [0], [0]>} : vector<4x8x8xbf16>, vector<4x8x8xbf16>, vector<4x8x8xf32> -> vector<4x8x8xf32>
    "tpu.trace_stop"() : () -> ()
    %cst_45 = arith.constant 0.353553385 : f32
    %61 = vector.broadcast %cst_45 : f32 to vector<4x8x8xf32>
    %62 = arith.mulf %60, %61 : vector<4x8x8xf32>
    %cst_46 = arith.constant dense<0xFF800000> : vector<4x8xf32>
    %63 = vector.multi_reduction <maximumf>, %62, %cst_46 [2] : vector<4x8x8xf32> to vector<4x8xf32>
    %64 = vector.shape_cast %63 : vector<4x8xf32> to vector<4x8x1xf32>
    %65 = vector.broadcast %64 : vector<4x8x1xf32> to vector<4x8x8xf32>
    %66 = arith.subf %62, %65 : vector<4x8x8xf32>
    %67 = math.exp %66 : vector<4x8x8xf32>
    %cst_47 = arith.constant dense<0.000000e+00> : vector<4x8xf32>
    %68 = vector.multi_reduction <add>, %67, %cst_47 [2] : vector<4x8x8xf32> to vector<4x8xf32>
    %69 = vector.shape_cast %68 : vector<4x8xf32> to vector<4x8x1xf32>
    %70 = tpu.reciprocal %69 {approx = true} : vector<4x8x1xf32> -> vector<4x8x1xf32>
    %71 = vector.broadcast %70 : vector<4x8x1xf32> to vector<4x8x8xf32>
    %72 = arith.mulf %67, %71 : vector<4x8x8xf32>
    %73 = arith.truncf %72 : vector<4x8x8xf32> to vector<4x8x8xbf16>
    %74 = arith.truncf %57 : vector<4x8x8xf32> to vector<4x8x8xbf16>
    "tpu.trace_start"() <{level = 10 : i32, message = "hlm,hmd->hld"}> : () -> ()
    %cst_48 = arith.constant dense<0.000000e+00> : vector<4x8x8xf32>
    %75 = tpu.matmul %73, %74, %cst_48 {dimension_numbers = #tpu.dot_dimension_numbers<[2], [1], [1], [2], [0, 0, 0, 1, 1, 2], [0], [0]>} : vector<4x8x8xbf16>, vector<4x8x8xbf16>, vector<4x8x8xf32> -> vector<4x8x8xf32>
    "tpu.trace_stop"() : () -> ()
    %76 = arith.truncf %75 : vector<4x8x8xf32> to vector<4x8x8xbf16>
    %c0_49 = arith.constant 0 : index
    %c0_50 = arith.constant 0 : index
    %c0_51 = arith.constant 0 : index
    %c0_52 = arith.constant 0 : index
    %77 = vector.load %arg12[%c0_49, %c0_50, %c0_51, %c0_52] : memref<2x4x32x8xbf16, #tpu.memory_space<vmem>>, vector<1x4x32x8xbf16>
    %78 = vector.shape_cast %77 : vector<1x4x32x8xbf16> to vector<4x32x8xbf16>
    "tpu.trace_start"() <{level = 10 : i32, message = "hld,hed->hle"}> : () -> ()
    %cst_53 = arith.constant dense<0.000000e+00> : vector<4x8x32xf32>
    %79 = tpu.matmul %76, %78, %cst_53 {dimension_numbers = #tpu.dot_dimension_numbers<[2], [2], [1], [1], [0, 0, 0, 1, 1, 1], [0], [0]>} : vector<4x8x8xbf16>, vector<4x32x8xbf16>, vector<4x8x32xf32> -> vector<4x8x32xf32>
    "tpu.trace_stop"() : () -> ()
    %cst_54 = arith.constant dense<0.000000e+00> : vector<8x32xf32>
    %80 = vector.multi_reduction <add>, %79, %cst_54 [0] : vector<4x8x32xf32> to vector<8x32xf32>
    %81 = arith.addf %7, %80 : vector<8x32xf32>
    %c0_55 = arith.constant 0 : index
    %c0_56 = arith.constant 0 : index
    %c0_57 = arith.constant 0 : index
    %82 = vector.load %arg13[%c0_55, %c0_56, %c0_57] : memref<2x1x32xf32, #tpu.memory_space<vmem>>, vector<1x1x32xf32>
    %83 = vector.shape_cast %82 : vector<1x1x32xf32> to vector<1x32xf32>
    %84 = vector.broadcast %83 : vector<1x32xf32> to vector<8x32xf32>
    %85 = arith.addf %81, %84 : vector<8x32xf32>
    %c0_58 = arith.constant 0 : index
    %c0_59 = arith.constant 0 : index
    %c0_60 = arith.constant 0 : index
    %86 = vector.load %arg14[%c0_58, %c0_59, %c0_60] : memref<2x1x32xf32, #tpu.memory_space<vmem>>, vector<1x1x32xf32>
    %87 = vector.shape_cast %86 : vector<1x1x32xf32> to vector<1x32xf32>
    %c0_61 = arith.constant 0 : index
    %c0_62 = arith.constant 0 : index
    %c0_63 = arith.constant 0 : index
    %88 = vector.load %arg15[%c0_61, %c0_62, %c0_63] : memref<2x1x32xf32, #tpu.memory_space<vmem>>, vector<1x1x32xf32>
    %89 = vector.shape_cast %88 : vector<1x1x32xf32> to vector<1x32xf32>
    %cst_64 = arith.constant dense<0.000000e+00> : vector<8xf32>
    %90 = vector.multi_reduction <add>, %85, %cst_64 [1] : vector<8x32xf32> to vector<8xf32>
    %91 = vector.shape_cast %90 : vector<8xf32> to vector<8x1xf32>
    %cst_65 = arith.constant 3.200000e+01 : f32
    %92 = vector.broadcast %cst_65 : f32 to vector<8x1xf32>
    %93 = arith.divf %91, %92 : vector<8x1xf32>
    %94 = vector.broadcast %93 : vector<8x1xf32> to vector<8x32xf32>
    %95 = arith.subf %85, %94 : vector<8x32xf32>
    %96 = arith.mulf %95, %95 : vector<8x32xf32>
    %cst_66 = arith.constant dense<0.000000e+00> : vector<8xf32>
    %97 = vector.multi_reduction <add>, %96, %cst_66 [1] : vector<8x32xf32> to vector<8xf32>
    %98 = vector.shape_cast %97 : vector<8xf32> to vector<8x1xf32>
    %cst_67 = arith.constant 3.200000e+01 : f32
    %99 = vector.broadcast %cst_67 : f32 to vector<8x1xf32>
    %100 = arith.divf %98, %99 : vector<8x1xf32>
    %101 = vector.broadcast %93 : vector<8x1xf32> to vector<8x32xf32>
    %102 = arith.subf %85, %101 : vector<8x32xf32>
    %cst_68 = arith.constant 9.99999974E-6 : f32
    %103 = vector.broadcast %cst_68 : f32 to vector<8x1xf32>
    %104 = arith.addf %100, %103 : vector<8x1xf32>
    %105 = math.rsqrt %104 : vector<8x1xf32>
    %106 = vector.broadcast %105 : vector<8x1xf32> to vector<8x32xf32>
    %107 = arith.mulf %102, %106 : vector<8x32xf32>
    %108 = vector.broadcast %87 : vector<1x32xf32> to vector<8x32xf32>
    %109 = arith.mulf %107, %108 : vector<8x32xf32>
    %110 = vector.broadcast %89 : vector<1x32xf32> to vector<8x32xf32>
    %111 = arith.addf %109, %110 : vector<8x32xf32>
    %c0_69 = arith.constant 0 : index
    %c0_70 = arith.constant 0 : index
    %c0_71 = arith.constant 0 : index
    %112 = vector.load %arg16[%c0_69, %c0_70, %c0_71] : memref<2x64x32xbf16, #tpu.memory_space<vmem>>, vector<1x64x32xbf16>
    %113 = vector.shape_cast %112 : vector<1x64x32xbf16> to vector<64x32xbf16>
    %114 = arith.truncf %111 : vector<8x32xf32> to vector<8x32xbf16>
    %cst_72 = arith.constant dense<0.000000e+00> : vector<8x64xf32>
    %115 = tpu.matmul %114, %113, %cst_72 {dimension_numbers = #tpu.dot_dimension_numbers<[1], [1], [0], [0], [0, 0, 1, 0], [], []>} : vector<8x32xbf16>, vector<64x32xbf16>, vector<8x64xf32> -> vector<8x64xf32>
    %c0_73 = arith.constant 0 : index
    %c0_74 = arith.constant 0 : index
    %c0_75 = arith.constant 0 : index
    %116 = vector.load %arg17[%c0_73, %c0_74, %c0_75] : memref<2x1x64xf32, #tpu.memory_space<vmem>>, vector<1x1x64xf32>
    %117 = vector.shape_cast %116 : vector<1x1x64xf32> to vector<1x64xf32>
    %118 = vector.broadcast %117 : vector<1x64xf32> to vector<8x64xf32>
    %119 = arith.addf %115, %118 : vector<8x64xf32>
    %cst_76 = arith.constant 5.000000e-01 : f32
    %120 = vector.broadcast %cst_76 : f32 to vector<8x64xf32>
    %121 = arith.mulf %120, %119 : vector<8x64xf32>
    %cst_77 = arith.constant 0.707106769 : f32
    %122 = vector.broadcast %cst_77 : f32 to vector<8x64xf32>
    %123 = arith.mulf %119, %122 : vector<8x64xf32>
    %124 = math.absf %123 : vector<8x64xf32>
    %cst_78 = arith.constant 5.000000e-01 : f32
    %125 = vector.broadcast %cst_78 : f32 to vector<8x64xf32>
    %126 = arith.mulf %125, %124 : vector<8x64xf32>
    %cst_79 = arith.constant 1.000000e+00 : f32
    %127 = vector.broadcast %cst_79 : f32 to vector<8x64xf32>
    %128 = arith.addf %127, %126 : vector<8x64xf32>
    %cst_80 = arith.constant 1.000000e+00 : f32
    %129 = vector.broadcast %cst_80 : f32 to vector<8x64xf32>
    %130 = arith.divf %129, %128 : vector<8x64xf32>
    %cst_81 = arith.constant 0.000000e+00 : f32
    %131 = vector.broadcast %cst_81 : f32 to vector<8x64xf32>
    %132 = arith.subf %131, %124 : vector<8x64xf32>
    %133 = arith.mulf %132, %124 : vector<8x64xf32>
    %cst_82 = arith.constant 1.26551223 : f32
    %134 = vector.broadcast %cst_82 : f32 to vector<8x64xf32>
    %135 = arith.subf %133, %134 : vector<8x64xf32>
    %cst_83 = arith.constant 0.170872763 : f32
    %136 = vector.broadcast %cst_83 : f32 to vector<8x64xf32>
    %137 = arith.mulf %130, %136 : vector<8x64xf32>
    %cst_84 = arith.constant -0.822152256 : f32
    %138 = vector.broadcast %cst_84 : f32 to vector<8x64xf32>
    %139 = arith.addf %138, %137 : vector<8x64xf32>
    %140 = arith.mulf %130, %139 : vector<8x64xf32>
    %cst_85 = arith.constant 1.48851585 : f32
    %141 = vector.broadcast %cst_85 : f32 to vector<8x64xf32>
    %142 = arith.addf %141, %140 : vector<8x64xf32>
    %143 = arith.mulf %130, %142 : vector<8x64xf32>
    %cst_86 = arith.constant -1.13520396 : f32
    %144 = vector.broadcast %cst_86 : f32 to vector<8x64xf32>
    %145 = arith.addf %144, %143 : vector<8x64xf32>
    %146 = arith.mulf %130, %145 : vector<8x64xf32>
    %cst_87 = arith.constant 0.278868079 : f32
    %147 = vector.broadcast %cst_87 : f32 to vector<8x64xf32>
    %148 = arith.addf %147, %146 : vector<8x64xf32>
    %149 = arith.mulf %130, %148 : vector<8x64xf32>
    %cst_88 = arith.constant -0.186288059 : f32
    %150 = vector.broadcast %cst_88 : f32 to vector<8x64xf32>
    %151 = arith.addf %150, %149 : vector<8x64xf32>
    %152 = arith.mulf %130, %151 : vector<8x64xf32>
    %cst_89 = arith.constant 0.0967841818 : f32
    %153 = vector.broadcast %cst_89 : f32 to vector<8x64xf32>
    %154 = arith.addf %153, %152 : vector<8x64xf32>
    %155 = arith.mulf %130, %154 : vector<8x64xf32>
    %cst_90 = arith.constant 0.374091953 : f32
    %156 = vector.broadcast %cst_90 : f32 to vector<8x64xf32>
    %157 = arith.addf %156, %155 : vector<8x64xf32>
    %158 = arith.mulf %130, %157 : vector<8x64xf32>
    %cst_91 = arith.constant 1.00002372 : f32
    %159 = vector.broadcast %cst_91 : f32 to vector<8x64xf32>
    %160 = arith.addf %159, %158 : vector<8x64xf32>
    %161 = arith.mulf %130, %160 : vector<8x64xf32>
    %162 = arith.addf %135, %161 : vector<8x64xf32>
    %163 = math.exp %162 : vector<8x64xf32>
    %164 = arith.mulf %130, %163 : vector<8x64xf32>
    %cst_92 = arith.constant 1.000000e+00 : f32
    %165 = vector.broadcast %cst_92 : f32 to vector<8x64xf32>
    %166 = arith.subf %165, %164 : vector<8x64xf32>
    %cst_93 = arith.constant 0.000000e+00 : f32
    %167 = vector.broadcast %cst_93 : f32 to vector<8x64xf32>
    %168 = arith.cmpf oge, %123, %167 : vector<8x64xf32>
    %cst_94 = arith.constant 0.000000e+00 : f32
    %169 = vector.broadcast %cst_94 : f32 to vector<8x64xf32>
    %170 = arith.subf %169, %166 : vector<8x64xf32>
    %171 = arith.select %168, %166, %170 : vector<8x64xi1>, vector<8x64xf32>
    %cst_95 = arith.constant 1.000000e+00 : f32
    %172 = vector.broadcast %cst_95 : f32 to vector<8x64xf32>
    %173 = arith.addf %172, %171 : vector<8x64xf32>
    %174 = arith.mulf %121, %173 : vector<8x64xf32>
    %c0_96 = arith.constant 0 : index
    %c0_97 = arith.constant 0 : index
    %c0_98 = arith.constant 0 : index
    %175 = vector.load %arg18[%c0_96, %c0_97, %c0_98] : memref<2x32x64xbf16, #tpu.memory_space<vmem>>, vector<1x32x64xbf16>
    %176 = vector.shape_cast %175 : vector<1x32x64xbf16> to vector<32x64xbf16>
    %177 = arith.truncf %174 : vector<8x64xf32> to vector<8x64xbf16>
    %cst_99 = arith.constant dense<0.000000e+00> : vector<8x32xf32>
    %178 = tpu.matmul %177, %176, %cst_99 {dimension_numbers = #tpu.dot_dimension_numbers<[1], [1], [0], [0], [0, 0, 1, 0], [], []>} : vector<8x64xbf16>, vector<32x64xbf16>, vector<8x32xf32> -> vector<8x32xf32>
    %179 = arith.addf %85, %178 : vector<8x32xf32>
    %c0_100 = arith.constant 0 : index
    %c0_101 = arith.constant 0 : index
    %c0_102 = arith.constant 0 : index
    %180 = vector.load %arg19[%c0_100, %c0_101, %c0_102] : memref<2x1x32xf32, #tpu.memory_space<vmem>>, vector<1x1x32xf32>
    %181 = vector.shape_cast %180 : vector<1x1x32xf32> to vector<1x32xf32>
    %182 = vector.broadcast %181 : vector<1x32xf32> to vector<8x32xf32>
    %183 = arith.addf %179, %182 : vector<8x32xf32>
    %c1 = arith.constant 1 : index
    %c0_103 = arith.constant 0 : index
    %c0_104 = arith.constant 0 : index
    %184 = vector.load %arg4[%c1, %c0_103, %c0_104] : memref<2x1x32xf32, #tpu.memory_space<vmem>>, vector<1x1x32xf32>
    %185 = vector.shape_cast %184 : vector<1x1x32xf32> to vector<1x32xf32>
    %c1_105 = arith.constant 1 : index
    %c0_106 = arith.constant 0 : index
    %c0_107 = arith.constant 0 : index
    %186 = vector.load %arg5[%c1_105, %c0_106, %c0_107] : memref<2x1x32xf32, #tpu.memory_space<vmem>>, vector<1x1x32xf32>
    %187 = vector.shape_cast %186 : vector<1x1x32xf32> to vector<1x32xf32>
    %cst_108 = arith.constant dense<0.000000e+00> : vector<8xf32>
    %188 = vector.multi_reduction <add>, %183, %cst_108 [1] : vector<8x32xf32> to vector<8xf32>
    %189 = vector.shape_cast %188 : vector<8xf32> to vector<8x1xf32>
    %cst_109 = arith.constant 3.200000e+01 : f32
    %190 = vector.broadcast %cst_109 : f32 to vector<8x1xf32>
    %191 = arith.divf %189, %190 : vector<8x1xf32>
    %192 = vector.broadcast %191 : vector<8x1xf32> to vector<8x32xf32>
    %193 = arith.subf %183, %192 : vector<8x32xf32>
    %194 = arith.mulf %193, %193 : vector<8x32xf32>
    %cst_110 = arith.constant dense<0.000000e+00> : vector<8xf32>
    %195 = vector.multi_reduction <add>, %194, %cst_110 [1] : vector<8x32xf32> to vector<8xf32>
    %196 = vector.shape_cast %195 : vector<8xf32> to vector<8x1xf32>
    %cst_111 = arith.constant 3.200000e+01 : f32
    %197 = vector.broadcast %cst_111 : f32 to vector<8x1xf32>
    %198 = arith.divf %196, %197 : vector<8x1xf32>
    %199 = vector.broadcast %191 : vector<8x1xf32> to vector<8x32xf32>
    %200 = arith.subf %183, %199 : vector<8x32xf32>
    %cst_112 = arith.constant 9.99999974E-6 : f32
    %201 = vector.broadcast %cst_112 : f32 to vector<8x1xf32>
    %202 = arith.addf %198, %201 : vector<8x1xf32>
    %203 = math.rsqrt %202 : vector<8x1xf32>
    %204 = vector.broadcast %203 : vector<8x1xf32> to vector<8x32xf32>
    %205 = arith.mulf %200, %204 : vector<8x32xf32>
    %206 = vector.broadcast %185 : vector<1x32xf32> to vector<8x32xf32>
    %207 = arith.mulf %205, %206 : vector<8x32xf32>
    %208 = vector.broadcast %187 : vector<1x32xf32> to vector<8x32xf32>
    %209 = arith.addf %207, %208 : vector<8x32xf32>
    %210 = vector.shape_cast %209 : vector<8x32xf32> to vector<1x8x32xf32>
    %211 = vector.broadcast %210 : vector<1x8x32xf32> to vector<4x8x32xf32>
    %212 = arith.truncf %211 : vector<4x8x32xf32> to vector<4x8x32xbf16>
    %c1_113 = arith.constant 1 : index
    %c0_114 = arith.constant 0 : index
    %c0_115 = arith.constant 0 : index
    %c0_116 = arith.constant 0 : index
    %213 = vector.load %arg6[%c1_113, %c0_114, %c0_115, %c0_116] : memref<2x4x8x32xbf16, #tpu.memory_space<vmem>>, vector<1x4x8x32xbf16>
    %214 = vector.shape_cast %213 : vector<1x4x8x32xbf16> to vector<4x8x32xbf16>
    "tpu.trace_start"() <{level = 10 : i32, message = "hle,hde->hld"}> : () -> ()
    %cst_117 = arith.constant dense<0.000000e+00> : vector<4x8x8xf32>
    %215 = tpu.matmul %212, %214, %cst_117 {dimension_numbers = #tpu.dot_dimension_numbers<[2], [2], [1], [1], [0, 0, 0, 1, 1, 1], [0], [0]>} : vector<4x8x32xbf16>, vector<4x8x32xbf16>, vector<4x8x8xf32> -> vector<4x8x8xf32>
    "tpu.trace_stop"() : () -> ()
    %c1_118 = arith.constant 1 : index
    %c0_119 = arith.constant 0 : index
    %c0_120 = arith.constant 0 : index
    %c0_121 = arith.constant 0 : index
    %216 = vector.load %arg7[%c1_118, %c0_119, %c0_120, %c0_121] : memref<2x4x1x8xf32, #tpu.memory_space<vmem>>, vector<1x4x1x8xf32>
    %217 = vector.shape_cast %216 : vector<1x4x1x8xf32> to vector<4x1x8xf32>
    %218 = vector.broadcast %217 : vector<4x1x8xf32> to vector<4x8x8xf32>
    %219 = arith.addf %215, %218 : vector<4x8x8xf32>
    %c1_122 = arith.constant 1 : index
    %c0_123 = arith.constant 0 : index
    %c0_124 = arith.constant 0 : index
    %c0_125 = arith.constant 0 : index
    %220 = vector.load %arg8[%c1_122, %c0_123, %c0_124, %c0_125] : memref<2x4x8x32xbf16, #tpu.memory_space<vmem>>, vector<1x4x8x32xbf16>
    %221 = vector.shape_cast %220 : vector<1x4x8x32xbf16> to vector<4x8x32xbf16>
    "tpu.trace_start"() <{level = 10 : i32, message = "hle,hde->hld"}> : () -> ()
    %cst_126 = arith.constant dense<0.000000e+00> : vector<4x8x8xf32>
    %222 = tpu.matmul %212, %221, %cst_126 {dimension_numbers = #tpu.dot_dimension_numbers<[2], [2], [1], [1], [0, 0, 0, 1, 1, 1], [0], [0]>} : vector<4x8x32xbf16>, vector<4x8x32xbf16>, vector<4x8x8xf32> -> vector<4x8x8xf32>
    "tpu.trace_stop"() : () -> ()
    %c1_127 = arith.constant 1 : index
    %c0_128 = arith.constant 0 : index
    %c0_129 = arith.constant 0 : index
    %c0_130 = arith.constant 0 : index
    %223 = vector.load %arg9[%c1_127, %c0_128, %c0_129, %c0_130] : memref<2x4x1x8xf32, #tpu.memory_space<vmem>>, vector<1x4x1x8xf32>
    %224 = vector.shape_cast %223 : vector<1x4x1x8xf32> to vector<4x1x8xf32>
    %225 = vector.broadcast %224 : vector<4x1x8xf32> to vector<4x8x8xf32>
    %226 = arith.addf %222, %225 : vector<4x8x8xf32>
    %c1_131 = arith.constant 1 : index
    %c0_132 = arith.constant 0 : index
    %c0_133 = arith.constant 0 : index
    %c0_134 = arith.constant 0 : index
    %227 = vector.load %arg10[%c1_131, %c0_132, %c0_133, %c0_134] : memref<2x4x8x32xbf16, #tpu.memory_space<vmem>>, vector<1x4x8x32xbf16>
    %228 = vector.shape_cast %227 : vector<1x4x8x32xbf16> to vector<4x8x32xbf16>
    "tpu.trace_start"() <{level = 10 : i32, message = "hle,hde->hld"}> : () -> ()
    %cst_135 = arith.constant dense<0.000000e+00> : vector<4x8x8xf32>
    %229 = tpu.matmul %212, %228, %cst_135 {dimension_numbers = #tpu.dot_dimension_numbers<[2], [2], [1], [1], [0, 0, 0, 1, 1, 1], [0], [0]>} : vector<4x8x32xbf16>, vector<4x8x32xbf16>, vector<4x8x8xf32> -> vector<4x8x8xf32>
    "tpu.trace_stop"() : () -> ()
    %c1_136 = arith.constant 1 : index
    %c0_137 = arith.constant 0 : index
    %c0_138 = arith.constant 0 : index
    %c0_139 = arith.constant 0 : index
    %230 = vector.load %arg11[%c1_136, %c0_137, %c0_138, %c0_139] : memref<2x4x1x8xf32, #tpu.memory_space<vmem>>, vector<1x4x1x8xf32>
    %231 = vector.shape_cast %230 : vector<1x4x1x8xf32> to vector<4x1x8xf32>
    %232 = vector.broadcast %231 : vector<4x1x8xf32> to vector<4x8x8xf32>
    %233 = arith.addf %229, %232 : vector<4x8x8xf32>
    %234 = arith.truncf %219 : vector<4x8x8xf32> to vector<4x8x8xbf16>
    %235 = arith.truncf %226 : vector<4x8x8xf32> to vector<4x8x8xbf16>
    "tpu.trace_start"() <{level = 10 : i32, message = "hld,hmd->hlm"}> : () -> ()
    %cst_140 = arith.constant dense<0.000000e+00> : vector<4x8x8xf32>
    %236 = tpu.matmul %234, %235, %cst_140 {dimension_numbers = #tpu.dot_dimension_numbers<[2], [2], [1], [1], [0, 0, 0, 1, 1, 1], [0], [0]>} : vector<4x8x8xbf16>, vector<4x8x8xbf16>, vector<4x8x8xf32> -> vector<4x8x8xf32>
    "tpu.trace_stop"() : () -> ()
    %cst_141 = arith.constant 0.353553385 : f32
    %237 = vector.broadcast %cst_141 : f32 to vector<4x8x8xf32>
    %238 = arith.mulf %236, %237 : vector<4x8x8xf32>
    %cst_142 = arith.constant dense<0xFF800000> : vector<4x8xf32>
    %239 = vector.multi_reduction <maximumf>, %238, %cst_142 [2] : vector<4x8x8xf32> to vector<4x8xf32>
    %240 = vector.shape_cast %239 : vector<4x8xf32> to vector<4x8x1xf32>
    %241 = vector.broadcast %240 : vector<4x8x1xf32> to vector<4x8x8xf32>
    %242 = arith.subf %238, %241 : vector<4x8x8xf32>
    %243 = math.exp %242 : vector<4x8x8xf32>
    %cst_143 = arith.constant dense<0.000000e+00> : vector<4x8xf32>
    %244 = vector.multi_reduction <add>, %243, %cst_143 [2] : vector<4x8x8xf32> to vector<4x8xf32>
    %245 = vector.shape_cast %244 : vector<4x8xf32> to vector<4x8x1xf32>
    %246 = tpu.reciprocal %245 {approx = true} : vector<4x8x1xf32> -> vector<4x8x1xf32>
    %247 = vector.broadcast %246 : vector<4x8x1xf32> to vector<4x8x8xf32>
    %248 = arith.mulf %243, %247 : vector<4x8x8xf32>
    %249 = arith.truncf %248 : vector<4x8x8xf32> to vector<4x8x8xbf16>
    %250 = arith.truncf %233 : vector<4x8x8xf32> to vector<4x8x8xbf16>
    "tpu.trace_start"() <{level = 10 : i32, message = "hlm,hmd->hld"}> : () -> ()
    %cst_144 = arith.constant dense<0.000000e+00> : vector<4x8x8xf32>
    %251 = tpu.matmul %249, %250, %cst_144 {dimension_numbers = #tpu.dot_dimension_numbers<[2], [1], [1], [2], [0, 0, 0, 1, 1, 2], [0], [0]>} : vector<4x8x8xbf16>, vector<4x8x8xbf16>, vector<4x8x8xf32> -> vector<4x8x8xf32>
    "tpu.trace_stop"() : () -> ()
    %252 = arith.truncf %251 : vector<4x8x8xf32> to vector<4x8x8xbf16>
    %c1_145 = arith.constant 1 : index
    %c0_146 = arith.constant 0 : index
    %c0_147 = arith.constant 0 : index
    %c0_148 = arith.constant 0 : index
    %253 = vector.load %arg12[%c1_145, %c0_146, %c0_147, %c0_148] : memref<2x4x32x8xbf16, #tpu.memory_space<vmem>>, vector<1x4x32x8xbf16>
    %254 = vector.shape_cast %253 : vector<1x4x32x8xbf16> to vector<4x32x8xbf16>
    "tpu.trace_start"() <{level = 10 : i32, message = "hld,hed->hle"}> : () -> ()
    %cst_149 = arith.constant dense<0.000000e+00> : vector<4x8x32xf32>
    %255 = tpu.matmul %252, %254, %cst_149 {dimension_numbers = #tpu.dot_dimension_numbers<[2], [2], [1], [1], [0, 0, 0, 1, 1, 1], [0], [0]>} : vector<4x8x8xbf16>, vector<4x32x8xbf16>, vector<4x8x32xf32> -> vector<4x8x32xf32>
    "tpu.trace_stop"() : () -> ()
    %cst_150 = arith.constant dense<0.000000e+00> : vector<8x32xf32>
    %256 = vector.multi_reduction <add>, %255, %cst_150 [0] : vector<4x8x32xf32> to vector<8x32xf32>
    %257 = arith.addf %183, %256 : vector<8x32xf32>
    %c1_151 = arith.constant 1 : index
    %c0_152 = arith.constant 0 : index
    %c0_153 = arith.constant 0 : index
    %258 = vector.load %arg13[%c1_151, %c0_152, %c0_153] : memref<2x1x32xf32, #tpu.memory_space<vmem>>, vector<1x1x32xf32>
    %259 = vector.shape_cast %258 : vector<1x1x32xf32> to vector<1x32xf32>
    %260 = vector.broadcast %259 : vector<1x32xf32> to vector<8x32xf32>
    %261 = arith.addf %257, %260 : vector<8x32xf32>
    %c1_154 = arith.constant 1 : index
    %c0_155 = arith.constant 0 : index
    %c0_156 = arith.constant 0 : index
    %262 = vector.load %arg14[%c1_154, %c0_155, %c0_156] : memref<2x1x32xf32, #tpu.memory_space<vmem>>, vector<1x1x32xf32>
    %263 = vector.shape_cast %262 : vector<1x1x32xf32> to vector<1x32xf32>
    %c1_157 = arith.constant 1 : index
    %c0_158 = arith.constant 0 : index
    %c0_159 = arith.constant 0 : index
    %264 = vector.load %arg15[%c1_157, %c0_158, %c0_159] : memref<2x1x32xf32, #tpu.memory_space<vmem>>, vector<1x1x32xf32>
    %265 = vector.shape_cast %264 : vector<1x1x32xf32> to vector<1x32xf32>
    %cst_160 = arith.constant dense<0.000000e+00> : vector<8xf32>
    %266 = vector.multi_reduction <add>, %261, %cst_160 [1] : vector<8x32xf32> to vector<8xf32>
    %267 = vector.shape_cast %266 : vector<8xf32> to vector<8x1xf32>
    %cst_161 = arith.constant 3.200000e+01 : f32
    %268 = vector.broadcast %cst_161 : f32 to vector<8x1xf32>
    %269 = arith.divf %267, %268 : vector<8x1xf32>
    %270 = vector.broadcast %269 : vector<8x1xf32> to vector<8x32xf32>
    %271 = arith.subf %261, %270 : vector<8x32xf32>
    %272 = arith.mulf %271, %271 : vector<8x32xf32>
    %cst_162 = arith.constant dense<0.000000e+00> : vector<8xf32>
    %273 = vector.multi_reduction <add>, %272, %cst_162 [1] : vector<8x32xf32> to vector<8xf32>
    %274 = vector.shape_cast %273 : vector<8xf32> to vector<8x1xf32>
    %cst_163 = arith.constant 3.200000e+01 : f32
    %275 = vector.broadcast %cst_163 : f32 to vector<8x1xf32>
    %276 = arith.divf %274, %275 : vector<8x1xf32>
    %277 = vector.broadcast %269 : vector<8x1xf32> to vector<8x32xf32>
    %278 = arith.subf %261, %277 : vector<8x32xf32>
    %cst_164 = arith.constant 9.99999974E-6 : f32
    %279 = vector.broadcast %cst_164 : f32 to vector<8x1xf32>
    %280 = arith.addf %276, %279 : vector<8x1xf32>
    %281 = math.rsqrt %280 : vector<8x1xf32>
    %282 = vector.broadcast %281 : vector<8x1xf32> to vector<8x32xf32>
    %283 = arith.mulf %278, %282 : vector<8x32xf32>
    %284 = vector.broadcast %263 : vector<1x32xf32> to vector<8x32xf32>
    %285 = arith.mulf %283, %284 : vector<8x32xf32>
    %286 = vector.broadcast %265 : vector<1x32xf32> to vector<8x32xf32>
    %287 = arith.addf %285, %286 : vector<8x32xf32>
    %c1_165 = arith.constant 1 : index
    %c0_166 = arith.constant 0 : index
    %c0_167 = arith.constant 0 : index
    %288 = vector.load %arg16[%c1_165, %c0_166, %c0_167] : memref<2x64x32xbf16, #tpu.memory_space<vmem>>, vector<1x64x32xbf16>
    %289 = vector.shape_cast %288 : vector<1x64x32xbf16> to vector<64x32xbf16>
    %290 = arith.truncf %287 : vector<8x32xf32> to vector<8x32xbf16>
    %cst_168 = arith.constant dense<0.000000e+00> : vector<8x64xf32>
    %291 = tpu.matmul %290, %289, %cst_168 {dimension_numbers = #tpu.dot_dimension_numbers<[1], [1], [0], [0], [0, 0, 1, 0], [], []>} : vector<8x32xbf16>, vector<64x32xbf16>, vector<8x64xf32> -> vector<8x64xf32>
    %c1_169 = arith.constant 1 : index
    %c0_170 = arith.constant 0 : index
    %c0_171 = arith.constant 0 : index
    %292 = vector.load %arg17[%c1_169, %c0_170, %c0_171] : memref<2x1x64xf32, #tpu.memory_space<vmem>>, vector<1x1x64xf32>
    %293 = vector.shape_cast %292 : vector<1x1x64xf32> to vector<1x64xf32>
    %294 = vector.broadcast %293 : vector<1x64xf32> to vector<8x64xf32>
    %295 = arith.addf %291, %294 : vector<8x64xf32>
    %cst_172 = arith.constant 5.000000e-01 : f32
    %296 = vector.broadcast %cst_172 : f32 to vector<8x64xf32>
    %297 = arith.mulf %296, %295 : vector<8x64xf32>
    %cst_173 = arith.constant 0.707106769 : f32
    %298 = vector.broadcast %cst_173 : f32 to vector<8x64xf32>
    %299 = arith.mulf %295, %298 : vector<8x64xf32>
    %300 = math.absf %299 : vector<8x64xf32>
    %cst_174 = arith.constant 5.000000e-01 : f32
    %301 = vector.broadcast %cst_174 : f32 to vector<8x64xf32>
    %302 = arith.mulf %301, %300 : vector<8x64xf32>
    %cst_175 = arith.constant 1.000000e+00 : f32
    %303 = vector.broadcast %cst_175 : f32 to vector<8x64xf32>
    %304 = arith.addf %303, %302 : vector<8x64xf32>
    %cst_176 = arith.constant 1.000000e+00 : f32
    %305 = vector.broadcast %cst_176 : f32 to vector<8x64xf32>
    %306 = arith.divf %305, %304 : vector<8x64xf32>
    %cst_177 = arith.constant 0.000000e+00 : f32
    %307 = vector.broadcast %cst_177 : f32 to vector<8x64xf32>
    %308 = arith.subf %307, %300 : vector<8x64xf32>
    %309 = arith.mulf %308, %300 : vector<8x64xf32>
    %cst_178 = arith.constant 1.26551223 : f32
    %310 = vector.broadcast %cst_178 : f32 to vector<8x64xf32>
    %311 = arith.subf %309, %310 : vector<8x64xf32>
    %cst_179 = arith.constant 0.170872763 : f32
    %312 = vector.broadcast %cst_179 : f32 to vector<8x64xf32>
    %313 = arith.mulf %306, %312 : vector<8x64xf32>
    %cst_180 = arith.constant -0.822152256 : f32
    %314 = vector.broadcast %cst_180 : f32 to vector<8x64xf32>
    %315 = arith.addf %314, %313 : vector<8x64xf32>
    %316 = arith.mulf %306, %315 : vector<8x64xf32>
    %cst_181 = arith.constant 1.48851585 : f32
    %317 = vector.broadcast %cst_181 : f32 to vector<8x64xf32>
    %318 = arith.addf %317, %316 : vector<8x64xf32>
    %319 = arith.mulf %306, %318 : vector<8x64xf32>
    %cst_182 = arith.constant -1.13520396 : f32
    %320 = vector.broadcast %cst_182 : f32 to vector<8x64xf32>
    %321 = arith.addf %320, %319 : vector<8x64xf32>
    %322 = arith.mulf %306, %321 : vector<8x64xf32>
    %cst_183 = arith.constant 0.278868079 : f32
    %323 = vector.broadcast %cst_183 : f32 to vector<8x64xf32>
    %324 = arith.addf %323, %322 : vector<8x64xf32>
    %325 = arith.mulf %306, %324 : vector<8x64xf32>
    %cst_184 = arith.constant -0.186288059 : f32
    %326 = vector.broadcast %cst_184 : f32 to vector<8x64xf32>
    %327 = arith.addf %326, %325 : vector<8x64xf32>
    %328 = arith.mulf %306, %327 : vector<8x64xf32>
    %cst_185 = arith.constant 0.0967841818 : f32
    %329 = vector.broadcast %cst_185 : f32 to vector<8x64xf32>
    %330 = arith.addf %329, %328 : vector<8x64xf32>
    %331 = arith.mulf %306, %330 : vector<8x64xf32>
    %cst_186 = arith.constant 0.374091953 : f32
    %332 = vector.broadcast %cst_186 : f32 to vector<8x64xf32>
    %333 = arith.addf %332, %331 : vector<8x64xf32>
    %334 = arith.mulf %306, %333 : vector<8x64xf32>
    %cst_187 = arith.constant 1.00002372 : f32
    %335 = vector.broadcast %cst_187 : f32 to vector<8x64xf32>
    %336 = arith.addf %335, %334 : vector<8x64xf32>
    %337 = arith.mulf %306, %336 : vector<8x64xf32>
    %338 = arith.addf %311, %337 : vector<8x64xf32>
    %339 = math.exp %338 : vector<8x64xf32>
    %340 = arith.mulf %306, %339 : vector<8x64xf32>
    %cst_188 = arith.constant 1.000000e+00 : f32
    %341 = vector.broadcast %cst_188 : f32 to vector<8x64xf32>
    %342 = arith.subf %341, %340 : vector<8x64xf32>
    %cst_189 = arith.constant 0.000000e+00 : f32
    %343 = vector.broadcast %cst_189 : f32 to vector<8x64xf32>
    %344 = arith.cmpf oge, %299, %343 : vector<8x64xf32>
    %cst_190 = arith.constant 0.000000e+00 : f32
    %345 = vector.broadcast %cst_190 : f32 to vector<8x64xf32>
    %346 = arith.subf %345, %342 : vector<8x64xf32>
    %347 = arith.select %344, %342, %346 : vector<8x64xi1>, vector<8x64xf32>
    %cst_191 = arith.constant 1.000000e+00 : f32
    %348 = vector.broadcast %cst_191 : f32 to vector<8x64xf32>
    %349 = arith.addf %348, %347 : vector<8x64xf32>
    %350 = arith.mulf %297, %349 : vector<8x64xf32>
    %c1_192 = arith.constant 1 : index
    %c0_193 = arith.constant 0 : index
    %c0_194 = arith.constant 0 : index
    %351 = vector.load %arg18[%c1_192, %c0_193, %c0_194] : memref<2x32x64xbf16, #tpu.memory_space<vmem>>, vector<1x32x64xbf16>
    %352 = vector.shape_cast %351 : vector<1x32x64xbf16> to vector<32x64xbf16>
    %353 = arith.truncf %350 : vector<8x64xf32> to vector<8x64xbf16>
    %cst_195 = arith.constant dense<0.000000e+00> : vector<8x32xf32>
    %354 = tpu.matmul %353, %352, %cst_195 {dimension_numbers = #tpu.dot_dimension_numbers<[1], [1], [0], [0], [0, 0, 1, 0], [], []>} : vector<8x64xbf16>, vector<32x64xbf16>, vector<8x32xf32> -> vector<8x32xf32>
    %355 = arith.addf %261, %354 : vector<8x32xf32>
    %c1_196 = arith.constant 1 : index
    %c0_197 = arith.constant 0 : index
    %c0_198 = arith.constant 0 : index
    %356 = vector.load %arg19[%c1_196, %c0_197, %c0_198] : memref<2x1x32xf32, #tpu.memory_space<vmem>>, vector<1x1x32xf32>
    %357 = vector.shape_cast %356 : vector<1x1x32xf32> to vector<1x32xf32>
    %358 = vector.broadcast %357 : vector<1x32xf32> to vector<8x32xf32>
    %359 = arith.addf %355, %358 : vector<8x32xf32>
    %c0_199 = arith.constant 0 : index
    %c0_200 = arith.constant 0 : index
    %360 = vector.load %arg20[%c0_199, %c0_200] : memref<128x32xbf16, #tpu.memory_space<vmem>>, vector<128x32xbf16>
    %361 = arith.truncf %359 : vector<8x32xf32> to vector<8x32xbf16>
    %cst_201 = arith.constant dense<0.000000e+00> : vector<8x128xf32>
    %362 = tpu.matmul %361, %360, %cst_201 {dimension_numbers = #tpu.dot_dimension_numbers<[1], [1], [0], [0], [0, 0, 1, 0], [], []>} : vector<8x32xbf16>, vector<128x32xbf16>, vector<8x128xf32> -> vector<8x128xf32>
    %c0_202 = arith.constant 0 : index
    %c0_203 = arith.constant 0 : index
    %363 = vector.load %arg21[%c0_202, %c0_203] : memref<1x128xf32, #tpu.memory_space<vmem>>, vector<1x128xf32>
    %364 = vector.broadcast %363 : vector<1x128xf32> to vector<8x128xf32>
    %365 = arith.addf %362, %364 : vector<8x128xf32>
    %c0_204 = arith.constant 0 : index
    %c0_205 = arith.constant 0 : index
    %c0_206 = arith.constant 0 : index
    %366 = vector.load %arg22[%c0_204, %c0_205, %c0_206] : memref<1x8x128xf32, #tpu.memory_space<vmem>>, vector<1x8x128xf32>
    %367 = vector.shape_cast %366 : vector<1x8x128xf32> to vector<8x128xf32>
    %368 = vector.shape_cast %365 : vector<8x128xf32> to vector<1x8x128xf32>
    tpu.vector_store %arg22[%c0_204, %c0_205, %c0_206], %368 {strides = array<i32>} : memref<1x8x128xf32, #tpu.memory_space<vmem>>, vector<1x8x128xf32>,
    return
  }
  func.func @transform_0(%arg0: i32) -> (i32, i32, i32) {
    %c0_i32 = arith.constant 0 : i32
    %c0_i32_0 = arith.constant 0 : i32
    %c0_i32_1 = arith.constant 0 : i32
    return %arg0, %c0_i32, %c0_i32_0 : i32, i32, i32
  }
  func.func @transform_1(%arg0: i32) -> (i32, i32) {
    %c0_i32 = arith.constant 0 : i32
    %c0_i32_0 = arith.constant 0 : i32
    %c0_i32_1 = arith.constant 0 : i32
    return %c0_i32, %c0_i32_0 : i32, i32
  }
  func.func @transform_2(%arg0: i32) -> (i32, i32) {
    %c0_i32 = arith.constant 0 : i32
    %c0_i32_0 = arith.constant 0 : i32
    %c0_i32_1 = arith.constant 0 : i32
    return %c0_i32, %c0_i32_0 : i32, i32
  }
  func.func @transform_3(%arg0: i32) -> (i32, i32, i32) {
    %c0_i32 = arith.constant 0 : i32
    %c0_i32_0 = arith.constant 0 : i32
    %c0_i32_1 = arith.constant 0 : i32
    %c0_i32_2 = arith.constant 0 : i32
    return %c0_i32, %c0_i32_0, %c0_i32_1 : i32, i32, i32
  }
  func.func @transform_4(%arg0: i32) -> (i32, i32, i32) {
    %c0_i32 = arith.constant 0 : i32
    %c0_i32_0 = arith.constant 0 : i32
    %c0_i32_1 = arith.constant 0 : i32
    %c0_i32_2 = arith.constant 0 : i32
    return %c0_i32, %c0_i32_0, %c0_i32_1 : i32, i32, i32
  }
  func.func @transform_5(%arg0: i32) -> (i32, i32, i32, i32) {
    %c0_i32 = arith.constant 0 : i32
    %c0_i32_0 = arith.constant 0 : i32
    %c0_i32_1 = arith.constant 0 : i32
    %c0_i32_2 = arith.constant 0 : i32
    %c0_i32_3 = arith.constant 0 : i32
    return %c0_i32, %c0_i32_0, %c0_i32_1, %c0_i32_2 : i32, i32, i32, i32
  }
  func.func @transform_6(%arg0: i32) -> (i32, i32, i32, i32) {
    %c0_i32 = arith.constant 0 : i32
    %c0_i32_0 = arith.constant 0 : i32
    %c0_i32_1 = arith.constant 0 : i32
    %c0_i32_2 = arith.constant 0 : i32
    %c0_i32_3 = arith.constant 0 : i32
    return %c0_i32, %c0_i32_0, %c0_i32_1, %c0_i32_2 : i32, i32, i32, i32
  }
  func.func @transform_7(%arg0: i32) -> (i32, i32, i32, i32) {
    %c0_i32 = arith.constant 0 : i32
    %c0_i32_0 = arith.constant 0 : i32
    %c0_i32_1 = arith.constant 0 : i32
    %c0_i32_2 = arith.constant 0 : i32
    %c0_i32_3 = arith.constant 0 : i32
    return %c0_i32, %c0_i32_0, %c0_i32_1, %c0_i32_2 : i32, i32, i32, i32
  }
  func.func @transform_8(%arg0: i32) -> (i32, i32, i32, i32) {
    %c0_i32 = arith.constant 0 : i32
    %c0_i32_0 = arith.constant 0 : i32
    %c0_i32_1 = arith.constant 0 : i32
    %c0_i32_2 = arith.constant 0 : i32
    %c0_i32_3 = arith.constant 0 : i32
    return %c0_i32, %c0_i32_0, %c0_i32_1, %c0_i32_2 : i32, i32, i32, i32
  }
  func.func @transform_9(%arg0: i32) -> (i32, i32, i32, i32) {
    %c0_i32 = arith.constant 0 : i32
    %c0_i32_0 = arith.constant 0 : i32
    %c0_i32_1 = arith.constant 0 : i32
    %c0_i32_2 = arith.constant 0 : i32
    %c0_i32_3 = arith.constant 0 : i32
    return %c0_i32, %c0_i32_0, %c0_i32_1, %c0_i32_2 : i32, i32, i32, i32
  }
  func.func @transform_10(%arg0: i32) -> (i32, i32, i32, i32) {
    %c0_i32 = arith.constant 0 : i32
    %c0_i32_0 = arith.constant 0 : i32
    %c0_i32_1 = arith.constant 0 : i32
    %c0_i32_2 = arith.constant 0 : i32
    %c0_i32_3 = arith.constant 0 : i32
    return %c0_i32, %c0_i32_0, %c0_i32_1, %c0_i32_2 : i32, i32, i32, i32
  }
  func.func @transform_11(%arg0: i32) -> (i32, i32, i32, i32) {
    %c0_i32 = arith.constant 0 : i32
    %c0_i32_0 = arith.constant 0 : i32
    %c0_i32_1 = arith.constant 0 : i32
    %c0_i32_2 = arith.constant 0 : i32
    %c0_i32_3 = arith.constant 0 : i32
    return %c0_i32, %c0_i32_0, %c0_i32_1, %c0_i32_2 : i32, i32, i32, i32
  }
  func.func @transform_12(%arg0: i32) -> (i32, i32, i32) {
    %c0_i32 = arith.constant 0 : i32
    %c0_i32_0 = arith.constant 0 : i32
    %c0_i32_1 = arith.constant 0 : i32
    %c0_i32_2 = arith.constant 0 : i32
    return %c0_i32, %c0_i32_0, %c0_i32_1 : i32, i32, i32
  }
  func.func @transform_13(%arg0: i32) -> (i32, i32, i32) {
    %c0_i32 = arith.constant 0 : i32
    %c0_i32_0 = arith.constant 0 : i32
    %c0_i32_1 = arith.constant 0 : i32
    %c0_i32_2 = arith.constant 0 : i32
    return %c0_i32, %c0_i32_0, %c0_i32_1 : i32, i32, i32
  }
  func.func @transform_14(%arg0: i32) -> (i32, i32, i32) {
    %c0_i32 = arith.constant 0 : i32
    %c0_i32_0 = arith.constant 0 : i32
    %c0_i32_1 = arith.constant 0 : i32
    %c0_i32_2 = arith.constant 0 : i32
    return %c0_i32, %c0_i32_0, %c0_i32_1 : i32, i32, i32
  }
  func.func @transform_15(%arg0: i32) -> (i32, i32, i32) {
    %c0_i32 = arith.constant 0 : i32
    %c0_i32_0 = arith.constant 0 : i32
    %c0_i32_1 = arith.constant 0 : i32
    %c0_i32_2 = arith.constant 0 : i32
    return %c0_i32, %c0_i32_0, %c0_i32_1 : i32, i32, i32
  }
  func.func @transform_16(%arg0: i32) -> (i32, i32, i32) {
    %c0_i32 = arith.constant 0 : i32
    %c0_i32_0 = arith.constant 0 : i32
    %c0_i32_1 = arith.constant 0 : i32
    %c0_i32_2 = arith.constant 0 : i32
    return %c0_i32, %c0_i32_0, %c0_i32_1 : i32, i32, i32
  }
  func.func @transform_17(%arg0: i32) -> (i32, i32, i32) {
    %c0_i32 = arith.constant 0 : i32
    %c0_i32_0 = arith.constant 0 : i32
    %c0_i32_1 = arith.constant 0 : i32
    %c0_i32_2 = arith.constant 0 : i32
    return %c0_i32, %c0_i32_0, %c0_i32_1 : i32, i32, i32
  }
  func.func @transform_18(%arg0: i32) -> (i32, i32, i32) {
    %c0_i32 = arith.constant 0 : i32
    %c0_i32_0 = arith.constant 0 : i32
    %c0_i32_1 = arith.constant 0 : i32
    %c0_i32_2 = arith.constant 0 : i32
    return %c0_i32, %c0_i32_0, %c0_i32_1 : i32, i32, i32
  }
  func.func @transform_19(%arg0: i32) -> (i32, i32) {
    %c0_i32 = arith.constant 0 : i32
    %c0_i32_0 = arith.constant 0 : i32
    %c0_i32_1 = arith.constant 0 : i32
    return %c0_i32, %c0_i32_0 : i32, i32
  }
  func.func @transform_20(%arg0: i32) -> (i32, i32) {
    %c0_i32 = arith.constant 0 : i32
    %c0_i32_0 = arith.constant 0 : i32
    %c0_i32_1 = arith.constant 0 : i32
    return %c0_i32, %c0_i32_0 : i32, i32
  }
  func.func @transform_21(%arg0: i32) -> (i32, i32, i32) {
    %c0_i32 = arith.constant 0 : i32
    %c0_i32_0 = arith.constant 0 : i32
    %c0_i32_1 = arith.constant 0 : i32
    return %arg0, %c0_i32, %c0_i32_0 : i32, i32, i32
  }
}

</mosaic_0001>

<llo_original>
// kernel: transformer_forward.1
$region0: #{transformer_forward.1}
  #allocation0 [shape = 'u32[]', space=smem, size = 0x4, offset = 0x4, fixed_abs, tag = 'smem constant byte address 0x4 - core index']
  #allocation1 [shape = 'u32[72,128]{1,0:T(1,128)}', space=vmem, size = 0x9000, scoped, tag = 'internal scratch']
  %s0 = inlined_call_operand.vmem [shape: f32[2,8,16], index: 0, kind: input, shape index: {}]
  %s1 = inlined_call_operand.vmem [shape: bf16[32,16], index: 1, kind: input, shape index: {}]
  %s2 = inlined_call_operand.vmem [shape: f32[1,32], index: 2, kind: input, shape index: {}]
  %s3 = inlined_call_operand.vmem [shape: f32[2,1,32], index: 3, kind: input, shape index: {}]
  %s4 = inlined_call_operand.vmem [shape: f32[2,1,32], index: 4, kind: input, shape index: {}]
  %s5 = inlined_call_operand.vmem [shape: bf16[2,4,8,32], index: 5, kind: input, shape index: {}]
  %s6 = inlined_call_operand.vmem [shape: f32[2,4,1,8], index: 6, kind: input, shape index: {}]
  %s7 = inlined_call_operand.vmem [shape: bf16[2,4,8,32], index: 7, kind: input, shape index: {}]
  %s8 = inlined_call_operand.vmem [shape: f32[2,4,1,8], index: 8, kind: input, shape index: {}]
  %s9 = inlined_call_operand.vmem [shape: bf16[2,4,8,32], index: 9, kind: input, shape index: {}]
  %s10 = inlined_call_operand.vmem [shape: f32[2,4,1,8], index: 10, kind: input, shape index: {}]
  %s11 = inlined_call_operand.vmem [shape: bf16[2,4,32,8], index: 11, kind: input, shape index: {}]
  %s12 = inlined_call_operand.vmem [shape: f32[2,1,32], index: 12, kind: input, shape index: {}]
  %s13 = inlined_call_operand.vmem [shape: f32[2,1,32], index: 13, kind: input, shape index: {}]
  %s14 = inlined_call_operand.vmem [shape: f32[2,1,32], index: 14, kind: input, shape index: {}]
  %s15 = inlined_call_operand.vmem [shape: bf16[2,64,32], index: 15, kind: input, shape index: {}]
  %s16 = inlined_call_operand.vmem [shape: f32[2,1,64], index: 16, kind: input, shape index: {}]
  %s17 = inlined_call_operand.vmem [shape: bf16[2,32,64], index: 17, kind: input, shape index: {}]
  %s18 = inlined_call_operand.vmem [shape: f32[2,1,32], index: 18, kind: input, shape index: {}]
  %s19 = inlined_call_operand.vmem [shape: bf16[128,32], index: 19, kind: input, shape index: {}]
  %s20 = inlined_call_operand.vmem [shape: f32[1,128], index: 20, kind: input, shape index: {}]
  %s21 = inlined_call_operand.vmem [shape: f32[2,8,128], index: 21, kind: output, shape index: {}]
  %s22 = sld [smem:[#allocation0]]
  $region117: #{transformer_forward.1} parent=0
    _
  %s24 = ssub.s32 1, %s22
  %s25 = scalar_select 0, %s24, %s22
  loop: start=0, step=1, limit=4
  $region2: #{transformer_forward.1} parent=0 // loop_pre_header
    _
  $region3: #{transformer_forward.1} parent=0 // loop_header
    %s27 = sphi 0, %s31
    %p28 = scmp.ge.s32.totalorder %s27, 4
    %s37 = sphi 0, %s39
    %s40 = sphi 0, %s37
    %s41 = sphi 0, %s40
    %s57 = sphi 0, %s41
    %s61 = sphi 0, %s61
    %s63 = sphi 0, %s61
    %s64 = sphi 0, %s63
    %s78 = sphi 0, %s64
    %s82 = sphi 0, %s82
    %s84 = sphi 0, %s82
    %s85 = sphi 0, %s84
    %s99 = sphi 0, %s85
    %s103 = sphi 0, %s103
    %s105 = sphi 0, %s103
    %s106 = sphi 0, %s105
    %s120 = sphi 0, %s106
    %s124 = sphi 0, %s124
    %s126 = sphi 0, %s124
    %s127 = sphi 0, %s126
    %s141 = sphi 0, %s127
    %s145 = sphi 0, %s145
    %s147 = sphi 0, %s145
    %s148 = sphi 0, %s147
    %s162 = sphi 0, %s148
    %s166 = sphi 0, %s166
    %s168 = sphi 0, %s166
    %s169 = sphi 0, %s168
    %s183 = sphi 0, %s169
    %s187 = sphi 0, %s187
    %s189 = sphi 0, %s187
    %s190 = sphi 0, %s189
    %s204 = sphi 0, %s190
    %s208 = sphi 0, %s208
    %s210 = sphi 0, %s208
    %s211 = sphi 0, %s210
    %s225 = sphi 0, %s211
    %s229 = sphi 0, %s229
    %s231 = sphi 0, %s229
    %s232 = sphi 0, %s231
    %s246 = sphi 0, %s232
    %s250 = sphi 0, %s250
    %s252 = sphi 0, %s250
    %s253 = sphi 0, %s252
    %s267 = sphi 0, %s253
    %s271 = sphi 0, %s271
    %s273 = sphi 0, %s271
    %s274 = sphi 0, %s273
    %s288 = sphi 0, %s274
    %s292 = sphi 0, %s292
    %s294 = sphi 0, %s292
    %s295 = sphi 0, %s294
    %s309 = sphi 0, %s295
    %s313 = sphi 0, %s313
    %s315 = sphi 0, %s313
    %s316 = sphi 0, %s315
    %s330 = sphi 0, %s316
    %s334 = sphi 0, %s334
    %s336 = sphi 0, %s334
    %s337 = sphi 0, %s336
    %s351 = sphi 0, %s337
    %s355 = sphi 0, %s355
    %s357 = sphi 0, %s355
    %s358 = sphi 0, %s357
    %s372 = sphi 0, %s358
    %s376 = sphi 0, %s376
    %s378 = sphi 0, %s376
    %s379 = sphi 0, %s378
    %s393 = sphi 0, %s379
    %s397 = sphi 0, %s397
    %s399 = sphi 0, %s397
    %s400 = sphi 0, %s399
    %s414 = sphi 0, %s400
    %s418 = sphi 0, %s418
    %s420 = sphi 0, %s418
    %s421 = sphi 0, %s420
    %s435 = sphi 0, %s421
    %s439 = sphi 0, %s439
    %s441 = sphi 0, %s439
    %s442 = sphi 0, %s441
    %s456 = sphi 0, %s442
    %s460 = sphi 0, %s460
    %s462 = sphi 0, %s460
    %s463 = sphi 0, %s462
    %s477 = sphi 0, %s463
    %s483 = sphi 0, %s485
    %s486 = sphi 0, %s483
    %s487 = sphi 0, %s486
    %s503 = sphi 0, %s487
  $region4: #{transformer_forward.1} parent=0 // loop_header_branch
    %30 = sbr.rel (%p28) target = $region8
  $region5: #{transformer_forward.1} parent=0 // loop_body
    %s32 = ssub.s32 %s27, 1
    %s33 = ssub.s32 %s27, 2
    %s34 = sadd.s32 %s27, 1
    %s35 = ssub.s32 %s27, %s34
    %p36 = scmp.eq.s32.totalorder %s35, 0
    %s38 = sadd.s32 %s37, 1
    %s39 = scalar_select %p36, %s37, %s38
    %p42 = pneg %p36
    %p43 = scmp.eq.s32.totalorder %s27, 1
    %p44 = por %p42, %p43
    %p45 = scmp.ne.s32.totalorder %s37, %s40
    %p46 = scmp.eq.s32.totalorder %s27, 0
    %p47 = por %p45, %p46
    %p48 = scmp.ne.s32.totalorder %s37, %s40
    %p49 = scmp.eq.s32.totalorder %s32, 1
    %p50 = por %p48, %p49
    %p51 = scmp.ne.s32.totalorder %s40, %s41
    %p52 = scmp.eq.s32.totalorder %s32, 0
    %p53 = por %p51, %p52
    %p54 = scmp.ne.s32.totalorder %s40, %s41
    %p55 = scmp.eq.s32.totalorder %s33, 1
    %p56 = por %p54, %p55
    %p58 = scmp.ne.s32.totalorder %s41, %s57
    %p59 = scmp.eq.s32.totalorder %s33, 0
    %p60 = por %p58, %p59
    %s62 = sadd.s32 %s61, 1
    %p65 = scmp.eq.s32.totalorder %s27, 1
    %p66 = scmp.ne.s32.totalorder %s61, %s63
    %p67 = scmp.eq.s32.totalorder %s27, 0
    %p68 = por %p66, %p67
    %p69 = scmp.ne.s32.totalorder %s61, %s63
    %p70 = scmp.eq.s32.totalorder %s32, 1
    %p71 = por %p69, %p70
    %p72 = scmp.ne.s32.totalorder %s63, %s64
    %p73 = scmp.eq.s32.totalorder %s32, 0
    %p74 = por %p72, %p73
    %p75 = scmp.ne.s32.totalorder %s63, %s64
    %p76 = scmp.eq.s32.totalorder %s33, 1
    %p77 = por %p75, %p76
    %p79 = scmp.ne.s32.totalorder %s64, %s78
    %p80 = scmp.eq.s32.totalorder %s33, 0
    %p81 = por %p79, %p80
    %s83 = sadd.s32 %s82, 1
    %p86 = scmp.eq.s32.totalorder %s27, 1
    %p87 = scmp.ne.s32.totalorder %s82, %s84
    %p88 = scmp.eq.s32.totalorder %s27, 0
    %p89 = por %p87, %p88
    %p90 = scmp.ne.s32.totalorder %s82, %s84
    %p91 = scmp.eq.s32.totalorder %s32, 1
    %p92 = por %p90, %p91
    %p93 = scmp.ne.s32.totalorder %s84, %s85
    %p94 = scmp.eq.s32.totalorder %s32, 0
    %p95 = por %p93, %p94
    %p96 = scmp.ne.s32.totalorder %s84, %s85
    %p97 = scmp.eq.s32.totalorder %s33, 1
    %p98 = por %p96, %p97
    %p100 = scmp.ne.s32.totalorder %s85, %s99
    %p101 = scmp.eq.s32.totalorder %s33, 0
    %p102 = por %p100, %p101
    %s104 = sadd.s32 %s103, 1
    %p107 = scmp.eq.s32.totalorder %s27, 1
    %p108 = scmp.ne.s32.totalorder %s103, %s105
    %p109 = scmp.eq.s32.totalorder %s27, 0
    %p110 = por %p108, %p109
    %p111 = scmp.ne.s32.totalorder %s103, %s105
    %p112 = scmp.eq.s32.totalorder %s32, 1
    %p113 = por %p111, %p112
    %p114 = scmp.ne.s32.totalorder %s105, %s106
    %p115 = scmp.eq.s32.totalorder %s32, 0
    %p116 = por %p114, %p115
    %p117 = scmp.ne.s32.totalorder %s105, %s106
    %p118 = scmp.eq.s32.totalorder %s33, 1
    %p119 = por %p117, %p118
    %p121 = scmp.ne.s32.totalorder %s106, %s120
    %p122 = scmp.eq.s32.totalorder %s33, 0
    %p123 = por %p121, %p122
    %s125 = sadd.s32 %s124, 1
    %p128 = scmp.eq.s32.totalorder %s27, 1
    %p129 = scmp.ne.s32.totalorder %s124, %s126
    %p130 = scmp.eq.s32.totalorder %s27, 0
    %p131 = por %p129, %p130
    %p132 = scmp.ne.s32.totalorder %s124, %s126
    %p133 = scmp.eq.s32.totalorder %s32, 1
    %p134 = por %p132, %p133
    %p135 = scmp.ne.s32.totalorder %s126, %s127
    %p136 = scmp.eq.s32.totalorder %s32, 0
    %p137 = por %p135, %p136
    %p138 = scmp.ne.s32.totalorder %s126, %s127
    %p139 = scmp.eq.s32.totalorder %s33, 1
    %p140 = por %p138, %p139
    %p142 = scmp.ne.s32.totalorder %s127, %s141
    %p143 = scmp.eq.s32.totalorder %s33, 0
    %p144 = por %p142, %p143
    %s146 = sadd.s32 %s145, 1
    %p149 = scmp.eq.s32.totalorder %s27, 1
    %p150 = scmp.ne.s32.totalorder %s145, %s147
    %p151 = scmp.eq.s32.totalorder %s27, 0
    %p152 = por %p150, %p151
    %p153 = scmp.ne.s32.totalorder %s145, %s147
    %p154 = scmp.eq.s32.totalorder %s32, 1
    %p155 = por %p153, %p154
    %p156 = scmp.ne.s32.totalorder %s147, %s148
    %p157 = scmp.eq.s32.totalorder %s32, 0
    %p158 = por %p156, %p157
    %p159 = scmp.ne.s32.totalorder %s147, %s148
    %p160 = scmp.eq.s32.totalorder %s33, 1
    %p161 = por %p159, %p160
    %p163 = scmp.ne.s32.totalorder %s148, %s162
    %p164 = scmp.eq.s32.totalorder %s33, 0
    %p165 = por %p163, %p164
    %s167 = sadd.s32 %s166, 1
    %p170 = scmp.eq.s32.totalorder %s27, 1
    %p171 = scmp.ne.s32.totalorder %s166, %s168
    %p172 = scmp.eq.s32.totalorder %s27, 0
    %p173 = por %p171, %p172
    %p174 = scmp.ne.s32.totalorder %s166, %s168
    %p175 = scmp.eq.s32.totalorder %s32, 1
    %p176 = por %p174, %p175
    %p177 = scmp.ne.s32.totalorder %s168, %s169
    %p178 = scmp.eq.s32.totalorder %s32, 0
    %p179 = por %p177, %p178
    %p180 = scmp.ne.s32.totalorder %s168, %s169
    %p181 = scmp.eq.s32.totalorder %s33, 1
    %p182 = por %p180, %p181
    %p184 = scmp.ne.s32.totalorder %s169, %s183
    %p185 = scmp.eq.s32.totalorder %s33, 0
    %p186 = por %p184, %p185
    %s188 = sadd.s32 %s187, 1
    %p191 = scmp.eq.s32.totalorder %s27, 1
    %p192 = scmp.ne.s32.totalorder %s187, %s189
    %p193 = scmp.eq.s32.totalorder %s27, 0
    %p194 = por %p192, %p193
    %p195 = scmp.ne.s32.totalorder %s187, %s189
    %p196 = scmp.eq.s32.totalorder %s32, 1
    %p197 = por %p195, %p196
    %p198 = scmp.ne.s32.totalorder %s189, %s190
    %p199 = scmp.eq.s32.totalorder %s32, 0
    %p200 = por %p198, %p199
    %p201 = scmp.ne.s32.totalorder %s189, %s190
    %p202 = scmp.eq.s32.totalorder %s33, 1
    %p203 = por %p201, %p202
    %p205 = scmp.ne.s32.totalorder %s190, %s204
    %p206 = scmp.eq.s32.totalorder %s33, 0
    %p207 = por %p205, %p206
    %s209 = sadd.s32 %s208, 1
    %p212 = scmp.eq.s32.totalorder %s27, 1
    %p213 = scmp.ne.s32.totalorder %s208, %s210
    %p214 = scmp.eq.s32.totalorder %s27, 0
    %p215 = por %p213, %p214
    %p216 = scmp.ne.s32.totalorder %s208, %s210
    %p217 = scmp.eq.s32.totalorder %s32, 1
    %p218 = por %p216, %p217
    %p219 = scmp.ne.s32.totalorder %s210, %s211
    %p220 = scmp.eq.s32.totalorder %s32, 0
    %p221 = por %p219, %p220
    %p222 = scmp.ne.s32.totalorder %s210, %s211
    %p223 = scmp.eq.s32.totalorder %s33, 1
    %p224 = por %p222, %p223
    %p226 = scmp.ne.s32.totalorder %s211, %s225
    %p227 = scmp.eq.s32.totalorder %s33, 0
    %p228 = por %p226, %p227
    %s230 = sadd.s32 %s229, 1
    %p233 = scmp.eq.s32.totalorder %s27, 1
    %p234 = scmp.ne.s32.totalorder %s229, %s231
    %p235 = scmp.eq.s32.totalorder %s27, 0
    %p236 = por %p234, %p235
    %p237 = scmp.ne.s32.totalorder %s229, %s231
    %p238 = scmp.eq.s32.totalorder %s32, 1
    %p239 = por %p237, %p238
    %p240 = scmp.ne.s32.totalorder %s231, %s232
    %p241 = scmp.eq.s32.totalorder %s32, 0
    %p242 = por %p240, %p241
    %p243 = scmp.ne.s32.totalorder %s231, %s232
    %p244 = scmp.eq.s32.totalorder %s33, 1
    %p245 = por %p243, %p244
    %p247 = scmp.ne.s32.totalorder %s232, %s246
    %p248 = scmp.eq.s32.totalorder %s33, 0
    %p249 = por %p247, %p248
    %s251 = sadd.s32 %s250, 1
    %p254 = scmp.eq.s32.totalorder %s27, 1
    %p255 = scmp.ne.s32.totalorder %s250, %s252
    %p256 = scmp.eq.s32.totalorder %s27, 0
    %p257 = por %p255, %p256
    %p258 = scmp.ne.s32.totalorder %s250, %s252
    %p259 = scmp.eq.s32.totalorder %s32, 1
    %p260 = por %p258, %p259
    %p261 = scmp.ne.s32.totalorder %s252, %s253
    %p262 = scmp.eq.s32.totalorder %s32, 0
    %p263 = por %p261, %p262
    %p264 = scmp.ne.s32.totalorder %s252, %s253
    %p265 = scmp.eq.s32.totalorder %s33, 1
    %p266 = por %p264, %p265
    %p268 = scmp.ne.s32.totalorder %s253, %s267
    %p269 = scmp.eq.s32.totalorder %s33, 0
    %p270 = por %p268, %p269
    %s272 = sadd.s32 %s271, 1
    %p275 = scmp.eq.s32.totalorder %s27, 1
    %p276 = scmp.ne.s32.totalorder %s271, %s273
    %p277 = scmp.eq.s32.totalorder %s27, 0
    %p278 = por %p276, %p277
    %p279 = scmp.ne.s32.totalorder %s271, %s273
    %p280 = scmp.eq.s32.totalorder %s32, 1
    %p281 = por %p279, %p280
    %p282 = scmp.ne.s32.totalorder %s273, %s274
    %p283 = scmp.eq.s32.totalorder %s32, 0
    %p284 = por %p282, %p283
    %p285 = scmp.ne.s32.totalorder %s273, %s274
    %p286 = scmp.eq.s32.totalorder %s33, 1
    %p287 = por %p285, %p286
    %p289 = scmp.ne.s32.totalorder %s274, %s288
    %p290 = scmp.eq.s32.totalorder %s33, 0
    %p291 = por %p289, %p290
    %s293 = sadd.s32 %s292, 1
    %p296 = scmp.eq.s32.totalorder %s27, 1
    %p297 = scmp.ne.s32.totalorder %s292, %s294
    %p298 = scmp.eq.s32.totalorder %s27, 0
    %p299 = por %p297, %p298
    %p300 = scmp.ne.s32.totalorder %s292, %s294
    %p301 = scmp.eq.s32.totalorder %s32, 1
    %p302 = por %p300, %p301
    %p303 = scmp.ne.s32.totalorder %s294, %s295
    %p304 = scmp.eq.s32.totalorder %s32, 0
    %p305 = por %p303, %p304
    %p306 = scmp.ne.s32.totalorder %s294, %s295
    %p307 = scmp.eq.s32.totalorder %s33, 1
    %p308 = por %p306, %p307
    %p310 = scmp.ne.s32.totalorder %s295, %s309
    %p311 = scmp.eq.s32.totalorder %s33, 0
    %p312 = por %p310, %p311
    %s314 = sadd.s32 %s313, 1
    %p317 = scmp.eq.s32.totalorder %s27, 1
    %p318 = scmp.ne.s32.totalorder %s313, %s315
    %p319 = scmp.eq.s32.totalorder %s27, 0
    %p320 = por %p318, %p319
    %p321 = scmp.ne.s32.totalorder %s313, %s315
    %p322 = scmp.eq.s32.totalorder %s32, 1
    %p323 = por %p321, %p322
    %p324 = scmp.ne.s32.totalorder %s315, %s316
    %p325 = scmp.eq.s32.totalorder %s32, 0
    %p326 = por %p324, %p325
    %p327 = scmp.ne.s32.totalorder %s315, %s316
    %p328 = scmp.eq.s32.totalorder %s33, 1
    %p329 = por %p327, %p328
    %p331 = scmp.ne.s32.totalorder %s316, %s330
    %p332 = scmp.eq.s32.totalorder %s33, 0
    %p333 = por %p331, %p332
    %s335 = sadd.s32 %s334, 1
    %p338 = scmp.eq.s32.totalorder %s27, 1
    %p339 = scmp.ne.s32.totalorder %s334, %s336
    %p340 = scmp.eq.s32.totalorder %s27, 0
    %p341 = por %p339, %p340
    %p342 = scmp.ne.s32.totalorder %s334, %s336
    %p343 = scmp.eq.s32.totalorder %s32, 1
    %p344 = por %p342, %p343
    %p345 = scmp.ne.s32.totalorder %s336, %s337
    %p346 = scmp.eq.s32.totalorder %s32, 0
    %p347 = por %p345, %p346
    %p348 = scmp.ne.s32.totalorder %s336, %s337
    %p349 = scmp.eq.s32.totalorder %s33, 1
    %p350 = por %p348, %p349
    %p352 = scmp.ne.s32.totalorder %s337, %s351
    %p353 = scmp.eq.s32.totalorder %s33, 0
    %p354 = por %p352, %p353
    %s356 = sadd.s32 %s355, 1
    %p359 = scmp.eq.s32.totalorder %s27, 1
    %p360 = scmp.ne.s32.totalorder %s355, %s357
    %p361 = scmp.eq.s32.totalorder %s27, 0
    %p362 = por %p360, %p361
    %p363 = scmp.ne.s32.totalorder %s355, %s357
    %p364 = scmp.eq.s32.totalorder %s32, 1
    %p365 = por %p363, %p364
    %p366 = scmp.ne.s32.totalorder %s357, %s358
    %p367 = scmp.eq.s32.totalorder %s32, 0
    %p368 = por %p366, %p367
    %p369 = scmp.ne.s32.totalorder %s357, %s358
    %p370 = scmp.eq.s32.totalorder %s33, 1
    %p371 = por %p369, %p370
    %p373 = scmp.ne.s32.totalorder %s358, %s372
    %p374 = scmp.eq.s32.totalorder %s33, 0
    %p375 = por %p373, %p374
    %s377 = sadd.s32 %s376, 1
    %p380 = scmp.eq.s32.totalorder %s27, 1
    %p381 = scmp.ne.s32.totalorder %s376, %s378
    %p382 = scmp.eq.s32.totalorder %s27, 0
    %p383 = por %p381, %p382
    %p384 = scmp.ne.s32.totalorder %s376, %s378
    %p385 = scmp.eq.s32.totalorder %s32, 1
    %p386 = por %p384, %p385
    %p387 = scmp.ne.s32.totalorder %s378, %s379
    %p388 = scmp.eq.s32.totalorder %s32, 0
    %p389 = por %p387, %p388
    %p390 = scmp.ne.s32.totalorder %s378, %s379
    %p391 = scmp.eq.s32.totalorder %s33, 1
    %p392 = por %p390, %p391
    %p394 = scmp.ne.s32.totalorder %s379, %s393
    %p395 = scmp.eq.s32.totalorder %s33, 0
    %p396 = por %p394, %p395
    %s398 = sadd.s32 %s397, 1
    %p401 = scmp.eq.s32.totalorder %s27, 1
    %p402 = scmp.ne.s32.totalorder %s397, %s399
    %p403 = scmp.eq.s32.totalorder %s27, 0
    %p404 = por %p402, %p403
    %p405 = scmp.ne.s32.totalorder %s397, %s399
    %p406 = scmp.eq.s32.totalorder %s32, 1
    %p407 = por %p405, %p406
    %p408 = scmp.ne.s32.totalorder %s399, %s400
    %p409 = scmp.eq.s32.totalorder %s32, 0
    %p410 = por %p408, %p409
    %p411 = scmp.ne.s32.totalorder %s399, %s400
    %p412 = scmp.eq.s32.totalorder %s33, 1
    %p413 = por %p411, %p412
    %p415 = scmp.ne.s32.totalorder %s400, %s414
    %p416 = scmp.eq.s32.totalorder %s33, 0
    %p417 = por %p415, %p416
    %s419 = sadd.s32 %s418, 1
    %p422 = scmp.eq.s32.totalorder %s27, 1
    %p423 = scmp.ne.s32.totalorder %s418, %s420
    %p424 = scmp.eq.s32.totalorder %s27, 0
    %p425 = por %p423, %p424
    %p426 = scmp.ne.s32.totalorder %s418, %s420
    %p427 = scmp.eq.s32.totalorder %s32, 1
    %p428 = por %p426, %p427
    %p429 = scmp.ne.s32.totalorder %s420, %s421
    %p430 = scmp.eq.s32.totalorder %s32, 0
    %p431 = por %p429, %p430
    %p432 = scmp.ne.s32.totalorder %s420, %s421
    %p433 = scmp.eq.s32.totalorder %s33, 1
    %p434 = por %p432, %p433
    %p436 = scmp.ne.s32.totalorder %s421, %s435
    %p437 = scmp.eq.s32.totalorder %s33, 0
    %p438 = por %p436, %p437
    %s440 = sadd.s32 %s439, 1
    %p443 = scmp.eq.s32.totalorder %s27, 1
    %p444 = scmp.ne.s32.totalorder %s439, %s441
    %p445 = scmp.eq.s32.totalorder %s27, 0
    %p446 = por %p444, %p445
    %p447 = scmp.ne.s32.totalorder %s439, %s441
    %p448 = scmp.eq.s32.totalorder %s32, 1
    %p449 = por %p447, %p448
    %p450 = scmp.ne.s32.totalorder %s441, %s442
    %p451 = scmp.eq.s32.totalorder %s32, 0
    %p452 = por %p450, %p451
    %p453 = scmp.ne.s32.totalorder %s441, %s442
    %p454 = scmp.eq.s32.totalorder %s33, 1
    %p455 = por %p453, %p454
    %p457 = scmp.ne.s32.totalorder %s442, %s456
    %p458 = scmp.eq.s32.totalorder %s33, 0
    %p459 = por %p457, %p458
    %s461 = sadd.s32 %s460, 1
    %p464 = scmp.eq.s32.totalorder %s27, 1
    %p465 = scmp.ne.s32.totalorder %s460, %s462
    %p466 = scmp.eq.s32.totalorder %s27, 0
    %p467 = por %p465, %p466
    %p468 = scmp.ne.s32.totalorder %s460, %s462
    %p469 = scmp.eq.s32.totalorder %s32, 1
    %p470 = por %p468, %p469
    %p471 = scmp.ne.s32.totalorder %s462, %s463
    %p472 = scmp.eq.s32.totalorder %s32, 0
    %p473 = por %p471, %p472
    %p474 = scmp.ne.s32.totalorder %s462, %s463
    %p475 = scmp.eq.s32.totalorder %s33, 1
    %p476 = por %p474, %p475
    %p478 = scmp.ne.s32.totalorder %s463, %s477
    %p479 = scmp.eq.s32.totalorder %s33, 0
    %p480 = por %p478, %p479
    %s481 = ssub.s32 %s27, %s34
    %p482 = scmp.eq.s32.totalorder %s481, 0
    %s484 = sadd.s32 %s483, 1
    %s485 = scalar_select %p482, %s483, %s484
    %p488 = pneg %p482
    %p489 = scmp.eq.s32.totalorder %s27, 1
    %p490 = por %p488, %p489
    %p491 = scmp.ne.s32.totalorder %s483, %s486
    %p492 = scmp.eq.s32.totalorder %s27, 0
    %p493 = por %p491, %p492
    %p494 = scmp.ne.s32.totalorder %s483, %s486
    %p495 = scmp.eq.s32.totalorder %s32, 1
    %p496 = por %p494, %p495
    %p497 = scmp.ne.s32.totalorder %s486, %s487
    %p498 = scmp.eq.s32.totalorder %s32, 0
    %p499 = por %p497, %p498
    %p500 = scmp.ne.s32.totalorder %s486, %s487
    %p501 = scmp.eq.s32.totalorder %s33, 1
    %p502 = por %p500, %p501
    %p504 = scmp.ne.s32.totalorder %s487, %s503
    %p505 = scmp.eq.s32.totalorder %s33, 0
    %p506 = por %p504, %p505
    %p507 = scmp.le.s32.totalorder 1, %s27
    %p508 = scmp.lt.s32.totalorder %s27, 3
    %p509 = pnand %p507, %p508
    %p510 = pneg %p509
    // Predicated region
    $region9: #{transformer_forward.1} parent=5 // pred_check
      _
    $region10: #{transformer_forward.1} parent=5 // pred_check_branch
      %512 = sbr.rel (%p509) target = $region12
    $region11: #{transformer_forward.1} parent=5 // pred_region
      %s513 = ssub.s32 %s27, 1
      // Predicated region
      $region13: #{transformer_forward.1} parent=11 // pred_check
        %p514 = pneg %p74
      $region14: #{transformer_forward.1} parent=11 // pred_check_branch
        %516 = sbr.rel (%p514) target = $region16
      $region15: #{transformer_forward.1} parent=11 // pred_region
        _
      $region16: #{transformer_forward.1} parent=11 // pred_fallthru
        _
      // Predicated region
      $region17: #{transformer_forward.1} parent=11 // pred_check
        %p517 = pneg %p95
      $region18: #{transformer_forward.1} parent=11 // pred_check_branch
        %519 = sbr.rel (%p517) target = $region20
      $region19: #{transformer_forward.1} parent=11 // pred_region
        _
      $region20: #{transformer_forward.1} parent=11 // pred_fallthru
        _
      // Predicated region
      $region21: #{transformer_forward.1} parent=11 // pred_check
        %p520 = pneg %p116
      $region22: #{transformer_forward.1} parent=11 // pred_check_branch
        %522 = sbr.rel (%p520) target = $region24
      $region23: #{transformer_forward.1} parent=11 // pred_region
        _
      $region24: #{transformer_forward.1} parent=11 // pred_fallthru
        _
      // Predicated region
      $region25: #{transformer_forward.1} parent=11 // pred_check
        %p523 = pneg %p137
      $region26: #{transformer_forward.1} parent=11 // pred_check_branch
        %525 = sbr.rel (%p523) target = $region28
      $region27: #{transformer_forward.1} parent=11 // pred_region
        _
      $region28: #{transformer_forward.1} parent=11 // pred_fallthru
        _
      // Predicated region
      $region29: #{transformer_forward.1} parent=11 // pred_check
        %p526 = pneg %p158
      $region30: #{transformer_forward.1} parent=11 // pred_check_branch
        %528 = sbr.rel (%p526) target = $region32
      $region31: #{transformer_forward.1} parent=11 // pred_region
        _
      $region32: #{transformer_forward.1} parent=11 // pred_fallthru
        _
      // Predicated region
      $region33: #{transformer_forward.1} parent=11 // pred_check
        %p529 = pneg %p179
      $region34: #{transformer_forward.1} parent=11 // pred_check_branch
        %531 = sbr.rel (%p529) target = $region36
      $region35: #{transformer_forward.1} parent=11 // pred_region
        _
      $region36: #{transformer_forward.1} parent=11 // pred_fallthru
        _
      // Predicated region
      $region37: #{transformer_forward.1} parent=11 // pred_check
        %p532 = pneg %p200
      $region38: #{transformer_forward.1} parent=11 // pred_check_branch
        %534 = sbr.rel (%p532) target = $region40
      $region39: #{transformer_forward.1} parent=11 // pred_region
        _
      $region40: #{transformer_forward.1} parent=11 // pred_fallthru
        _
      // Predicated region
      $region41: #{transformer_forward.1} parent=11 // pred_check
        %p535 = pneg %p221
      $region42: #{transformer_forward.1} parent=11 // pred_check_branch
        %537 = sbr.rel (%p535) target = $region44
      $region43: #{transformer_forward.1} parent=11 // pred_region
        _
      $region44: #{transformer_forward.1} parent=11 // pred_fallthru
        _
      // Predicated region
      $region45: #{transformer_forward.1} parent=11 // pred_check
        %p538 = pneg %p242
      $region46: #{transformer_forward.1} parent=11 // pred_check_branch
        %540 = sbr.rel (%p538) target = $region48
      $region47: #{transformer_forward.1} parent=11 // pred_region
        _
      $region48: #{transformer_forward.1} parent=11 // pred_fallthru
        _
      // Predicated region
      $region49: #{transformer_forward.1} parent=11 // pred_check
        %p541 = pneg %p263
      $region50: #{transformer_forward.1} parent=11 // pred_check_branch
        %543 = sbr.rel (%p541) target = $region52
      $region51: #{transformer_forward.1} parent=11 // pred_region
        _
      $region52: #{transformer_forward.1} parent=11 // pred_fallthru
        _
      // Predicated region
      $region53: #{transformer_forward.1} parent=11 // pred_check
        %p544 = pneg %p284
      $region54: #{transformer_forward.1} parent=11 // pred_check_branch
        %546 = sbr.rel (%p544) target = $region56
      $region55: #{transformer_forward.1} parent=11 // pred_region
        _
      $region56: #{transformer_forward.1} parent=11 // pred_fallthru
        _
      // Predicated region
      $region57: #{transformer_forward.1} parent=11 // pred_check
        %p547 = pneg %p305
      $region58: #{transformer_forward.1} parent=11 // pred_check_branch
        %549 = sbr.rel (%p547) target = $region60
      $region59: #{transformer_forward.1} parent=11 // pred_region
        _
      $region60: #{transformer_forward.1} parent=11 // pred_fallthru
        _
      // Predicated region
      $region61: #{transformer_forward.1} parent=11 // pred_check
        %p550 = pneg %p326
      $region62: #{transformer_forward.1} parent=11 // pred_check_branch
        %552 = sbr.rel (%p550) target = $region64
      $region63: #{transformer_forward.1} parent=11 // pred_region
        _
      $region64: #{transformer_forward.1} parent=11 // pred_fallthru
        _
      // Predicated region
      $region65: #{transformer_forward.1} parent=11 // pred_check
        %p553 = pneg %p347
      $region66: #{transformer_forward.1} parent=11 // pred_check_branch
        %555 = sbr.rel (%p553) target = $region68
      $region67: #{transformer_forward.1} parent=11 // pred_region
        _
      $region68: #{transformer_forward.1} parent=11 // pred_fallthru
        _
      // Predicated region
      $region69: #{transformer_forward.1} parent=11 // pred_check
        %p556 = pneg %p368
      $region70: #{transformer_forward.1} parent=11 // pred_check_branch
        %558 = sbr.rel (%p556) target = $region72
      $region71: #{transformer_forward.1} parent=11 // pred_region
        _
      $region72: #{transformer_forward.1} parent=11 // pred_fallthru
        _
      // Predicated region
      $region73: #{transformer_forward.1} parent=11 // pred_check
        %p559 = pneg %p389
      $region74: #{transformer_forward.1} parent=11 // pred_check_branch
        %561 = sbr.rel (%p559) target = $region76
      $region75: #{transformer_forward.1} parent=11 // pred_region
        _
      $region76: #{transformer_forward.1} parent=11 // pred_fallthru
        _
      // Predicated region
      $region77: #{transformer_forward.1} parent=11 // pred_check
        %p562 = pneg %p410
      $region78: #{transformer_forward.1} parent=11 // pred_check_branch
        %564 = sbr.rel (%p562) target = $region80
      $region79: #{transformer_forward.1} parent=11 // pred_region
        _
      $region80: #{transformer_forward.1} parent=11 // pred_fallthru
        _
      // Predicated region
      $region81: #{transformer_forward.1} parent=11 // pred_check
        %p565 = pneg %p431
      $region82: #{transformer_forward.1} parent=11 // pred_check_branch
        %567 = sbr.rel (%p565) target = $region84
      $region83: #{transformer_forward.1} parent=11 // pred_region
        _
      $region84: #{transformer_forward.1} parent=11 // pred_fallthru
        _
      // Predicated region
      $region85: #{transformer_forward.1} parent=11 // pred_check
        %p568 = pneg %p452
      $region86: #{transformer_forward.1} parent=11 // pred_check_branch
        %570 = sbr.rel (%p568) target = $region88
      $region87: #{transformer_forward.1} parent=11 // pred_region
        _
      $region88: #{transformer_forward.1} parent=11 // pred_fallthru
        _
      // Predicated region
      $region89: #{transformer_forward.1} parent=11 // pred_check
        %p571 = pneg %p473
      $region90: #{transformer_forward.1} parent=11 // pred_check_branch
        %573 = sbr.rel (%p571) target = $region92
      $region91: #{transformer_forward.1} parent=11 // pred_region
        _
      $region92: #{transformer_forward.1} parent=11 // pred_fallthru
        _
    $region12: #{transformer_forward.1} parent=5 // pred_fallthru
      _
    %p574 = scmp.lt.s32.totalorder %s27, 2
    // Predicated region
    $region93: #{transformer_forward.1} parent=5 // pred_check
      %p575 = pneg %p574
    $region94: #{transformer_forward.1} parent=5 // pred_check_branch
      %577 = sbr.rel (%p575) target = $region96
    $region95: #{transformer_forward.1} parent=5 // pred_region
      // Predicated region
      $region97: #{transformer_forward.1} parent=95 // pred_check
        %p578 = pneg %p47
      $region98: #{transformer_forward.1} parent=95 // pred_check_branch
        %580 = sbr.rel (%p578) target = $region100
      $region99: #{transformer_forward.1} parent=95 // pred_region
        %p581 = scmp.lt.s32.totalorder %s27, 1
        %s582 = scalar_select %p581, %s27, 1
        %s583 = smul.addr %s582, 8
        %s584 = scalar_lea.vmem %s0, %s583
      $region100: #{transformer_forward.1} parent=95 // pred_fallthru
        _
    $region96: #{transformer_forward.1} parent=5 // pred_fallthru
      _
    %p585 = scmp.le.s32.totalorder 1, %s27
    %p586 = scmp.lt.s32.totalorder %s27, 3
    %p587 = pnand %p585, %p586
    %p588 = pneg %p587
    // Predicated region
    $region101: #{transformer_forward.1} parent=5 // pred_check
      _
    $region102: #{transformer_forward.1} parent=5 // pred_check_branch
      %590 = sbr.rel (%p587) target = $region104
    $region103: #{transformer_forward.1} parent=5 // pred_region
      %s591 = ssub.s32 %s27, 1
      %p592 = scmp.lt.s32.totalorder %s32, 1
      %s593 = scalar_select %p592, %s32, 1
      %s594 = smul.addr %s593, 8
      %s595 = scalar_lea.vmem %s0, %s594
      %p596 = pneg %p53
      %p597 = pneg %p50
      %p598 = pneg %p74
      %p599 = pneg %p71
      %p600 = pneg %p95
      %p601 = pneg %p92
      %p602 = pneg %p116
      %p603 = pneg %p113
      %p604 = pneg %p137
      %p605 = pneg %p134
      %p606 = pneg %p158
      %p607 = pneg %p155
      %p608 = pneg %p179
      %p609 = pneg %p176
      %p610 = pneg %p200
      %p611 = pneg %p197
      %p612 = pneg %p221
      %p613 = pneg %p218
      %p614 = pneg %p242
      %p615 = pneg %p239
      %p616 = pneg %p263
      %p617 = pneg %p260
      %p618 = pneg %p284
      %p619 = pneg %p281
      %p620 = pneg %p305
      %p621 = pneg %p302
      %p622 = pneg %p326
      %p623 = pneg %p323
      %p624 = pneg %p347
      %p625 = pneg %p344
      %p626 = pneg %p368
      %p627 = pneg %p365
      %p628 = pneg %p389
      %p629 = pneg %p386
      %p630 = pneg %p410
      %p631 = pneg %p407
      %p632 = pneg %p431
      %p633 = pneg %p428
      %p634 = pneg %p452
      %p635 = pneg %p449
      %p636 = pneg %p473
      %p637 = pneg %p470
      %p638 = pneg %p499
      %p639 = pneg %p496
      %p640 = scmp.lt.s32.totalorder %s32, 1
      %s641 = scalar_select %p640, %s32, 1
      %s642 = smul.addr %s641, 8
      %s643 = scalar_lea.vmem %s21, %s642
      %p644 = scmp.lt.s32.totalorder %s32, 1
      %s645 = scalar_select %p644, %s32, 1
      %s646 = smul.addr %s645, 8
      %s647 = scalar_lea.vmem %s0, %s646
      %p648 = scmp.lt.s32.totalorder %s32, 1
      %s649 = scalar_select %p648, %s32, 1
      %s650 = smul.addr %s649, 8
      %s651 = scalar_lea.vmem %s21, %s650
      %v653 = vld [vmem:[%s647] sm:$0xff]
      %v654 = vld [vmem:[%s1] sm:$0xf]
      %v655 = vld [vmem:[%s1 + $0x4] sm:$0xf]
      %v656 = vld [vmem:[%s1 + $0x8] sm:$0xf]
      %v657 = vld [vmem:[%s1 + $0xc] sm:$0xf]
      %v658 = vpack.c.bf16 %v653, %v653
      %v659 = vld [vmem:[%s2] sm:$0x1]
      %v661 = vperm.slane %v659, 0
      %v667 = vunpack.c.l.b16 %v654
      %v668 = vunpack.c.l.b16 %v655
      %v669 = vunpack.c.l.b16 %v656
      %v670 = vunpack.c.l.b16 %v657
      %v671 = vpack.c.b16 %v668, %v667
      %v672 = vpack.c.b16 %v670, %v669
      %vm673 = vcmask 130048
      %v675 = vsel %vm673, %v658, 0
      %v678 = vsel %vm673, %v671, 0
      %v681 = vsel %vm673, %v672, 0
      %683 = vmatpush.bf16.xpose.msra.mxu0 0
      %684 = vmatpush.bf16.xpose.msra.mxu0 0
      %685 = vmatpush.bf16.xpose.msra.mxu0 0
      %686 = vmatpush.bf16.xpose.msra.mxu0 0
      %687 = vmatpush.bf16.xpose.msra.mxu0 0
      %688 = vmatpush.bf16.xpose.msra.mxu0 0
      %689 = vmatpush.bf16.xpose.msra.mxu0 %v681
      %690 = vmatpush.bf16.xpose.msra.mxu0 %v678
      %691 = vmatmul.bf16.gmra.mxu0 %v675
      %v692 = vpop.f32.mrf.mxu0
      %v693 = vadd.f32 %v661, %v692
      %v694 = vpop.f32.mrf.mxu0
      %695 = vdwg.mxu0
      %v696 = vld [vmem:[%s3] sm:$0x1]
      %v697 = vld [vmem:[%s4] sm:$0x1]
      %vm698 = vcmask 261120
      %v699 = vsel %vm698, %v693, 0.0
      %700 = vadd.xlane.f32.xlu0 %v699
      %v701 = vpop.xlane.xlu0 %700
      %v702 = vrcp.pop 32.0
      %v703 = vmul.f32 32.0, %v702
      %v704 = vsub.f32 1.0, %v703
      %v705 = vmul.f32 %v702, %v704
      %v706 = vadd.f32 %v702, %v705
      %vm707 = vweird.f32 %v702
      %v708 = vsel %vm707, %v702, %v706
      %v709 = vmul.f32 %v701, %v708
      %v710 = vsub.f32 %v693, %v709
      %v711 = vmul.f32 %v710, %v710
      %v712 = vsel %vm698, %v711, 0.0
      %713 = vadd.xlane.f32.xlu0 %v712
      %v714 = vpop.xlane.xlu0 %713
      %v715 = vmul.f32 %v714, %v708
      %v716 = vadd.f32 %v715, 1e-05
      %v717 = vrsqrt.pop %v716
      %v718 = vmul.f32 %v717, %v716
      %v719 = vmul.f32 %v718, %v717
      %v720 = vmul.f32 0.5, %v719
      %v721 = vsub.f32 1.5, %v720
      %v722 = vmul.f32 %v717, %v721
      %vm723 = vweird.f32 %v716
      %vm724 = vweird.f32 %v717
      %vm725 = vmor %vm723, %vm724
      %v726 = vsel %vm725, %v717, %v722
      %v727 = vmul.f32 %v710, %v726
      %v729 = vperm.slane %v696, 0
      %v731 = vmul.f32 %v727, %v729
      %v733 = vperm.slane %v697, 0
      %v735 = vadd.f32 %v731, %v733
      %v736 = vpack.c.bf16 %v735, %v735
      %v737 = vld [vmem:[%s5] sm:$0xf]
      %v738 = vld [vmem:[%s5 + $0x4] sm:$0xf]
      %v739 = vld [vmem:[%s5 + $0x8] sm:$0xf]
      %v740 = vld [vmem:[%s5 + $0xc] sm:$0xf]
      %v741 = vld [vmem:[%s6] sm:$0x1]
      %v742 = vld [vmem:[%s6 + $0x1] sm:$0x1]
      %v743 = vld [vmem:[%s6 + $0x2] sm:$0x1]
      %v744 = vld [vmem:[%s6 + $0x3] sm:$0x1]
      %v749 = vperm.slane %v741, 0
      %v750 = vperm.slane %v742, 0
      %v751 = vperm.slane %v743, 0
      %v752 = vperm.slane %v744, 0
      %v758 = vsel %vm698, %v736, 0
      %v761 = vsel %vm698, %v737, 0
      %763 = vmatpush.bf16.xpose.msra.mxu0 0
      %764 = vmatpush.bf16.xpose.msra.mxu0 0
      %765 = vmatpush.bf16.xpose.msra.mxu0 0
      %766 = vmatpush.bf16.xpose.msra.mxu0 0
      %767 = vmatpush.bf16.xpose.msra.mxu0 0
      %768 = vmatpush.bf16.xpose.msra.mxu0 0
      %769 = vmatpush.bf16.xpose.msra.mxu0 0
      %770 = vmatpush.bf16.xpose.msra.mxu0 %v761
      %771 = vmatmul.bf16.gmra.mxu0 %v758
      %v772 = vpop.f32.mrf.mxu0
      %v773 = vadd.f32 %v749, %v772
      %v774 = vpop.f32.mrf.mxu0
      %775 = vdwg.mxu0
      %v777 = vsel %vm698, %v738, 0
      %779 = vmatpush.bf16.xpose.msra.mxu0 0
      %780 = vmatpush.bf16.xpose.msra.mxu0 0
      %781 = vmatpush.bf16.xpose.msra.mxu0 0
      %782 = vmatpush.bf16.xpose.msra.mxu0 0
      %783 = vmatpush.bf16.xpose.msra.mxu0 0
      %784 = vmatpush.bf16.xpose.msra.mxu0 0
      %785 = vmatpush.bf16.xpose.msra.mxu0 0
      %786 = vmatpush.bf16.xpose.msra.mxu0 %v777
      %787 = vmatmul.bf16.gmra.mxu0 %v758
      %v788 = vpop.f32.mrf.mxu0
      %v789 = vadd.f32 %v750, %v788
      %v790 = vpop.f32.mrf.mxu0
      %791 = vdwg.mxu0
      %v793 = vsel %vm698, %v739, 0
      %795 = vmatpush.bf16.xpose.msra.mxu0 0
      %796 = vmatpush.bf16.xpose.msra.mxu0 0
      %797 = vmatpush.bf16.xpose.msra.mxu0 0
      %798 = vmatpush.bf16.xpose.msra.mxu0 0
      %799 = vmatpush.bf16.xpose.msra.mxu0 0
      %800 = vmatpush.bf16.xpose.msra.mxu0 0
      %801 = vmatpush.bf16.xpose.msra.mxu0 0
      %802 = vmatpush.bf16.xpose.msra.mxu0 %v793
      %803 = vmatmul.bf16.gmra.mxu0 %v758
      %v804 = vpop.f32.mrf.mxu0
      %v805 = vadd.f32 %v751, %v804
      %v806 = vpop.f32.mrf.mxu0
      %807 = vdwg.mxu0
      %v809 = vsel %vm698, %v740, 0
      %811 = vmatpush.bf16.xpose.msra.mxu0 0
      %812 = vmatpush.bf16.xpose.msra.mxu0 0
      %813 = vmatpush.bf16.xpose.msra.mxu0 0
      %814 = vmatpush.bf16.xpose.msra.mxu0 0
      %815 = vmatpush.bf16.xpose.msra.mxu0 0
      %816 = vmatpush.bf16.xpose.msra.mxu0 0
      %817 = vmatpush.bf16.xpose.msra.mxu0 0
      %818 = vmatpush.bf16.xpose.msra.mxu0 %v809
      %819 = vmatmul.bf16.gmra.mxu0 %v758
      %v820 = vpop.f32.mrf.mxu0
      %v821 = vadd.f32 %v752, %v820
      %v822 = vpop.f32.mrf.mxu0
      %823 = vdwg.mxu0
      %v824 = vld [vmem:[%s7] sm:$0xf]
      %v825 = vld [vmem:[%s7 + $0x4] sm:$0xf]
      %v826 = vld [vmem:[%s7 + $0x8] sm:$0xf]
      %v827 = vld [vmem:[%s7 + $0xc] sm:$0xf]
      %v828 = vld [vmem:[%s8] sm:$0x1]
      %v829 = vld [vmem:[%s8 + $0x1] sm:$0x1]
      %v830 = vld [vmem:[%s8 + $0x2] sm:$0x1]
      %v831 = vld [vmem:[%s8 + $0x3] sm:$0x1]
      %v836 = vperm.slane %v828, 0
      %v837 = vperm.slane %v829, 0
      %v838 = vperm.slane %v830, 0
      %v839 = vperm.slane %v831, 0
      %v845 = vsel %vm698, %v824, 0
      %847 = vmatpush.bf16.xpose.msra.mxu0 0
      %848 = vmatpush.bf16.xpose.msra.mxu0 0
      %849 = vmatpush.bf16.xpose.msra.mxu0 0
      %850 = vmatpush.bf16.xpose.msra.mxu0 0
      %851 = vmatpush.bf16.xpose.msra.mxu0 0
      %852 = vmatpush.bf16.xpose.msra.mxu0 0
      %853 = vmatpush.bf16.xpose.msra.mxu0 0
      %854 = vmatpush.bf16.xpose.msra.mxu0 %v845
      %855 = vmatmul.bf16.gmra.mxu0 %v758
      %v856 = vpop.f32.mrf.mxu0
      %v857 = vadd.f32 %v836, %v856
      %v858 = vpop.f32.mrf.mxu0
      %859 = vdwg.mxu0
      %v861 = vsel %vm698, %v825, 0
      %863 = vmatpush.bf16.xpose.msra.mxu0 0
      %864 = vmatpush.bf16.xpose.msra.mxu0 0
      %865 = vmatpush.bf16.xpose.msra.mxu0 0
      %866 = vmatpush.bf16.xpose.msra.mxu0 0
      %867 = vmatpush.bf16.xpose.msra.mxu0 0
      %868 = vmatpush.bf16.xpose.msra.mxu0 0
      %869 = vmatpush.bf16.xpose.msra.mxu0 0
      %870 = vmatpush.bf16.xpose.msra.mxu0 %v861
      %871 = vmatmul.bf16.gmra.mxu0 %v758
      %v872 = vpop.f32.mrf.mxu0
      %v873 = vadd.f32 %v837, %v872
      %v874 = vpop.f32.mrf.mxu0
      %875 = vdwg.mxu0
      %v877 = vsel %vm698, %v826, 0
      %879 = vmatpush.bf16.xpose.msra.mxu0 0
      %880 = vmatpush.bf16.xpose.msra.mxu0 0
      %881 = vmatpush.bf16.xpose.msra.mxu0 0
      %882 = vmatpush.bf16.xpose.msra.mxu0 0
      %883 = vmatpush.bf16.xpose.msra.mxu0 0
      %884 = vmatpush.bf16.xpose.msra.mxu0 0
      %885 = vmatpush.bf16.xpose.msra.mxu0 0
      %886 = vmatpush.bf16.xpose.msra.mxu0 %v877
      %887 = vmatmul.bf16.gmra.mxu0 %v758
      %v888 = vpop.f32.mrf.mxu0
      %v889 = vadd.f32 %v838, %v888
      %v890 = vpop.f32.mrf.mxu0
      %891 = vdwg.mxu0
      %v893 = vsel %vm698, %v827, 0
      %895 = vmatpush.bf16.xpose.msra.mxu0 0
      %896 = vmatpush.bf16.xpose.msra.mxu0 0
      %897 = vmatpush.bf16.xpose.msra.mxu0 0
      %898 = vmatpush.bf16.xpose.msra.mxu0 0
      %899 = vmatpush.bf16.xpose.msra.mxu0 0
      %900 = vmatpush.bf16.xpose.msra.mxu0 0
      %901 = vmatpush.bf16.xpose.msra.mxu0 0
      %902 = vmatpush.bf16.xpose.msra.mxu0 %v893
      %903 = vmatmul.bf16.gmra.mxu0 %v758
      %v904 = vpop.f32.mrf.mxu0
      %v905 = vadd.f32 %v839, %v904
      %v906 = vpop.f32.mrf.mxu0
      %907 = vdwg.mxu0
      %v908 = vld [vmem:[%s9] sm:$0xf]
      %v909 = vld [vmem:[%s9 + $0x4] sm:$0xf]
      %v910 = vld [vmem:[%s9 + $0x8] sm:$0xf]
      %v911 = vld [vmem:[%s9 + $0xc] sm:$0xf]
      %v912 = vld [vmem:[%s10] sm:$0x1]
      %v913 = vld [vmem:[%s10 + $0x1] sm:$0x1]
      %v914 = vld [vmem:[%s10 + $0x2] sm:$0x1]
      %v915 = vld [vmem:[%s10 + $0x3] sm:$0x1]
      %v920 = vperm.slane %v912, 0
      %v921 = vperm.slane %v913, 0
      %v922 = vperm.slane %v914, 0
      %v923 = vperm.slane %v915, 0
      %v929 = vsel %vm698, %v908, 0
      %931 = vmatpush.bf16.xpose.msra.mxu0 0
      %932 = vmatpush.bf16.xpose.msra.mxu0 0
      %933 = vmatpush.bf16.xpose.msra.mxu0 0
      %934 = vmatpush.bf16.xpose.msra.mxu0 0
      %935 = vmatpush.bf16.xpose.msra.mxu0 0
      %936 = vmatpush.bf16.xpose.msra.mxu0 0
      %937 = vmatpush.bf16.xpose.msra.mxu0 0
      %938 = vmatpush.bf16.xpose.msra.mxu0 %v929
      %939 = vmatmul.bf16.gmra.mxu0 %v758
      %v940 = vpop.f32.mrf.mxu0
      %v941 = vadd.f32 %v920, %v940
      %v942 = vpop.f32.mrf.mxu0
      %943 = vdwg.mxu0
      %v945 = vsel %vm698, %v909, 0
      %947 = vmatpush.bf16.xpose.msra.mxu0 0
      %948 = vmatpush.bf16.xpose.msra.mxu0 0
      %949 = vmatpush.bf16.xpose.msra.mxu0 0
      %950 = vmatpush.bf16.xpose.msra.mxu0 0
      %951 = vmatpush.bf16.xpose.msra.mxu0 0
      %952 = vmatpush.bf16.xpose.msra.mxu0 0
      %953 = vmatpush.bf16.xpose.msra.mxu0 0
      %954 = vmatpush.bf16.xpose.msra.mxu0 %v945
      %955 = vmatmul.bf16.gmra.mxu0 %v758
      %v956 = vpop.f32.mrf.mxu0
      %v957 = vadd.f32 %v921, %v956
      %v958 = vpop.f32.mrf.mxu0
      %959 = vdwg.mxu0
      %v961 = vsel %vm698, %v910, 0
      %963 = vmatpush.bf16.xpose.msra.mxu0 0
      %964 = vmatpush.bf16.xpose.msra.mxu0 0
      %965 = vmatpush.bf16.xpose.msra.mxu0 0
      %966 = vmatpush.bf16.xpose.msra.mxu0 0
      %967 = vmatpush.bf16.xpose.msra.mxu0 0
      %968 = vmatpush.bf16.xpose.msra.mxu0 0
      %969 = vmatpush.bf16.xpose.msra.mxu0 0
      %970 = vmatpush.bf16.xpose.msra.mxu0 %v961
      %971 = vmatmul.bf16.gmra.mxu0 %v758
      %v972 = vpop.f32.mrf.mxu0
      %v973 = vadd.f32 %v922, %v972
      %v974 = vpop.f32.mrf.mxu0
      %975 = vdwg.mxu0
      %v977 = vsel %vm698, %v911, 0
      %979 = vmatpush.bf16.xpose.msra.mxu0 0
      %980 = vmatpush.bf16.xpose.msra.mxu0 0
      %981 = vmatpush.bf16.xpose.msra.mxu0 0
      %982 = vmatpush.bf16.xpose.msra.mxu0 0
      %983 = vmatpush.bf16.xpose.msra.mxu0 0
      %984 = vmatpush.bf16.xpose.msra.mxu0 0
      %985 = vmatpush.bf16.xpose.msra.mxu0 0
      %986 = vmatpush.bf16.xpose.msra.mxu0 %v977
      %987 = vmatmul.bf16.gmra.mxu0 %v758
      %v988 = vpop.f32.mrf.mxu0
      %v989 = vadd.f32 %v923, %v988
      %v990 = vpop.f32.mrf.mxu0
      %991 = vdwg.mxu0
      %v992 = vpack.c.bf16 %v773, %v773
      %v993 = vpack.c.bf16 %v789, %v789
      %v994 = vpack.c.bf16 %v805, %v805
      %v995 = vpack.c.bf16 %v821, %v821
      %v996 = vpack.c.bf16 %v857, %v857
      %v997 = vpack.c.bf16 %v873, %v873
      %v998 = vpack.c.bf16 %v889, %v889
      %v999 = vpack.c.bf16 %v905, %v905
      %vm1000 = vcmask 64512
      %v1002 = vsel %vm1000, %v992, 0
      %v1005 = vsel %vm1000, %v996, 0
      %1007 = vmatpush.bf16.xpose.msra.mxu0 0
      %1008 = vmatpush.bf16.xpose.msra.mxu0 0
      %1009 = vmatpush.bf16.xpose.msra.mxu0 0
      %1010 = vmatpush.bf16.xpose.msra.mxu0 0
      %1011 = vmatpush.bf16.xpose.msra.mxu0 0
      %1012 = vmatpush.bf16.xpose.msra.mxu0 0
      %1013 = vmatpush.bf16.xpose.msra.mxu0 0
      %1014 = vmatpush.bf16.xpose.msra.mxu0 %v1005
      %1015 = vmatmul.bf16.gmra.mxu0 %v1002
      %v1016 = vpop.f32.mrf.mxu0
      %v1017 = vadd.f32 0.0, %v1016
      %v1018 = vpop.f32.mrf.mxu0
      %1019 = vdwg.mxu0
      %v1021 = vsel %vm1000, %v993, 0
      %v1024 = vsel %vm1000, %v997, 0
      %1026 = vmatpush.bf16.xpose.msra.mxu0 0
      %1027 = vmatpush.bf16.xpose.msra.mxu0 0
      %1028 = vmatpush.bf16.xpose.msra.mxu0 0
      %1029 = vmatpush.bf16.xpose.msra.mxu0 0
      %1030 = vmatpush.bf16.xpose.msra.mxu0 0
      %1031 = vmatpush.bf16.xpose.msra.mxu0 0
      %1032 = vmatpush.bf16.xpose.msra.mxu0 0
      %1033 = vmatpush.bf16.xpose.msra.mxu0 %v1024
      %1034 = vmatmul.bf16.gmra.mxu0 %v1021
      %v1035 = vpop.f32.mrf.mxu0
      %v1036 = vadd.f32 0.0, %v1035
      %v1037 = vpop.f32.mrf.mxu0
      %1038 = vdwg.mxu0
      %v1040 = vsel %vm1000, %v994, 0
      %v1043 = vsel %vm1000, %v998, 0
      %1045 = vmatpush.bf16.xpose.msra.mxu0 0
      %1046 = vmatpush.bf16.xpose.msra.mxu0 0
      %1047 = vmatpush.bf16.xpose.msra.mxu0 0
      %1048 = vmatpush.bf16.xpose.msra.mxu0 0
      %1049 = vmatpush.bf16.xpose.msra.mxu0 0
      %1050 = vmatpush.bf16.xpose.msra.mxu0 0
      %1051 = vmatpush.bf16.xpose.msra.mxu0 0
      %1052 = vmatpush.bf16.xpose.msra.mxu0 %v1043
      %1053 = vmatmul.bf16.gmra.mxu0 %v1040
      %v1054 = vpop.f32.mrf.mxu0
      %v1055 = vadd.f32 0.0, %v1054
      %v1056 = vpop.f32.mrf.mxu0
      %1057 = vdwg.mxu0
      %v1059 = vsel %vm1000, %v995, 0
      %v1062 = vsel %vm1000, %v999, 0
      %1064 = vmatpush.bf16.xpose.msra.mxu0 0
      %1065 = vmatpush.bf16.xpose.msra.mxu0 0
      %1066 = vmatpush.bf16.xpose.msra.mxu0 0
      %1067 = vmatpush.bf16.xpose.msra.mxu0 0
      %1068 = vmatpush.bf16.xpose.msra.mxu0 0
      %1069 = vmatpush.bf16.xpose.msra.mxu0 0
      %1070 = vmatpush.bf16.xpose.msra.mxu0 0
      %1071 = vmatpush.bf16.xpose.msra.mxu0 %v1062
      %1072 = vmatmul.bf16.gmra.mxu0 %v1059
      %v1073 = vpop.f32.mrf.mxu0
      %v1074 = vadd.f32 0.0, %v1073
      %v1075 = vpop.f32.mrf.mxu0
      %1076 = vdwg.mxu0
      %v1077 = vmul.f32 %v1017, 0.35355338
      %v1078 = vmul.f32 %v1036, 0.35355338
      %v1079 = vmul.f32 %v1055, 0.35355338
      %v1080 = vmul.f32 %v1074, 0.35355338
      %v1081 = vsel %vm1000, %v1077, -inf
      %1082 = vmax.xlane.f32.xlu0 %v1081
      %v1083 = vpop.xlane.xlu0 %1082
      %v1084 = vsel %vm1000, %v1078, -inf
      %1085 = vmax.xlane.f32.xlu0 %v1084
      %v1086 = vpop.xlane.xlu0 %1085
      %v1087 = vsel %vm1000, %v1079, -inf
      %1088 = vmax.xlane.f32.xlu0 %v1087
      %v1089 = vpop.xlane.xlu0 %1088
      %v1090 = vsel %vm1000, %v1080, -inf
      %1091 = vmax.xlane.f32.xlu0 %v1090
      %v1092 = vpop.xlane.xlu0 %1091
      %v1093 = vsub.f32 %v1077, %v1083
      %v1094 = vsub.f32 %v1078, %v1086
      %v1095 = vsub.f32 %v1079, %v1089
      %v1096 = vsub.f32 %v1080, %v1092
      %v1097 = vmul.f32 %v1093, 1.442695
      %v1098 = vpow.pop %v1097
      %v1099 = vmul.f32 %v1094, 1.442695
      %v1100 = vpow.pop %v1099
      %v1101 = vmul.f32 %v1095, 1.442695
      %v1102 = vpow.pop %v1101
      %v1103 = vmul.f32 %v1096, 1.442695
      %v1104 = vpow.pop %v1103
      %v1105 = vsel %vm1000, %v1098, 0.0
      %1106 = vadd.xlane.f32.xlu0 %v1105
      %v1107 = vpop.xlane.xlu0 %1106
      %v1108 = vsel %vm1000, %v1100, 0.0
      %1109 = vadd.xlane.f32.xlu0 %v1108
      %v1110 = vpop.xlane.xlu0 %1109
      %v1111 = vsel %vm1000, %v1102, 0.0
      %1112 = vadd.xlane.f32.xlu0 %v1111
      %v1113 = vpop.xlane.xlu0 %1112
      %v1114 = vsel %vm1000, %v1104, 0.0
      %1115 = vadd.xlane.f32.xlu0 %v1114
      %v1116 = vpop.xlane.xlu0 %1115
      %v1117 = vrcp.pop %v1107
      %v1118 = vrcp.pop %v1110
      %v1119 = vrcp.pop %v1113
      %v1120 = vrcp.pop %v1116
      %v1121 = vmul.f32 %v1098, %v1117
      %v1122 = vmul.f32 %v1100, %v1118
      %v1123 = vmul.f32 %v1102, %v1119
      %v1124 = vmul.f32 %v1104, %v1120
      %v1125 = vpack.c.bf16 %v1121, %v1121
      %v1126 = vpack.c.bf16 %v1122, %v1122
      %v1127 = vpack.c.bf16 %v1123, %v1123
      %v1128 = vpack.c.bf16 %v1124, %v1124
      %v1129 = vpack.c.bf16 %v941, %v941
      %v1130 = vpack.c.bf16 %v957, %v957
      %v1131 = vpack.c.bf16 %v973, %v973
      %v1132 = vpack.c.bf16 %v989, %v989
      %v1134 = vsel %vm1000, %v1125, 0
      %vm1136 = vcmask 1043456
      %v1138 = vsel %vm1136, %v1129, 0
      %1140 = vmatpush.bf16.msra.mxu0 0
      %1141 = vmatpush.bf16.msra.mxu0 0
      %1142 = vmatpush.bf16.msra.mxu0 0
      %1143 = vmatpush.bf16.msra.mxu0 0
      %1144 = vmatpush.bf16.msra.mxu0 0
      %1145 = vmatpush.bf16.msra.mxu0 0
      %1146 = vmatpush.bf16.msra.mxu0 0
      %1147 = vmatpush.bf16.msra.mxu0 %v1138
      %1148 = vmatmul.bf16.gmra.mxu0 %v1134
      %v1149 = vpop.f32.mrf.mxu0
      %v1150 = vadd.f32 0.0, %v1149
      %v1151 = vpop.f32.mrf.mxu0
      %1152 = vdwg.mxu0
      %v1154 = vsel %vm1000, %v1126, 0
      %v1157 = vsel %vm1136, %v1130, 0
      %1159 = vmatpush.bf16.msra.mxu0 0
      %1160 = vmatpush.bf16.msra.mxu0 0
      %1161 = vmatpush.bf16.msra.mxu0 0
      %1162 = vmatpush.bf16.msra.mxu0 0
      %1163 = vmatpush.bf16.msra.mxu0 0
      %1164 = vmatpush.bf16.msra.mxu0 0
      %1165 = vmatpush.bf16.msra.mxu0 0
      %1166 = vmatpush.bf16.msra.mxu0 %v1157
      %1167 = vmatmul.bf16.gmra.mxu0 %v1154
      %v1168 = vpop.f32.mrf.mxu0
      %v1169 = vadd.f32 0.0, %v1168
      %v1170 = vpop.f32.mrf.mxu0
      %1171 = vdwg.mxu0
      %v1173 = vsel %vm1000, %v1127, 0
      %v1176 = vsel %vm1136, %v1131, 0
      %1178 = vmatpush.bf16.msra.mxu0 0
      %1179 = vmatpush.bf16.msra.mxu0 0
      %1180 = vmatpush.bf16.msra.mxu0 0
      %1181 = vmatpush.bf16.msra.mxu0 0
      %1182 = vmatpush.bf16.msra.mxu0 0
      %1183 = vmatpush.bf16.msra.mxu0 0
      %1184 = vmatpush.bf16.msra.mxu0 0
      %1185 = vmatpush.bf16.msra.mxu0 %v1176
      %1186 = vmatmul.bf16.gmra.mxu0 %v1173
      %v1187 = vpop.f32.mrf.mxu0
      %v1188 = vadd.f32 0.0, %v1187
      %v1189 = vpop.f32.mrf.mxu0
      %1190 = vdwg.mxu0
      %v1192 = vsel %vm1000, %v1128, 0
      %v1195 = vsel %vm1136, %v1132, 0
      %1197 = vmatpush.bf16.msra.mxu0 0
      %1198 = vmatpush.bf16.msra.mxu0 0
      %1199 = vmatpush.bf16.msra.mxu0 0
      %1200 = vmatpush.bf16.msra.mxu0 0
      %1201 = vmatpush.bf16.msra.mxu0 0
      %1202 = vmatpush.bf16.msra.mxu0 0
      %1203 = vmatpush.bf16.msra.mxu0 0
      %1204 = vmatpush.bf16.msra.mxu0 %v1195
      %1205 = vmatmul.bf16.gmra.mxu0 %v1192
      %v1206 = vpop.f32.mrf.mxu0
      %v1207 = vadd.f32 0.0, %v1206
      %v1208 = vpop.f32.mrf.mxu0
      %1209 = vdwg.mxu0
      %v1210 = vpack.c.bf16 %v1150, %v1150
      %v1211 = vpack.c.bf16 %v1169, %v1169
      %v1212 = vpack.c.bf16 %v1188, %v1188
      %v1213 = vpack.c.bf16 %v1207, %v1207
      %v1214 = vld [vmem:[%s11] sm:$0xf]
      %v1215 = vld [vmem:[%s11 + $0x4] sm:$0xf]
      %v1216 = vld [vmem:[%s11 + $0x8] sm:$0xf]
      %v1217 = vld [vmem:[%s11 + $0xc] sm:$0xf]
      %v1218 = vld [vmem:[%s11 + $0x10] sm:$0xf]
      %v1219 = vld [vmem:[%s11 + $0x14] sm:$0xf]
      %v1220 = vld [vmem:[%s11 + $0x18] sm:$0xf]
      %v1221 = vld [vmem:[%s11 + $0x1c] sm:$0xf]
      %v1222 = vld [vmem:[%s11 + $0x20] sm:$0xf]
      %v1223 = vld [vmem:[%s11 + $0x24] sm:$0xf]
      %v1224 = vld [vmem:[%s11 + $0x28] sm:$0xf]
      %v1225 = vld [vmem:[%s11 + $0x2c] sm:$0xf]
      %v1226 = vld [vmem:[%s11 + $0x30] sm:$0xf]
      %v1227 = vld [vmem:[%s11 + $0x34] sm:$0xf]
      %v1228 = vld [vmem:[%s11 + $0x38] sm:$0xf]
      %v1229 = vld [vmem:[%s11 + $0x3c] sm:$0xf]
      %v1234 = vunpack.c.l.b16 %v1214
      %v1235 = vunpack.c.l.b16 %v1215
      %v1236 = vunpack.c.l.b16 %v1216
      %v1237 = vunpack.c.l.b16 %v1217
      %v1238 = vpack.c.b16 %v1235, %v1234
      %v1239 = vpack.c.b16 %v1237, %v1236
      %v1241 = vsel %vm1000, %v1210, 0
      %v1244 = vsel %vm1000, %v1238, 0
      %v1247 = vsel %vm1000, %v1239, 0
      %1249 = vmatpush.bf16.xpose.msra.mxu0 0
      %1250 = vmatpush.bf16.xpose.msra.mxu0 0
      %1251 = vmatpush.bf16.xpose.msra.mxu0 0
      %1252 = vmatpush.bf16.xpose.msra.mxu0 0
      %1253 = vmatpush.bf16.xpose.msra.mxu0 0
      %1254 = vmatpush.bf16.xpose.msra.mxu0 0
      %1255 = vmatpush.bf16.xpose.msra.mxu0 %v1247
      %1256 = vmatpush.bf16.xpose.msra.mxu0 %v1244
      %1257 = vmatmul.bf16.gmra.mxu0 %v1241
      %v1258 = vpop.f32.mrf.mxu0
      %v1259 = vadd.f32 0.0, %v1258
      %v1260 = vpop.f32.mrf.mxu0
      %1261 = vdwg.mxu0
      %v1266 = vunpack.c.l.b16 %v1218
      %v1267 = vunpack.c.l.b16 %v1219
      %v1268 = vunpack.c.l.b16 %v1220
      %v1269 = vunpack.c.l.b16 %v1221
      %v1270 = vpack.c.b16 %v1267, %v1266
      %v1271 = vpack.c.b16 %v1269, %v1268
      %v1273 = vsel %vm1000, %v1211, 0
      %v1276 = vsel %vm1000, %v1270, 0
      %v1279 = vsel %vm1000, %v1271, 0
      %1281 = vmatpush.bf16.xpose.msra.mxu0 0
      %1282 = vmatpush.bf16.xpose.msra.mxu0 0
      %1283 = vmatpush.bf16.xpose.msra.mxu0 0
      %1284 = vmatpush.bf16.xpose.msra.mxu0 0
      %1285 = vmatpush.bf16.xpose.msra.mxu0 0
      %1286 = vmatpush.bf16.xpose.msra.mxu0 0
      %1287 = vmatpush.bf16.xpose.msra.mxu0 %v1279
      %1288 = vmatpush.bf16.xpose.msra.mxu0 %v1276
      %1289 = vmatmul.bf16.gmra.mxu0 %v1273
      %v1290 = vpop.f32.mrf.mxu0
      %v1291 = vadd.f32 0.0, %v1290
      %v1292 = vpop.f32.mrf.mxu0
      %1293 = vdwg.mxu0
      %v1298 = vunpack.c.l.b16 %v1222
      %v1299 = vunpack.c.l.b16 %v1223
      %v1300 = vunpack.c.l.b16 %v1224
      %v1301 = vunpack.c.l.b16 %v1225
      %v1302 = vpack.c.b16 %v1299, %v1298
      %v1303 = vpack.c.b16 %v1301, %v1300
      %v1305 = vsel %vm1000, %v1212, 0
      %v1308 = vsel %vm1000, %v1302, 0
      %v1311 = vsel %vm1000, %v1303, 0
      %1313 = vmatpush.bf16.xpose.msra.mxu0 0
      %1314 = vmatpush.bf16.xpose.msra.mxu0 0
      %1315 = vmatpush.bf16.xpose.msra.mxu0 0
      %1316 = vmatpush.bf16.xpose.msra.mxu0 0
      %1317 = vmatpush.bf16.xpose.msra.mxu0 0
      %1318 = vmatpush.bf16.xpose.msra.mxu0 0
      %1319 = vmatpush.bf16.xpose.msra.mxu0 %v1311
      %1320 = vmatpush.bf16.xpose.msra.mxu0 %v1308
      %1321 = vmatmul.bf16.gmra.mxu0 %v1305
      %v1322 = vpop.f32.mrf.mxu0
      %v1323 = vadd.f32 0.0, %v1322
      %v1324 = vpop.f32.mrf.mxu0
      %1325 = vdwg.mxu0
      %v1330 = vunpack.c.l.b16 %v1226
      %v1331 = vunpack.c.l.b16 %v1227
      %v1332 = vunpack.c.l.b16 %v1228
      %v1333 = vunpack.c.l.b16 %v1229
      %v1334 = vpack.c.b16 %v1331, %v1330
      %v1335 = vpack.c.b16 %v1333, %v1332
      %v1337 = vsel %vm1000, %v1213, 0
      %v1340 = vsel %vm1000, %v1334, 0
      %v1343 = vsel %vm1000, %v1335, 0
      %1345 = vmatpush.bf16.xpose.msra.mxu0 0
      %1346 = vmatpush.bf16.xpose.msra.mxu0 0
      %1347 = vmatpush.bf16.xpose.msra.mxu0 0
      %1348 = vmatpush.bf16.xpose.msra.mxu0 0
      %1349 = vmatpush.bf16.xpose.msra.mxu0 0
      %1350 = vmatpush.bf16.xpose.msra.mxu0 0
      %1351 = vmatpush.bf16.xpose.msra.mxu0 %v1343
      %1352 = vmatpush.bf16.xpose.msra.mxu0 %v1340
      %1353 = vmatmul.bf16.gmra.mxu0 %v1337
      %v1354 = vpop.f32.mrf.mxu0
      %v1355 = vadd.f32 0.0, %v1354
      %v1356 = vpop.f32.mrf.mxu0
      %1357 = vdwg.mxu0
      %v1358 = vsel %vm698, %v1259, 0.0
      %v1359 = vsel %vm698, %v1291, 0.0
      %v1360 = vadd.f32 %v1358, %v1359
      %v1361 = vsel %vm698, %v1323, 0.0
      %v1362 = vadd.f32 %v1360, %v1361
      %v1363 = vsel %vm698, %v1355, 0.0
      %v1364 = vadd.f32 %v1362, %v1363
      %v1365 = vadd.f32 %v693, %v1364
      %v1366 = vld [vmem:[%s12] sm:$0x1]
      %v1368 = vperm.slane %v1366, 0
      %v1370 = vadd.f32 %v1365, %v1368
      %v1371 = vld [vmem:[%s13] sm:$0x1]
      %v1372 = vld [vmem:[%s14] sm:$0x1]
      %v1373 = vsel %vm698, %v1370, 0.0
      %1374 = vadd.xlane.f32.xlu0 %v1373
      %v1375 = vpop.xlane.xlu0 %1374
      %v1376 = vmul.f32 %v1375, %v708
      %v1377 = vsub.f32 %v1370, %v1376
      %v1378 = vmul.f32 %v1377, %v1377
      %v1379 = vsel %vm698, %v1378, 0.0
      %1380 = vadd.xlane.f32.xlu0 %v1379
      %v1381 = vpop.xlane.xlu0 %1380
      %v1382 = vmul.f32 %v1381, %v708
      %v1383 = vadd.f32 %v1382, 1e-05
      %v1384 = vrsqrt.pop %v1383
      %v1385 = vmul.f32 %v1384, %v1383
      %v1386 = vmul.f32 %v1385, %v1384
      %v1387 = vmul.f32 0.5, %v1386
      %v1388 = vsub.f32 1.5, %v1387
      %v1389 = vmul.f32 %v1384, %v1388
      %vm1390 = vweird.f32 %v1383
      %vm1391 = vweird.f32 %v1384
      %vm1392 = vmor %vm1390, %vm1391
      %v1393 = vsel %vm1392, %v1384, %v1389
      %v1394 = vmul.f32 %v1377, %v1393
      %v1396 = vperm.slane %v1371, 0
      %v1398 = vmul.f32 %v1394, %v1396
      %v1400 = vperm.slane %v1372, 0
      %v1402 = vadd.f32 %v1398, %v1400
      %v1403 = vld [vmem:[%s15] sm:$0xf]
      %v1404 = vld [vmem:[%s15 + $0x4] sm:$0xf]
      %v1405 = vld [vmem:[%s15 + $0x8] sm:$0xf]
      %v1406 = vld [vmem:[%s15 + $0xc] sm:$0xf]
      %v1407 = vld [vmem:[%s15 + $0x10] sm:$0xf]
      %v1408 = vld [vmem:[%s15 + $0x14] sm:$0xf]
      %v1409 = vld [vmem:[%s15 + $0x18] sm:$0xf]
      %v1410 = vld [vmem:[%s15 + $0x1c] sm:$0xf]
      %v1411 = vpack.c.bf16 %v1402, %v1402
      %v1412 = vld [vmem:[%s16] sm:$0x1]
      %v1414 = vperm.slane %v1412, 0
      %v1424 = vunpack.c.l.b16 %v1403
      %v1425 = vunpack.c.l.b16 %v1404
      %v1426 = vunpack.c.l.b16 %v1405
      %v1427 = vunpack.c.l.b16 %v1406
      %v1428 = vunpack.c.l.b16 %v1407
      %v1429 = vunpack.c.l.b16 %v1408
      %v1430 = vunpack.c.l.b16 %v1409
      %v1431 = vunpack.c.l.b16 %v1410
      %v1432 = vpack.c.b16 %v1425, %v1424
      %v1433 = vpack.c.b16 %v1427, %v1426
      %v1434 = vpack.c.b16 %v1429, %v1428
      %v1435 = vpack.c.b16 %v1431, %v1430
      %v1437 = vsel %vm698, %v1411, 0
      %v1440 = vsel %vm698, %v1432, 0
      %v1443 = vsel %vm698, %v1433, 0
      %v1446 = vsel %vm698, %v1434, 0
      %v1449 = vsel %vm698, %v1435, 0
      %1451 = vmatpush.bf16.xpose.msra.mxu0 0
      %1452 = vmatpush.bf16.xpose.msra.mxu0 0
      %1453 = vmatpush.bf16.xpose.msra.mxu0 0
      %1454 = vmatpush.bf16.xpose.msra.mxu0 0
      %1455 = vmatpush.bf16.xpose.msra.mxu0 %v1449
      %1456 = vmatpush.bf16.xpose.msra.mxu0 %v1446
      %1457 = vmatpush.bf16.xpose.msra.mxu0 %v1443
      %1458 = vmatpush.bf16.xpose.msra.mxu0 %v1440
      %1459 = vmatmul.bf16.gmra.mxu0 %v1437
      %v1460 = vpop.f32.mrf.mxu0
      %v1461 = vadd.f32 %v1414, %v1460
      %v1462 = vpop.f32.mrf.mxu0
      %1463 = vdwg.mxu0
      %v1464 = vmul.f32 %v1461, 0.5
      %v1465 = vmul.f32 %v1461, 0.70710677
      %v1466 = vand.u32 2147483647, %v1465
      %v1467 = vmul.f32 %v1466, 0.5
      %v1468 = vadd.f32 %v1467, 1.0
      %v1469 = vrcp.pop %v1468
      %v1470 = vmul.f32 %v1468, %v1469
      %v1471 = vsub.f32 1.0, %v1470
      %v1472 = vmul.f32 %v1469, %v1471
      %v1473 = vadd.f32 %v1469, %v1472
      %vm1474 = vweird.f32 %v1468
      %vm1475 = vweird.f32 %v1469
      %vm1476 = vmor %vm1474, %vm1475
      %v1477 = vsel %vm1476, %v1469, %v1473
      %v1478 = vand.u32 2147483647, %v1468
      %vm1479 = vcmp.eq.f32.partialorder %v1478, 8.507059e+37
      %v1480 = vand.u32 %v1468, 2147483648
      %v1481 = vor.u32 1.1754944e-38, %v1480
      %v1482 = vsel %vm1479, %v1481, %v1477
      %v1483 = vmul.f32 1.0, %v1482
      %v1484 = vsub.f32 0.0, %v1466
      %v1485 = vmul.f32 %v1484, %v1466
      %v1486 = vsub.f32 %v1485, 1.2655122
      %v1487 = vmul.f32 %v1483, 0.17087276
      %v1488 = vadd.f32 %v1487, -0.82215226
      %v1489 = vmul.f32 %v1483, %v1488
      %v1490 = vadd.f32 %v1489, 1.4885159
      %v1491 = vmul.f32 %v1483, %v1490
      %v1492 = vadd.f32 %v1491, -1.135204
      %v1493 = vmul.f32 %v1483, %v1492
      %v1494 = vadd.f32 %v1493, 0.27886808
      %v1495 = vmul.f32 %v1483, %v1494
      %v1496 = vadd.f32 %v1495, -0.18628806
      %v1497 = vmul.f32 %v1483, %v1496
      %v1498 = vadd.f32 %v1497, 0.09678418
      %v1499 = vmul.f32 %v1483, %v1498
      %v1500 = vadd.f32 %v1499, 0.37409195
      %v1501 = vmul.f32 %v1483, %v1500
      %v1502 = vadd.f32 %v1501, 1.0000237
      %v1503 = vmul.f32 %v1483, %v1502
      %v1504 = vadd.f32 %v1486, %v1503
      %v1505 = vmul.f32 %v1504, 1.442695
      %v1506 = vpow.pop %v1505
      %v1507 = vmul.f32 %v1483, %v1506
      %v1508 = vsub.f32 1.0, %v1507
      %vm1509 = vcmp.ge.f32.partialorder %v1465, 0.0
      %v1510 = vsub.f32 0.0, %v1508
      %v1511 = vsel %vm1509, %v1508, %v1510
      %v1512 = vadd.f32 %v1511, 1.0
      %v1513 = vmul.f32 %v1464, %v1512
      %v1514 = vld [vmem:[%s17] sm:$0xf]
      %v1515 = vld [vmem:[%s17 + $0x4] sm:$0xf]
      %v1516 = vld [vmem:[%s17 + $0x8] sm:$0xf]
      %v1517 = vld [vmem:[%s17 + $0xc] sm:$0xf]
      %v1518 = vpack.c.bf16 %v1513, %v1513
      %v1523 = vunpack.c.l.b16 %v1514
      %v1524 = vunpack.c.l.b16 %v1515
      %v1525 = vunpack.c.l.b16 %v1516
      %v1526 = vunpack.c.l.b16 %v1517
      %v1527 = vpack.c.b16 %v1524, %v1523
      %v1528 = vpack.c.b16 %v1526, %v1525
      %vm1529 = vcmask 523264
      %v1531 = vsel %vm1529, %v1518, 0
      %v1534 = vsel %vm1529, %v1527, 0
      %v1537 = vsel %vm1529, %v1528, 0
      %1539 = vmatpush.bf16.xpose.msra.mxu0 0
      %1540 = vmatpush.bf16.xpose.msra.mxu0 0
      %1541 = vmatpush.bf16.xpose.msra.mxu0 0
      %1542 = vmatpush.bf16.xpose.msra.mxu0 0
      %1543 = vmatpush.bf16.xpose.msra.mxu0 0
      %1544 = vmatpush.bf16.xpose.msra.mxu0 0
      %1545 = vmatpush.bf16.xpose.msra.mxu0 %v1537
      %1546 = vmatpush.bf16.xpose.msra.mxu0 %v1534
      %1547 = vmatmul.bf16.gmra.mxu0 %v1531
      %v1548 = vpop.f32.mrf.mxu0
      %v1549 = vadd.f32 0.0, %v1548
      %v1550 = vpop.f32.mrf.mxu0
      %1551 = vdwg.mxu0
      %v1552 = vadd.f32 %v1370, %v1549
      %v1553 = vld [vmem:[%s18] sm:$0x1]
      %v1555 = vperm.slane %v1553, 0
      %v1557 = vadd.f32 %v1552, %v1555
      %s1558 = scalar_lea.vmem %s3, 1
      %v1559 = vld [vmem:[%s1558] sm:$0x1]
      %s1560 = scalar_lea.vmem %s4, 1
      %v1561 = vld [vmem:[%s1560] sm:$0x1]
      %v1562 = vsel %vm698, %v1557, 0.0
      %1563 = vadd.xlane.f32.xlu0 %v1562
      %v1564 = vpop.xlane.xlu0 %1563
      %v1565 = vmul.f32 %v1564, %v708
      %v1566 = vsub.f32 %v1557, %v1565
      %v1567 = vmul.f32 %v1566, %v1566
      %v1568 = vsel %vm698, %v1567, 0.0
      %1569 = vadd.xlane.f32.xlu0 %v1568
      %v1570 = vpop.xlane.xlu0 %1569
      %v1571 = vmul.f32 %v1570, %v708
      %v1572 = vadd.f32 %v1571, 1e-05
      %v1573 = vrsqrt.pop %v1572
      %v1574 = vmul.f32 %v1573, %v1572
      %v1575 = vmul.f32 %v1574, %v1573
      %v1576 = vmul.f32 0.5, %v1575
      %v1577 = vsub.f32 1.5, %v1576
      %v1578 = vmul.f32 %v1573, %v1577
      %vm1579 = vweird.f32 %v1572
      %vm1580 = vweird.f32 %v1573
      %vm1581 = vmor %vm1579, %vm1580
      %v1582 = vsel %vm1581, %v1573, %v1578
      %v1583 = vmul.f32 %v1566, %v1582
      %v1585 = vperm.slane %v1559, 0
      %v1587 = vmul.f32 %v1583, %v1585
      %v1589 = vperm.slane %v1561, 0
      %v1591 = vadd.f32 %v1587, %v1589
      %v1592 = vpack.c.bf16 %v1591, %v1591
      %s1593 = scalar_lea.vmem %s5, 16
      %v1594 = vld [vmem:[%s1593] sm:$0xf]
      %v1595 = vld [vmem:[%s1593 + $0x4] sm:$0xf]
      %v1596 = vld [vmem:[%s1593 + $0x8] sm:$0xf]
      %v1597 = vld [vmem:[%s1593 + $0xc] sm:$0xf]
      %s1598 = scalar_lea.vmem %s6, 4
      %v1599 = vld [vmem:[%s1598] sm:$0x1]
      %v1600 = vld [vmem:[%s1598 + $0x1] sm:$0x1]
      %v1601 = vld [vmem:[%s1598 + $0x2] sm:$0x1]
      %v1602 = vld [vmem:[%s1598 + $0x3] sm:$0x1]
      %v1607 = vperm.slane %v1599, 0
      %v1608 = vperm.slane %v1600, 0
      %v1609 = vperm.slane %v1601, 0
      %v1610 = vperm.slane %v1602, 0
      %v1616 = vsel %vm698, %v1592, 0
      %v1619 = vsel %vm698, %v1594, 0
      %1621 = vmatpush.bf16.xpose.msra.mxu0 0
      %1622 = vmatpush.bf16.xpose.msra.mxu0 0
      %1623 = vmatpush.bf16.xpose.msra.mxu0 0
      %1624 = vmatpush.bf16.xpose.msra.mxu0 0
      %1625 = vmatpush.bf16.xpose.msra.mxu0 0
      %1626 = vmatpush.bf16.xpose.msra.mxu0 0
      %1627 = vmatpush.bf16.xpose.msra.mxu0 0
      %1628 = vmatpush.bf16.xpose.msra.mxu0 %v1619
      %1629 = vmatmul.bf16.gmra.mxu0 %v1616
      %v1630 = vpop.f32.mrf.mxu0
      %v1631 = vadd.f32 %v1607, %v1630
      %v1632 = vpop.f32.mrf.mxu0
      %1633 = vdwg.mxu0
      %v1635 = vsel %vm698, %v1595, 0
      %1637 = vmatpush.bf16.xpose.msra.mxu0 0
      %1638 = vmatpush.bf16.xpose.msra.mxu0 0
      %1639 = vmatpush.bf16.xpose.msra.mxu0 0
      %1640 = vmatpush.bf16.xpose.msra.mxu0 0
      %1641 = vmatpush.bf16.xpose.msra.mxu0 0
      %1642 = vmatpush.bf16.xpose.msra.mxu0 0
      %1643 = vmatpush.bf16.xpose.msra.mxu0 0
      %1644 = vmatpush.bf16.xpose.msra.mxu0 %v1635
      %1645 = vmatmul.bf16.gmra.mxu0 %v1616
      %v1646 = vpop.f32.mrf.mxu0
      %v1647 = vadd.f32 %v1608, %v1646
      %v1648 = vpop.f32.mrf.mxu0
      %1649 = vdwg.mxu0
      %v1651 = vsel %vm698, %v1596, 0
      %1653 = vmatpush.bf16.xpose.msra.mxu0 0
      %1654 = vmatpush.bf16.xpose.msra.mxu0 0
      %1655 = vmatpush.bf16.xpose.msra.mxu0 0
      %1656 = vmatpush.bf16.xpose.msra.mxu0 0
      %1657 = vmatpush.bf16.xpose.msra.mxu0 0
      %1658 = vmatpush.bf16.xpose.msra.mxu0 0
      %1659 = vmatpush.bf16.xpose.msra.mxu0 0
      %1660 = vmatpush.bf16.xpose.msra.mxu0 %v1651
      %1661 = vmatmul.bf16.gmra.mxu0 %v1616
      %v1662 = vpop.f32.mrf.mxu0
      %v1663 = vadd.f32 %v1609, %v1662
      %v1664 = vpop.f32.mrf.mxu0
      %1665 = vdwg.mxu0
      %v1667 = vsel %vm698, %v1597, 0
      %1669 = vmatpush.bf16.xpose.msra.mxu0 0
      %1670 = vmatpush.bf16.xpose.msra.mxu0 0
      %1671 = vmatpush.bf16.xpose.msra.mxu0 0
      %1672 = vmatpush.bf16.xpose.msra.mxu0 0
      %1673 = vmatpush.bf16.xpose.msra.mxu0 0
      %1674 = vmatpush.bf16.xpose.msra.mxu0 0
      %1675 = vmatpush.bf16.xpose.msra.mxu0 0
      %1676 = vmatpush.bf16.xpose.msra.mxu0 %v1667
      %1677 = vmatmul.bf16.gmra.mxu0 %v1616
      %v1678 = vpop.f32.mrf.mxu0
      %v1679 = vadd.f32 %v1610, %v1678
      %v1680 = vpop.f32.mrf.mxu0
      %1681 = vdwg.mxu0
      %s1682 = scalar_lea.vmem %s7, 16
      %v1683 = vld [vmem:[%s1682] sm:$0xf]
      %v1684 = vld [vmem:[%s1682 + $0x4] sm:$0xf]
      %v1685 = vld [vmem:[%s1682 + $0x8] sm:$0xf]
      %v1686 = vld [vmem:[%s1682 + $0xc] sm:$0xf]
      %s1687 = scalar_lea.vmem %s8, 4
      %v1688 = vld [vmem:[%s1687] sm:$0x1]
      %v1689 = vld [vmem:[%s1687 + $0x1] sm:$0x1]
      %v1690 = vld [vmem:[%s1687 + $0x2] sm:$0x1]
      %v1691 = vld [vmem:[%s1687 + $0x3] sm:$0x1]
      %v1696 = vperm.slane %v1688, 0
      %v1697 = vperm.slane %v1689, 0
      %v1698 = vperm.slane %v1690, 0
      %v1699 = vperm.slane %v1691, 0
      %v1705 = vsel %vm698, %v1683, 0
      %1707 = vmatpush.bf16.xpose.msra.mxu0 0
      %1708 = vmatpush.bf16.xpose.msra.mxu0 0
      %1709 = vmatpush.bf16.xpose.msra.mxu0 0
      %1710 = vmatpush.bf16.xpose.msra.mxu0 0
      %1711 = vmatpush.bf16.xpose.msra.mxu0 0
      %1712 = vmatpush.bf16.xpose.msra.mxu0 0
      %1713 = vmatpush.bf16.xpose.msra.mxu0 0
      %1714 = vmatpush.bf16.xpose.msra.mxu0 %v1705
      %1715 = vmatmul.bf16.gmra.mxu0 %v1616
      %v1716 = vpop.f32.mrf.mxu0
      %v1717 = vadd.f32 %v1696, %v1716
      %v1718 = vpop.f32.mrf.mxu0
      %1719 = vdwg.mxu0
      %v1721 = vsel %vm698, %v1684, 0
      %1723 = vmatpush.bf16.xpose.msra.mxu0 0
      %1724 = vmatpush.bf16.xpose.msra.mxu0 0
      %1725 = vmatpush.bf16.xpose.msra.mxu0 0
      %1726 = vmatpush.bf16.xpose.msra.mxu0 0
      %1727 = vmatpush.bf16.xpose.msra.mxu0 0
      %1728 = vmatpush.bf16.xpose.msra.mxu0 0
      %1729 = vmatpush.bf16.xpose.msra.mxu0 0
      %1730 = vmatpush.bf16.xpose.msra.mxu0 %v1721
      %1731 = vmatmul.bf16.gmra.mxu0 %v1616
      %v1732 = vpop.f32.mrf.mxu0
      %v1733 = vadd.f32 %v1697, %v1732
      %v1734 = vpop.f32.mrf.mxu0
      %1735 = vdwg.mxu0
      %v1737 = vsel %vm698, %v1685, 0
      %1739 = vmatpush.bf16.xpose.msra.mxu0 0
      %1740 = vmatpush.bf16.xpose.msra.mxu0 0
      %1741 = vmatpush.bf16.xpose.msra.mxu0 0
      %1742 = vmatpush.bf16.xpose.msra.mxu0 0
      %1743 = vmatpush.bf16.xpose.msra.mxu0 0
      %1744 = vmatpush.bf16.xpose.msra.mxu0 0
      %1745 = vmatpush.bf16.xpose.msra.mxu0 0
      %1746 = vmatpush.bf16.xpose.msra.mxu0 %v1737
      %1747 = vmatmul.bf16.gmra.mxu0 %v1616
      %v1748 = vpop.f32.mrf.mxu0
      %v1749 = vadd.f32 %v1698, %v1748
      %v1750 = vpop.f32.mrf.mxu0
      %1751 = vdwg.mxu0
      %v1753 = vsel %vm698, %v1686, 0
      %1755 = vmatpush.bf16.xpose.msra.mxu0 0
      %1756 = vmatpush.bf16.xpose.msra.mxu0 0
      %1757 = vmatpush.bf16.xpose.msra.mxu0 0
      %1758 = vmatpush.bf16.xpose.msra.mxu0 0
      %1759 = vmatpush.bf16.xpose.msra.mxu0 0
      %1760 = vmatpush.bf16.xpose.msra.mxu0 0
      %1761 = vmatpush.bf16.xpose.msra.mxu0 0
      %1762 = vmatpush.bf16.xpose.msra.mxu0 %v1753
      %1763 = vmatmul.bf16.gmra.mxu0 %v1616
      %v1764 = vpop.f32.mrf.mxu0
      %v1765 = vadd.f32 %v1699, %v1764
      %v1766 = vpop.f32.mrf.mxu0
      %1767 = vdwg.mxu0
      %s1768 = scalar_lea.vmem %s9, 16
      %v1769 = vld [vmem:[%s1768] sm:$0xf]
      %v1770 = vld [vmem:[%s1768 + $0x4] sm:$0xf]
      %v1771 = vld [vmem:[%s1768 + $0x8] sm:$0xf]
      %v1772 = vld [vmem:[%s1768 + $0xc] sm:$0xf]
      %s1773 = scalar_lea.vmem %s10, 4
      %v1774 = vld [vmem:[%s1773] sm:$0x1]
      %v1775 = vld [vmem:[%s1773 + $0x1] sm:$0x1]
      %v1776 = vld [vmem:[%s1773 + $0x2] sm:$0x1]
      %v1777 = vld [vmem:[%s1773 + $0x3] sm:$0x1]
      %v1782 = vperm.slane %v1774, 0
      %v1783 = vperm.slane %v1775, 0
      %v1784 = vperm.slane %v1776, 0
      %v1785 = vperm.slane %v1777, 0
      %v1791 = vsel %vm698, %v1769, 0
      %1793 = vmatpush.bf16.xpose.msra.mxu0 0
      %1794 = vmatpush.bf16.xpose.msra.mxu0 0
      %1795 = vmatpush.bf16.xpose.msra.mxu0 0
      %1796 = vmatpush.bf16.xpose.msra.mxu0 0
      %1797 = vmatpush.bf16.xpose.msra.mxu0 0
      %1798 = vmatpush.bf16.xpose.msra.mxu0 0
      %1799 = vmatpush.bf16.xpose.msra.mxu0 0
      %1800 = vmatpush.bf16.xpose.msra.mxu0 %v1791
      %1801 = vmatmul.bf16.gmra.mxu0 %v1616
      %v1802 = vpop.f32.mrf.mxu0
      %v1803 = vadd.f32 %v1782, %v1802
      %v1804 = vpop.f32.mrf.mxu0
      %1805 = vdwg.mxu0
      %v1807 = vsel %vm698, %v1770, 0
      %1809 = vmatpush.bf16.xpose.msra.mxu0 0
      %1810 = vmatpush.bf16.xpose.msra.mxu0 0
      %1811 = vmatpush.bf16.xpose.msra.mxu0 0
      %1812 = vmatpush.bf16.xpose.msra.mxu0 0
      %1813 = vmatpush.bf16.xpose.msra.mxu0 0
      %1814 = vmatpush.bf16.xpose.msra.mxu0 0
      %1815 = vmatpush.bf16.xpose.msra.mxu0 0
      %1816 = vmatpush.bf16.xpose.msra.mxu0 %v1807
      %1817 = vmatmul.bf16.gmra.mxu0 %v1616
      %v1818 = vpop.f32.mrf.mxu0
      %v1819 = vadd.f32 %v1783, %v1818
      %v1820 = vpop.f32.mrf.mxu0
      %1821 = vdwg.mxu0
      %v1823 = vsel %vm698, %v1771, 0
      %1825 = vmatpush.bf16.xpose.msra.mxu0 0
      %1826 = vmatpush.bf16.xpose.msra.mxu0 0
      %1827 = vmatpush.bf16.xpose.msra.mxu0 0
      %1828 = vmatpush.bf16.xpose.msra.mxu0 0
      %1829 = vmatpush.bf16.xpose.msra.mxu0 0
      %1830 = vmatpush.bf16.xpose.msra.mxu0 0
      %1831 = vmatpush.bf16.xpose.msra.mxu0 0
      %1832 = vmatpush.bf16.xpose.msra.mxu0 %v1823
      %1833 = vmatmul.bf16.gmra.mxu0 %v1616
      %v1834 = vpop.f32.mrf.mxu0
      %v1835 = vadd.f32 %v1784, %v1834
      %v1836 = vpop.f32.mrf.mxu0
      %1837 = vdwg.mxu0
      %v1839 = vsel %vm698, %v1772, 0
      %1841 = vmatpush.bf16.xpose.msra.mxu0 0
      %1842 = vmatpush.bf16.xpose.msra.mxu0 0
      %1843 = vmatpush.bf16.xpose.msra.mxu0 0
      %1844 = vmatpush.bf16.xpose.msra.mxu0 0
      %1845 = vmatpush.bf16.xpose.msra.mxu0 0
      %1846 = vmatpush.bf16.xpose.msra.mxu0 0
      %1847 = vmatpush.bf16.xpose.msra.mxu0 0
      %1848 = vmatpush.bf16.xpose.msra.mxu0 %v1839
      %1849 = vmatmul.bf16.gmra.mxu0 %v1616
      %v1850 = vpop.f32.mrf.mxu0
      %v1851 = vadd.f32 %v1785, %v1850
      %v1852 = vpop.f32.mrf.mxu0
      %1853 = vdwg.mxu0
      %v1854 = vpack.c.bf16 %v1631, %v1631
      %v1855 = vpack.c.bf16 %v1647, %v1647
      %v1856 = vpack.c.bf16 %v1663, %v1663
      %v1857 = vpack.c.bf16 %v1679, %v1679
      %v1858 = vpack.c.bf16 %v1717, %v1717
      %v1859 = vpack.c.bf16 %v1733, %v1733
      %v1860 = vpack.c.bf16 %v1749, %v1749
      %v1861 = vpack.c.bf16 %v1765, %v1765
      %v1863 = vsel %vm1000, %v1854, 0
      %v1866 = vsel %vm1000, %v1858, 0
      %1868 = vmatpush.bf16.xpose.msra.mxu0 0
      %1869 = vmatpush.bf16.xpose.msra.mxu0 0
      %1870 = vmatpush.bf16.xpose.msra.mxu0 0
      %1871 = vmatpush.bf16.xpose.msra.mxu0 0
      %1872 = vmatpush.bf16.xpose.msra.mxu0 0
      %1873 = vmatpush.bf16.xpose.msra.mxu0 0
      %1874 = vmatpush.bf16.xpose.msra.mxu0 0
      %1875 = vmatpush.bf16.xpose.msra.mxu0 %v1866
      %1876 = vmatmul.bf16.gmra.mxu0 %v1863
      %v1877 = vpop.f32.mrf.mxu0
      %v1878 = vadd.f32 0.0, %v1877
      %v1879 = vpop.f32.mrf.mxu0
      %1880 = vdwg.mxu0
      %v1882 = vsel %vm1000, %v1855, 0
      %v1885 = vsel %vm1000, %v1859, 0
      %1887 = vmatpush.bf16.xpose.msra.mxu0 0
      %1888 = vmatpush.bf16.xpose.msra.mxu0 0
      %1889 = vmatpush.bf16.xpose.msra.mxu0 0
      %1890 = vmatpush.bf16.xpose.msra.mxu0 0
      %1891 = vmatpush.bf16.xpose.msra.mxu0 0
      %1892 = vmatpush.bf16.xpose.msra.mxu0 0
      %1893 = vmatpush.bf16.xpose.msra.mxu0 0
      %1894 = vmatpush.bf16.xpose.msra.mxu0 %v1885
      %1895 = vmatmul.bf16.gmra.mxu0 %v1882
      %v1896 = vpop.f32.mrf.mxu0
      %v1897 = vadd.f32 0.0, %v1896
      %v1898 = vpop.f32.mrf.mxu0
      %1899 = vdwg.mxu0
      %v1901 = vsel %vm1000, %v1856, 0
      %v1904 = vsel %vm1000, %v1860, 0
      %1906 = vmatpush.bf16.xpose.msra.mxu0 0
      %1907 = vmatpush.bf16.xpose.msra.mxu0 0
      %1908 = vmatpush.bf16.xpose.msra.mxu0 0
      %1909 = vmatpush.bf16.xpose.msra.mxu0 0
      %1910 = vmatpush.bf16.xpose.msra.mxu0 0
      %1911 = vmatpush.bf16.xpose.msra.mxu0 0
      %1912 = vmatpush.bf16.xpose.msra.mxu0 0
      %1913 = vmatpush.bf16.xpose.msra.mxu0 %v1904
      %1914 = vmatmul.bf16.gmra.mxu0 %v1901
      %v1915 = vpop.f32.mrf.mxu0
      %v1916 = vadd.f32 0.0, %v1915
      %v1917 = vpop.f32.mrf.mxu0
      %1918 = vdwg.mxu0
      %v1920 = vsel %vm1000, %v1857, 0
      %v1923 = vsel %vm1000, %v1861, 0
      %1925 = vmatpush.bf16.xpose.msra.mxu0 0
      %1926 = vmatpush.bf16.xpose.msra.mxu0 0
      %1927 = vmatpush.bf16.xpose.msra.mxu0 0
      %1928 = vmatpush.bf16.xpose.msra.mxu0 0
      %1929 = vmatpush.bf16.xpose.msra.mxu0 0
      %1930 = vmatpush.bf16.xpose.msra.mxu0 0
      %1931 = vmatpush.bf16.xpose.msra.mxu0 0
      %1932 = vmatpush.bf16.xpose.msra.mxu0 %v1923
      %1933 = vmatmul.bf16.gmra.mxu0 %v1920
      %v1934 = vpop.f32.mrf.mxu0
      %v1935 = vadd.f32 0.0, %v1934
      %v1936 = vpop.f32.mrf.mxu0
      %1937 = vdwg.mxu0
      %v1938 = vmul.f32 %v1878, 0.35355338
      %v1939 = vmul.f32 %v1897, 0.35355338
      %v1940 = vmul.f32 %v1916, 0.35355338
      %v1941 = vmul.f32 %v1935, 0.35355338
      %v1942 = vsel %vm1000, %v1938, -inf
      %1943 = vmax.xlane.f32.xlu0 %v1942
      %v1944 = vpop.xlane.xlu0 %1943
      %v1945 = vsel %vm1000, %v1939, -inf
      %1946 = vmax.xlane.f32.xlu0 %v1945
      %v1947 = vpop.xlane.xlu0 %1946
      %v1948 = vsel %vm1000, %v1940, -inf
      %1949 = vmax.xlane.f32.xlu0 %v1948
      %v1950 = vpop.xlane.xlu0 %1949
      %v1951 = vsel %vm1000, %v1941, -inf
      %1952 = vmax.xlane.f32.xlu0 %v1951
      %v1953 = vpop.xlane.xlu0 %1952
      %v1954 = vsub.f32 %v1938, %v1944
      %v1955 = vsub.f32 %v1939, %v1947
      %v1956 = vsub.f32 %v1940, %v1950
      %v1957 = vsub.f32 %v1941, %v1953
      %v1958 = vmul.f32 %v1954, 1.442695
      %v1959 = vpow.pop %v1958
      %v1960 = vmul.f32 %v1955, 1.442695
      %v1961 = vpow.pop %v1960
      %v1962 = vmul.f32 %v1956, 1.442695
      %v1963 = vpow.pop %v1962
      %v1964 = vmul.f32 %v1957, 1.442695
      %v1965 = vpow.pop %v1964
      %v1966 = vsel %vm1000, %v1959, 0.0
      %1967 = vadd.xlane.f32.xlu0 %v1966
      %v1968 = vpop.xlane.xlu0 %1967
      %v1969 = vsel %vm1000, %v1961, 0.0
      %1970 = vadd.xlane.f32.xlu0 %v1969
      %v1971 = vpop.xlane.xlu0 %1970
      %v1972 = vsel %vm1000, %v1963, 0.0
      %1973 = vadd.xlane.f32.xlu0 %v1972
      %v1974 = vpop.xlane.xlu0 %1973
      %v1975 = vsel %vm1000, %v1965, 0.0
      %1976 = vadd.xlane.f32.xlu0 %v1975
      %v1977 = vpop.xlane.xlu0 %1976
      %v1978 = vrcp.pop %v1968
      %v1979 = vrcp.pop %v1971
      %v1980 = vrcp.pop %v1974
      %v1981 = vrcp.pop %v1977
      %v1982 = vmul.f32 %v1959, %v1978
      %v1983 = vmul.f32 %v1961, %v1979
      %v1984 = vmul.f32 %v1963, %v1980
      %v1985 = vmul.f32 %v1965, %v1981
      %v1986 = vpack.c.bf16 %v1982, %v1982
      %v1987 = vpack.c.bf16 %v1983, %v1983
      %v1988 = vpack.c.bf16 %v1984, %v1984
      %v1989 = vpack.c.bf16 %v1985, %v1985
      %v1990 = vpack.c.bf16 %v1803, %v1803
      %v1991 = vpack.c.bf16 %v1819, %v1819
      %v1992 = vpack.c.bf16 %v1835, %v1835
      %v1993 = vpack.c.bf16 %v1851, %v1851
      %v1995 = vsel %vm1000, %v1986, 0
      %v1998 = vsel %vm1136, %v1990, 0
      %2000 = vmatpush.bf16.msra.mxu0 0
      %2001 = vmatpush.bf16.msra.mxu0 0
      %2002 = vmatpush.bf16.msra.mxu0 0
      %2003 = vmatpush.bf16.msra.mxu0 0
      %2004 = vmatpush.bf16.msra.mxu0 0
      %2005 = vmatpush.bf16.msra.mxu0 0
      %2006 = vmatpush.bf16.msra.mxu0 0
      %2007 = vmatpush.bf16.msra.mxu0 %v1998
      %2008 = vmatmul.bf16.gmra.mxu0 %v1995
      %v2009 = vpop.f32.mrf.mxu0
      %v2010 = vadd.f32 0.0, %v2009
      %v2011 = vpop.f32.mrf.mxu0
      %2012 = vdwg.mxu0
      %v2014 = vsel %vm1000, %v1987, 0
      %v2017 = vsel %vm1136, %v1991, 0
      %2019 = vmatpush.bf16.msra.mxu0 0
      %2020 = vmatpush.bf16.msra.mxu0 0
      %2021 = vmatpush.bf16.msra.mxu0 0
      %2022 = vmatpush.bf16.msra.mxu0 0
      %2023 = vmatpush.bf16.msra.mxu0 0
      %2024 = vmatpush.bf16.msra.mxu0 0
      %2025 = vmatpush.bf16.msra.mxu0 0
      %2026 = vmatpush.bf16.msra.mxu0 %v2017
      %2027 = vmatmul.bf16.gmra.mxu0 %v2014
      %v2028 = vpop.f32.mrf.mxu0
      %v2029 = vadd.f32 0.0, %v2028
      %v2030 = vpop.f32.mrf.mxu0
      %2031 = vdwg.mxu0
      %v2033 = vsel %vm1000, %v1988, 0
      %v2036 = vsel %vm1136, %v1992, 0
      %2038 = vmatpush.bf16.msra.mxu0 0
      %2039 = vmatpush.bf16.msra.mxu0 0
      %2040 = vmatpush.bf16.msra.mxu0 0
      %2041 = vmatpush.bf16.msra.mxu0 0
      %2042 = vmatpush.bf16.msra.mxu0 0
      %2043 = vmatpush.bf16.msra.mxu0 0
      %2044 = vmatpush.bf16.msra.mxu0 0
      %2045 = vmatpush.bf16.msra.mxu0 %v2036
      %2046 = vmatmul.bf16.gmra.mxu0 %v2033
      %v2047 = vpop.f32.mrf.mxu0
      %v2048 = vadd.f32 0.0, %v2047
      %v2049 = vpop.f32.mrf.mxu0
      %2050 = vdwg.mxu0
      %v2052 = vsel %vm1000, %v1989, 0
      %v2055 = vsel %vm1136, %v1993, 0
      %2057 = vmatpush.bf16.msra.mxu0 0
      %2058 = vmatpush.bf16.msra.mxu0 0
      %2059 = vmatpush.bf16.msra.mxu0 0
      %2060 = vmatpush.bf16.msra.mxu0 0
      %2061 = vmatpush.bf16.msra.mxu0 0
      %2062 = vmatpush.bf16.msra.mxu0 0
      %2063 = vmatpush.bf16.msra.mxu0 0
      %2064 = vmatpush.bf16.msra.mxu0 %v2055
      %2065 = vmatmul.bf16.gmra.mxu0 %v2052
      %v2066 = vpop.f32.mrf.mxu0
      %v2067 = vadd.f32 0.0, %v2066
      %v2068 = vpop.f32.mrf.mxu0
      %2069 = vdwg.mxu0
      %v2070 = vpack.c.bf16 %v2010, %v2010
      %v2071 = vpack.c.bf16 %v2029, %v2029
      %v2072 = vpack.c.bf16 %v2048, %v2048
      %v2073 = vpack.c.bf16 %v2067, %v2067
      %s2074 = scalar_lea.vmem %s11, 64
      %v2075 = vld [vmem:[%s2074] sm:$0xf]
      %v2076 = vld [vmem:[%s2074 + $0x4] sm:$0xf]
      %v2077 = vld [vmem:[%s2074 + $0x8] sm:$0xf]
      %v2078 = vld [vmem:[%s2074 + $0xc] sm:$0xf]
      %v2079 = vld [vmem:[%s2074 + $0x10] sm:$0xf]
      %v2080 = vld [vmem:[%s2074 + $0x14] sm:$0xf]
      %v2081 = vld [vmem:[%s2074 + $0x18] sm:$0xf]
      %v2082 = vld [vmem:[%s2074 + $0x1c] sm:$0xf]
      %v2083 = vld [vmem:[%s2074 + $0x20] sm:$0xf]
      %v2084 = vld [vmem:[%s2074 + $0x24] sm:$0xf]
      %v2085 = vld [vmem:[%s2074 + $0x28] sm:$0xf]
      %v2086 = vld [vmem:[%s2074 + $0x2c] sm:$0xf]
      %v2087 = vld [vmem:[%s2074 + $0x30] sm:$0xf]
      %v2088 = vld [vmem:[%s2074 + $0x34] sm:$0xf]
      %v2089 = vld [vmem:[%s2074 + $0x38] sm:$0xf]
      %v2090 = vld [vmem:[%s2074 + $0x3c] sm:$0xf]
      %v2095 = vunpack.c.l.b16 %v2075
      %v2096 = vunpack.c.l.b16 %v2076
      %v2097 = vunpack.c.l.b16 %v2077
      %v2098 = vunpack.c.l.b16 %v2078
      %v2099 = vpack.c.b16 %v2096, %v2095
      %v2100 = vpack.c.b16 %v2098, %v2097
      %v2102 = vsel %vm1000, %v2070, 0
      %v2105 = vsel %vm1000, %v2099, 0
      %v2108 = vsel %vm1000, %v2100, 0
      %2110 = vmatpush.bf16.xpose.msra.mxu0 0
      %2111 = vmatpush.bf16.xpose.msra.mxu0 0
      %2112 = vmatpush.bf16.xpose.msra.mxu0 0
      %2113 = vmatpush.bf16.xpose.msra.mxu0 0
      %2114 = vmatpush.bf16.xpose.msra.mxu0 0
      %2115 = vmatpush.bf16.xpose.msra.mxu0 0
      %2116 = vmatpush.bf16.xpose.msra.mxu0 %v2108
      %2117 = vmatpush.bf16.xpose.msra.mxu0 %v2105
      %2118 = vmatmul.bf16.gmra.mxu0 %v2102
      %v2119 = vpop.f32.mrf.mxu0
      %v2120 = vadd.f32 0.0, %v2119
      %v2121 = vpop.f32.mrf.mxu0
      %2122 = vdwg.mxu0
      %v2127 = vunpack.c.l.b16 %v2079
      %v2128 = vunpack.c.l.b16 %v2080
      %v2129 = vunpack.c.l.b16 %v2081
      %v2130 = vunpack.c.l.b16 %v2082
      %v2131 = vpack.c.b16 %v2128, %v2127
      %v2132 = vpack.c.b16 %v2130, %v2129
      %v2134 = vsel %vm1000, %v2071, 0
      %v2137 = vsel %vm1000, %v2131, 0
      %v2140 = vsel %vm1000, %v2132, 0
      %2142 = vmatpush.bf16.xpose.msra.mxu0 0
      %2143 = vmatpush.bf16.xpose.msra.mxu0 0
      %2144 = vmatpush.bf16.xpose.msra.mxu0 0
      %2145 = vmatpush.bf16.xpose.msra.mxu0 0
      %2146 = vmatpush.bf16.xpose.msra.mxu0 0
      %2147 = vmatpush.bf16.xpose.msra.mxu0 0
      %2148 = vmatpush.bf16.xpose.msra.mxu0 %v2140
      %2149 = vmatpush.bf16.xpose.msra.mxu0 %v2137
      %2150 = vmatmul.bf16.gmra.mxu0 %v2134
      %v2151 = vpop.f32.mrf.mxu0
      %v2152 = vadd.f32 0.0, %v2151
      %v2153 = vpop.f32.mrf.mxu0
      %2154 = vdwg.mxu0
      %v2159 = vunpack.c.l.b16 %v2083
      %v2160 = vunpack.c.l.b16 %v2084
      %v2161 = vunpack.c.l.b16 %v2085
      %v2162 = vunpack.c.l.b16 %v2086
      %v2163 = vpack.c.b16 %v2160, %v2159
      %v2164 = vpack.c.b16 %v2162, %v2161
      %v2166 = vsel %vm1000, %v2072, 0
      %v2169 = vsel %vm1000, %v2163, 0
      %v2172 = vsel %vm1000, %v2164, 0
      %2174 = vmatpush.bf16.xpose.msra.mxu0 0
      %2175 = vmatpush.bf16.xpose.msra.mxu0 0
      %2176 = vmatpush.bf16.xpose.msra.mxu0 0
      %2177 = vmatpush.bf16.xpose.msra.mxu0 0
      %2178 = vmatpush.bf16.xpose.msra.mxu0 0
      %2179 = vmatpush.bf16.xpose.msra.mxu0 0
      %2180 = vmatpush.bf16.xpose.msra.mxu0 %v2172
      %2181 = vmatpush.bf16.xpose.msra.mxu0 %v2169
      %2182 = vmatmul.bf16.gmra.mxu0 %v2166
      %v2183 = vpop.f32.mrf.mxu0
      %v2184 = vadd.f32 0.0, %v2183
      %v2185 = vpop.f32.mrf.mxu0
      %2186 = vdwg.mxu0
      %v2191 = vunpack.c.l.b16 %v2087
      %v2192 = vunpack.c.l.b16 %v2088
      %v2193 = vunpack.c.l.b16 %v2089
      %v2194 = vunpack.c.l.b16 %v2090
      %v2195 = vpack.c.b16 %v2192, %v2191
      %v2196 = vpack.c.b16 %v2194, %v2193
      %v2198 = vsel %vm1000, %v2073, 0
      %v2201 = vsel %vm1000, %v2195, 0
      %v2204 = vsel %vm1000, %v2196, 0
      %2206 = vmatpush.bf16.xpose.msra.mxu0 0
      %2207 = vmatpush.bf16.xpose.msra.mxu0 0
      %2208 = vmatpush.bf16.xpose.msra.mxu0 0
      %2209 = vmatpush.bf16.xpose.msra.mxu0 0
      %2210 = vmatpush.bf16.xpose.msra.mxu0 0
      %2211 = vmatpush.bf16.xpose.msra.mxu0 0
      %2212 = vmatpush.bf16.xpose.msra.mxu0 %v2204
      %2213 = vmatpush.bf16.xpose.msra.mxu0 %v2201
      %2214 = vmatmul.bf16.gmra.mxu0 %v2198
      %v2215 = vpop.f32.mrf.mxu0
      %v2216 = vadd.f32 0.0, %v2215
      %v2217 = vpop.f32.mrf.mxu0
      %2218 = vdwg.mxu0
      %v2219 = vsel %vm698, %v2120, 0.0
      %v2220 = vsel %vm698, %v2152, 0.0
      %v2221 = vadd.f32 %v2219, %v2220
      %v2222 = vsel %vm698, %v2184, 0.0
      %v2223 = vadd.f32 %v2221, %v2222
      %v2224 = vsel %vm698, %v2216, 0.0
      %v2225 = vadd.f32 %v2223, %v2224
      %v2226 = vadd.f32 %v1557, %v2225
      %s2227 = scalar_lea.vmem %s12, 1
      %v2228 = vld [vmem:[%s2227] sm:$0x1]
      %v2230 = vperm.slane %v2228, 0
      %v2232 = vadd.f32 %v2226, %v2230
      %s2233 = scalar_lea.vmem %s13, 1
      %v2234 = vld [vmem:[%s2233] sm:$0x1]
      %s2235 = scalar_lea.vmem %s14, 1
      %v2236 = vld [vmem:[%s2235] sm:$0x1]
      %v2237 = vsel %vm698, %v2232, 0.0
      %2238 = vadd.xlane.f32.xlu0 %v2237
      %v2239 = vpop.xlane.xlu0 %2238
      %v2240 = vmul.f32 %v2239, %v708
      %v2241 = vsub.f32 %v2232, %v2240
      %v2242 = vmul.f32 %v2241, %v2241
      %v2243 = vsel %vm698, %v2242, 0.0
      %2244 = vadd.xlane.f32.xlu0 %v2243
      %v2245 = vpop.xlane.xlu0 %2244
      %v2246 = vmul.f32 %v2245, %v708
      %v2247 = vadd.f32 %v2246, 1e-05
      %v2248 = vrsqrt.pop %v2247
      %v2249 = vmul.f32 %v2248, %v2247
      %v2250 = vmul.f32 %v2249, %v2248
      %v2251 = vmul.f32 0.5, %v2250
      %v2252 = vsub.f32 1.5, %v2251
      %v2253 = vmul.f32 %v2248, %v2252
      %vm2254 = vweird.f32 %v2247
      %vm2255 = vweird.f32 %v2248
      %vm2256 = vmor %vm2254, %vm2255
      %v2257 = vsel %vm2256, %v2248, %v2253
      %v2258 = vmul.f32 %v2241, %v2257
      %v2260 = vperm.slane %v2234, 0
      %v2262 = vmul.f32 %v2258, %v2260
      %v2264 = vperm.slane %v2236, 0
      %v2266 = vadd.f32 %v2262, %v2264
      %s2267 = scalar_lea.vmem %s15, 32
      %v2268 = vld [vmem:[%s2267] sm:$0xf]
      %v2269 = vld [vmem:[%s2267 + $0x4] sm:$0xf]
      %v2270 = vld [vmem:[%s2267 + $0x8] sm:$0xf]
      %v2271 = vld [vmem:[%s2267 + $0xc] sm:$0xf]
      %v2272 = vld [vmem:[%s2267 + $0x10] sm:$0xf]
      %v2273 = vld [vmem:[%s2267 + $0x14] sm:$0xf]
      %v2274 = vld [vmem:[%s2267 + $0x18] sm:$0xf]
      %v2275 = vld [vmem:[%s2267 + $0x1c] sm:$0xf]
      %v2276 = vpack.c.bf16 %v2266, %v2266
      %s2277 = scalar_lea.vmem %s16, 1
      %v2278 = vld [vmem:[%s2277] sm:$0x1]
      %v2280 = vperm.slane %v2278, 0
      %v2290 = vunpack.c.l.b16 %v2268
      %v2291 = vunpack.c.l.b16 %v2269
      %v2292 = vunpack.c.l.b16 %v2270
      %v2293 = vunpack.c.l.b16 %v2271
      %v2294 = vunpack.c.l.b16 %v2272
      %v2295 = vunpack.c.l.b16 %v2273
      %v2296 = vunpack.c.l.b16 %v2274
      %v2297 = vunpack.c.l.b16 %v2275
      %v2298 = vpack.c.b16 %v2291, %v2290
      %v2299 = vpack.c.b16 %v2293, %v2292
      %v2300 = vpack.c.b16 %v2295, %v2294
      %v2301 = vpack.c.b16 %v2297, %v2296
      %v2303 = vsel %vm698, %v2276, 0
      %v2306 = vsel %vm698, %v2298, 0
      %v2309 = vsel %vm698, %v2299, 0
      %v2312 = vsel %vm698, %v2300, 0
      %v2315 = vsel %vm698, %v2301, 0
      %2317 = vmatpush.bf16.xpose.msra.mxu0 0
      %2318 = vmatpush.bf16.xpose.msra.mxu0 0
      %2319 = vmatpush.bf16.xpose.msra.mxu0 0
      %2320 = vmatpush.bf16.xpose.msra.mxu0 0
      %2321 = vmatpush.bf16.xpose.msra.mxu0 %v2315
      %2322 = vmatpush.bf16.xpose.msra.mxu0 %v2312
      %2323 = vmatpush.bf16.xpose.msra.mxu0 %v2309
      %2324 = vmatpush.bf16.xpose.msra.mxu0 %v2306
      %2325 = vmatmul.bf16.gmra.mxu0 %v2303
      %v2326 = vpop.f32.mrf.mxu0
      %v2327 = vadd.f32 %v2280, %v2326
      %v2328 = vpop.f32.mrf.mxu0
      %2329 = vdwg.mxu0
      %v2330 = vmul.f32 %v2327, 0.5
      %v2331 = vmul.f32 %v2327, 0.70710677
      %v2332 = vand.u32 2147483647, %v2331
      %v2333 = vmul.f32 %v2332, 0.5
      %v2334 = vadd.f32 %v2333, 1.0
      %v2335 = vrcp.pop %v2334
      %v2336 = vmul.f32 %v2334, %v2335
      %v2337 = vsub.f32 1.0, %v2336
      %v2338 = vmul.f32 %v2335, %v2337
      %v2339 = vadd.f32 %v2335, %v2338
      %vm2340 = vweird.f32 %v2334
      %vm2341 = vweird.f32 %v2335
      %vm2342 = vmor %vm2340, %vm2341
      %v2343 = vsel %vm2342, %v2335, %v2339
      %v2344 = vand.u32 2147483647, %v2334
      %vm2345 = vcmp.eq.f32.partialorder %v2344, 8.507059e+37
      %v2346 = vand.u32 %v2334, 2147483648
      %v2347 = vor.u32 1.1754944e-38, %v2346
      %v2348 = vsel %vm2345, %v2347, %v2343
      %v2349 = vmul.f32 1.0, %v2348
      %v2350 = vsub.f32 0.0, %v2332
      %v2351 = vmul.f32 %v2350, %v2332
      %v2352 = vsub.f32 %v2351, 1.2655122
      %v2353 = vmul.f32 %v2349, 0.17087276
      %v2354 = vadd.f32 %v2353, -0.82215226
      %v2355 = vmul.f32 %v2349, %v2354
      %v2356 = vadd.f32 %v2355, 1.4885159
      %v2357 = vmul.f32 %v2349, %v2356
      %v2358 = vadd.f32 %v2357, -1.135204
      %v2359 = vmul.f32 %v2349, %v2358
      %v2360 = vadd.f32 %v2359, 0.27886808
      %v2361 = vmul.f32 %v2349, %v2360
      %v2362 = vadd.f32 %v2361, -0.18628806
      %v2363 = vmul.f32 %v2349, %v2362
      %v2364 = vadd.f32 %v2363, 0.09678418
      %v2365 = vmul.f32 %v2349, %v2364
      %v2366 = vadd.f32 %v2365, 0.37409195
      %v2367 = vmul.f32 %v2349, %v2366
      %v2368 = vadd.f32 %v2367, 1.0000237
      %v2369 = vmul.f32 %v2349, %v2368
      %v2370 = vadd.f32 %v2352, %v2369
      %v2371 = vmul.f32 %v2370, 1.442695
      %v2372 = vpow.pop %v2371
      %v2373 = vmul.f32 %v2349, %v2372
      %v2374 = vsub.f32 1.0, %v2373
      %vm2375 = vcmp.ge.f32.partialorder %v2331, 0.0
      %v2376 = vsub.f32 0.0, %v2374
      %v2377 = vsel %vm2375, %v2374, %v2376
      %v2378 = vadd.f32 %v2377, 1.0
      %v2379 = vmul.f32 %v2330, %v2378
      %s2380 = scalar_lea.vmem %s17, 16
      %v2381 = vld [vmem:[%s2380] sm:$0xf]
      %v2382 = vld [vmem:[%s2380 + $0x4] sm:$0xf]
      %v2383 = vld [vmem:[%s2380 + $0x8] sm:$0xf]
      %v2384 = vld [vmem:[%s2380 + $0xc] sm:$0xf]
      %v2385 = vpack.c.bf16 %v2379, %v2379
      %v2390 = vunpack.c.l.b16 %v2381
      %v2391 = vunpack.c.l.b16 %v2382
      %v2392 = vunpack.c.l.b16 %v2383
      %v2393 = vunpack.c.l.b16 %v2384
      %v2394 = vpack.c.b16 %v2391, %v2390
      %v2395 = vpack.c.b16 %v2393, %v2392
      %v2397 = vsel %vm1529, %v2385, 0
      %v2400 = vsel %vm1529, %v2394, 0
      %v2403 = vsel %vm1529, %v2395, 0
      %2405 = vmatpush.bf16.xpose.msra.mxu0 0
      %2406 = vmatpush.bf16.xpose.msra.mxu0 0
      %2407 = vmatpush.bf16.xpose.msra.mxu0 0
      %2408 = vmatpush.bf16.xpose.msra.mxu0 0
      %2409 = vmatpush.bf16.xpose.msra.mxu0 0
      %2410 = vmatpush.bf16.xpose.msra.mxu0 0
      %2411 = vmatpush.bf16.xpose.msra.mxu0 %v2403
      %2412 = vmatpush.bf16.xpose.msra.mxu0 %v2400
      %2413 = vmatmul.bf16.gmra.mxu0 %v2397
      %v2414 = vpop.f32.mrf.mxu0
      %v2415 = vadd.f32 0.0, %v2414
      %v2416 = vpop.f32.mrf.mxu0
      %2417 = vdwg.mxu0
      %v2418 = vadd.f32 %v2232, %v2415
      %s2419 = scalar_lea.vmem %s18, 1
      %v2420 = vld [vmem:[%s2419] sm:$0x1]
      %v2422 = vperm.slane %v2420, 0
      %v2424 = vadd.f32 %v2418, %v2422
      %v2425 = vld [vmem:[%s19] sm:$0xf]
      %v2426 = vld [vmem:[%s19 + $0x4] sm:$0xf]
      %v2427 = vld [vmem:[%s19 + $0x8] sm:$0xf]
      %v2428 = vld [vmem:[%s19 + $0xc] sm:$0xf]
      %v2429 = vld [vmem:[%s19 + $0x10] sm:$0xf]
      %v2430 = vld [vmem:[%s19 + $0x14] sm:$0xf]
      %v2431 = vld [vmem:[%s19 + $0x18] sm:$0xf]
      %v2432 = vld [vmem:[%s19 + $0x1c] sm:$0xf]
      %v2433 = vld [vmem:[%s19 + $0x20] sm:$0xf]
      %v2434 = vld [vmem:[%s19 + $0x24] sm:$0xf]
      %v2435 = vld [vmem:[%s19 + $0x28] sm:$0xf]
      %v2436 = vld [vmem:[%s19 + $0x2c] sm:$0xf]
      %v2437 = vld [vmem:[%s19 + $0x30] sm:$0xf]
      %v2438 = vld [vmem:[%s19 + $0x34] sm:$0xf]
      %v2439 = vld [vmem:[%s19 + $0x38] sm:$0xf]
      %v2440 = vld [vmem:[%s19 + $0x3c] sm:$0xf]
      %v2441 = vpack.c.bf16 %v2424, %v2424
      %v2442 = vld [vmem:[%s20] sm:$0x1]
      %v2444 = vperm.slane %v2442, 0
      %v2462 = vunpack.c.l.b16 %v2425
      %v2463 = vunpack.c.l.b16 %v2426
      %v2464 = vunpack.c.l.b16 %v2427
      %v2465 = vunpack.c.l.b16 %v2428
      %v2466 = vunpack.c.l.b16 %v2429
      %v2467 = vunpack.c.l.b16 %v2430
      %v2468 = vunpack.c.l.b16 %v2431
      %v2469 = vunpack.c.l.b16 %v2432
      %v2470 = vunpack.c.l.b16 %v2433
      %v2471 = vunpack.c.l.b16 %v2434
      %v2472 = vunpack.c.l.b16 %v2435
      %v2473 = vunpack.c.l.b16 %v2436
      %v2474 = vunpack.c.l.b16 %v2437
      %v2475 = vunpack.c.l.b16 %v2438
      %v2476 = vunpack.c.l.b16 %v2439
      %v2477 = vunpack.c.l.b16 %v2440
      %v2478 = vpack.c.b16 %v2463, %v2462
      %v2479 = vpack.c.b16 %v2465, %v2464
      %v2480 = vpack.c.b16 %v2467, %v2466
      %v2481 = vpack.c.b16 %v2469, %v2468
      %v2482 = vpack.c.b16 %v2471, %v2470
      %v2483 = vpack.c.b16 %v2473, %v2472
      %v2484 = vpack.c.b16 %v2475, %v2474
      %v2485 = vpack.c.b16 %v2477, %v2476
      %v2487 = vsel %vm698, %v2441, 0
      %v2490 = vsel %vm698, %v2478, 0
      %v2493 = vsel %vm698, %v2479, 0
      %v2496 = vsel %vm698, %v2480, 0
      %v2499 = vsel %vm698, %v2481, 0
      %v2502 = vsel %vm698, %v2482, 0
      %v2505 = vsel %vm698, %v2483, 0
      %v2508 = vsel %vm698, %v2484, 0
      %v2511 = vsel %vm698, %v2485, 0
      %2513 = vmatpush.bf16.xpose.msra.mxu0 %v2511
      %2514 = vmatpush.bf16.xpose.msra.mxu0 %v2508
      %2515 = vmatpush.bf16.xpose.msra.mxu0 %v2505
      %2516 = vmatpush.bf16.xpose.msra.mxu0 %v2502
      %2517 = vmatpush.bf16.xpose.msra.mxu0 %v2499
      %2518 = vmatpush.bf16.xpose.msra.mxu0 %v2496
      %2519 = vmatpush.bf16.xpose.msra.mxu0 %v2493
      %2520 = vmatpush.bf16.xpose.msra.mxu0 %v2490
      %2521 = vmatmul.bf16.gmra.mxu0 %v2487
      %v2522 = vpop.f32.mrf.mxu0
      %v2523 = vadd.f32 %v2444, %v2522
      %v2524 = vpop.f32.mrf.mxu0
      %2525 = vdwg.mxu0
      %2526 = vst [vmem:[%s651] sm:$0xff] %v2523
      %p2527 = scmp.lt.s32.totalorder %s32, 1
      %s2528 = scalar_select %p2527, %s32, 1
      %s2529 = smul.addr %s2528, 8
      %s2530 = scalar_lea.vmem %s21, %s2529
      // Predicated region
      $region105: #{transformer_forward.1} parent=103 // pred_check
        %p2531 = pneg %p496
      $region106: #{transformer_forward.1} parent=103 // pred_check_branch
        %2533 = sbr.rel (%p2531) target = $region108
      $region107: #{transformer_forward.1} parent=103 // pred_region
        _
      $region108: #{transformer_forward.1} parent=103 // pred_fallthru
        _
    $region104: #{transformer_forward.1} parent=5 // pred_fallthru
      _
    %p2534 = scmp.le.s32.totalorder 2, %s27
    // Predicated region
    $region109: #{transformer_forward.1} parent=5 // pred_check
      %p2535 = pneg %p2534
    $region110: #{transformer_forward.1} parent=5 // pred_check_branch
      %2537 = sbr.rel (%p2535) target = $region112
    $region111: #{transformer_forward.1} parent=5 // pred_region
      %s2538 = ssub.s32 %s27, 2
      // Predicated region
      $region113: #{transformer_forward.1} parent=111 // pred_check
        %p2539 = pneg %p502
      $region114: #{transformer_forward.1} parent=111 // pred_check_branch
        %2541 = sbr.rel (%p2539) target = $region116
      $region115: #{transformer_forward.1} parent=111 // pred_region
        %p2542 = scmp.lt.s32.totalorder %s33, 1
        %s2543 = scalar_select %p2542, %s33, 1
        %s2544 = smul.addr %s2543, 8
        %s2545 = scalar_lea.vmem %s21, %s2544
      $region116: #{transformer_forward.1} parent=111 // pred_fallthru
        _
    $region112: #{transformer_forward.1} parent=5 // pred_fallthru
      _
  $region6: #{transformer_forward.1} parent=0 // loop_footer
    %s31 = sadd.s32 1, %s27
  $region7: #{transformer_forward.1} parent=0 // loop_footer_branch
    %26 = sbr.rel target = $region3
  $region8: #{transformer_forward.1} parent=0 // loop_exit
    _

</llo_original>
